<compile_context>
chip_gen: v6e
topology: v6e:2x2x1
jax: 0.10.0
libtpu: 0.0.40
codegen_flags: <defaults>
</compile_context>

<pallas_src>
import functools
import math

import jax
import jax.numpy as jnp
from jax import lax
from jax.experimental import pallas as pl
from jax.experimental.pallas import tpu as pltpu


# ---------------------------------------------------------------------------
# helpers
# ---------------------------------------------------------------------------
def _layer_norm(x, gamma, beta, eps=1e-5):
    """PyTorch nn.LayerNorm over the last dim (biased variance, eps=1e-5)."""
    mu = jnp.mean(x, axis=-1, keepdims=True)
    xc = x - mu
    var = jnp.mean(xc * xc, axis=-1, keepdims=True)
    return xc * lax.rsqrt(var + eps) * gamma + beta


def _nbytes(a):
    return math.prod(a.shape) * jnp.dtype(a.dtype).itemsize


def _pick_block_b(B, T, target_rows=1024):
    """Largest divisor of B with Bb*T <= target MXU rows.

    Raising M = Bb*T fills the MXU and amortizes the ~0.35us per-grid-step
    overhead.  (For v7x, when B*T is large, prefer leaving >= 2 grid steps so
    both TensorCores get work; with the tiny demo shapes this is moot.)
    """
    best = 1
    for bb in range(1, B + 1):
        if B % bb == 0 and bb * T <= max(target_rows, T):
            best = bb
    return best


# ---------------------------------------------------------------------------
# Kernel 1: one fused TransformerBlock (attention + unify + norm1 + FF +
#           norm2 [+ pos-emb add] [+ time pool]) over Bb batch elements.
# ---------------------------------------------------------------------------
def transformer_block_kernel(*refs, heads, add_pos, pool_type):
    i = 0
    x_ref = refs[i]; i += 1                       # (Bb, T, E) bf16
    if add_pos:
        pos_ref = refs[i]; i += 1                 # (T, E) bf16
    (wq_ref, wk_ref, wv_ref, wu_ref, bu_ref, g1_ref, be1_ref,
     w1_ref, b1_ref, w2_ref, b2_ref, g2_ref, be2_ref) = refs[i:i + 13]
    i += 13
    o_ref = refs[i]                               # (Bb,T,E) bf16 or (Bb,E) f32

    x = x_ref[...]
    if add_pos:
        x = x + pos_ref[...][None]                # fuse tokens + positions
    Bb, T, E = x.shape
    s = E // heads
    x2 = x.reshape(Bb * T, E)                     # bf16, M = Bb*T rows

    # q/k/v: single lane-dense (Bb*T, E) @ (E, E) bf16 MXU matmuls each
    # (block-diagonal per-head weights, emb**-1/4 scale already folded in).
    q = jnp.dot(x2, wq_ref[...], preferred_element_type=jnp.float32)
    k = jnp.dot(x2, wk_ref[...], preferred_element_type=jnp.float32)
    v = jnp.dot(x2, wv_ref[...], preferred_element_type=jnp.float32)
    q3 = q.reshape(Bb, T, E).astype(jnp.bfloat16)
    k3 = k.reshape(Bb, T, E).astype(jnp.bfloat16)
    v3 = v.reshape(Bb, T, E).astype(jnp.bfloat16)

    wu = wu_ref[...]                              # (E, E) bf16

    # Per-head attention; accumulate directly into the unify projection
    # instead of concatenating head outputs (no lane relayout).
    # TODO(synk): for large T, tile K/V flash-style and chunk the FF over T
    # rows to bound the (T,T)/(T,4E) live ranges.
    att_acc = jnp.zeros((Bb * T, E), jnp.float32)
    for hd in range(heads):
        lo = hd * s
        qh = q3[:, :, lo:lo + s]                  # (Bb, T, s)
        kh = k3[:, :, lo:lo + s]
        vh = v3[:, :, lo:lo + s]
        sc = jnp.einsum("bts,bus->btu", qh, kh,
                        preferred_element_type=jnp.float32)      # (Bb, T, T)
        sc = sc - jnp.max(sc, axis=-1, keepdims=True)
        p = jnp.exp(sc)
        p = p * pl.reciprocal(jnp.sum(p, axis=-1, keepdims=True), approx=True)
        oh = jnp.einsum("btu,bus->bts", p.astype(jnp.bfloat16), vh,
                        preferred_element_type=jnp.float32)      # (Bb, T, s)
        att_acc = att_acc + jnp.dot(
            oh.reshape(Bb * T, s).astype(jnp.bfloat16), wu[lo:lo + s, :],
            preferred_element_type=jnp.float32)

    # unifyheads bias + residual + norm1 (f32)
    x_f32 = x2.astype(jnp.float32)
    x1 = _layer_norm(att_acc + bu_ref[...] + x_f32, g1_ref[...], be1_ref[...])

    # feed-forward: Linear(E,4E) -> ReLU -> Linear(4E,E), residual + norm2
    h1 = jnp.maximum(
        jnp.dot(x1.astype(jnp.bfloat16), w1_ref[...],
                preferred_element_type=jnp.float32) + b1_ref[...], 0.0)
    ff = jnp.dot(h1.astype(jnp.bfloat16), w2_ref[...],
                 preferred_element_type=jnp.float32) + b2_ref[...]
    y = _layer_norm(ff + x1, g1_ref.dtype.type(1.0) * g2_ref[...], be2_ref[...])

    if pool_type is None:
        o_ref[...] = y.reshape(Bb, T, E).astype(o_ref.dtype)
    else:
        y3 = y.reshape(Bb, T, E)
        pooled = jnp.max(y3, axis=1) if pool_type == "max" else jnp.mean(y3, axis=1)
        o_ref[...] = pooled.astype(o_ref.dtype)


def transformer_block(x, blk, *, heads, block_b, pos_emb=None, pool_type=None):
    B, T, E = x.shape
    Bb = block_b
    grid = (B // Bb,)

    x_spec = pl.BlockSpec((Bb, T, E), lambda i: (i, 0, 0))

    def pinned(a):
        # Constant index map -> fetched once; single buffer (no double
        # buffering) keeps weight VMEM residency at 1x.
        nd = len(a.shape)
        return pl.BlockSpec(tuple(a.shape), lambda i, _nd=nd: (0,) * _nd,
                            pipeline_mode=pl.Buffered(1))

    weights = [blk["wq_bd"], blk["wk_bd"], blk["wv_bd"], blk["wu"], blk["bu"],
               blk["g1"], blk["be1"], blk["w1"], blk["b1"], blk["w2"],
               blk["b2"], blk["g2"], blk["be2"]]

    inputs, in_specs = [x], [x_spec]
    if pos_emb is not None:
        inputs.append(pos_emb)
        in_specs.append(pinned(pos_emb))
    inputs += weights
    in_specs += [pinned(w) for w in weights]

    if pool_type is None:
        out_shape = jax.ShapeDtypeStruct((B, T, E), jnp.bfloat16)
        out_specs = pl.BlockSpec((Bb, T, E), lambda i: (i, 0, 0))
        o_blk = Bb * T * E * 2
    else:
        out_shape = jax.ShapeDtypeStruct((B, E), jnp.float32)
        out_specs = pl.BlockSpec((Bb, E), lambda i: (i, 0))
        o_blk = Bb * E * 4

    # Explicit VMEM budget: single-buffered weights + double-buffered
    # activation blocks + headroom (kept within v7x's 64 MiB per-TC VMEM).
    weight_bytes = sum(_nbytes(w) for w in weights)
    if pos_emb is not None:
        weight_bytes += _nbytes(pos_emb)
    x_blk = Bb * T * E * 2
    vmem_limit = min(max(weight_bytes + 2 * (x_blk + o_blk) + (16 << 20),
                         32 << 20), 64 << 20)

    return pl.pallas_call(
        functools.partial(transformer_block_kernel, heads=heads,
                          add_pos=pos_emb is not None, pool_type=pool_type),
        out_shape=out_shape,
        grid=grid,
        in_specs=in_specs,
        out_specs=out_specs,
        compiler_params=pltpu.CompilerParams(
            dimension_semantics=("parallel",),
            vmem_limit_bytes=vmem_limit),
    )(*inputs)


# ---------------------------------------------------------------------------
# Kernel 2: tiny classifier on the pooled (B, E) activations
# ---------------------------------------------------------------------------
def classifier_head_kernel(p_ref, w_ref, b_ref, o_ref):
    pooled = p_ref[...]                                           # (B, E) f32
    logits = jnp.dot(pooled, w_ref[...],
                     preferred_element_type=jnp.float32) + b_ref[...]
    z = logits - jnp.max(logits, axis=-1, keepdims=True)
    lse = jnp.log(jnp.sum(jnp.exp(z), axis=-1, keepdims=True))
    o_ref[...] = z - lse                                          # log_softmax


def classifier_head(pooled, w, b):
    B = pooled.shape[0]
    C = w.shape[1]
    vmem = pl.BlockSpec(memory_space=pltpu.MemorySpace.VMEM)
    return pl.pallas_call(
        classifier_head_kernel,
        out_shape=jax.ShapeDtypeStruct((B, C), jnp.float32),
        in_specs=[vmem, vmem, vmem],
        out_specs=vmem,
    )(pooled, w, b)


# ---------------------------------------------------------------------------
# Forward pass (CTransformer.forward)
# ---------------------------------------------------------------------------
@functools.partial(jax.jit, static_argnames=("heads", "pool_type"))
def ctransformer_forward(tokens, params, *, heads, pool_type="max"):
    B, T = tokens.shape
    # TODO(synk): the token-embedding gather stays in XLA (data-dependent
    # gather has no clean BlockSpec form); the positional-embedding add is
    # fused into the first block's kernel.  nn.Dropout is identity (omitted).
    x = params["tok_emb"][tokens]                      # (B, T, E) bf16
    pos = params["pos_emb"][:T]                        # (T, E)    bf16

    blocks = params["blocks"]
    depth = len(blocks)
    Bb = _pick_block_b(B, T)
    for d, blk in enumerate(blocks):
        x = transformer_block(
            x, blk, heads=heads, block_b=Bb,
            pos_emb=pos if d == 0 else None,
            pool_type=pool_type if d == depth - 1 else None)
    # x is now the pooled (B, E) f32 activation (pool fused into last block)
    return classifier_head(x, params["w_probs"], params["b_probs"])


# ---------------------------------------------------------------------------
# Parameters (weights stored bf16, MXU-native; biases/LayerNorm params f32)
# ---------------------------------------------------------------------------
def init_params(key, *, vocab, seq_len, emb, heads, depth, n_classes):
    assert emb % heads == 0
    s = emb // heads
    scale = 1.0 / (float(emb) ** 0.25)     # q and k are each scaled by emb^-1/4

    def uniform(k, shape, fan_in):
        bnd = 1.0 / math.sqrt(float(fan_in))
        return jax.random.uniform(k, shape, jnp.float32, -bnd, bnd)

    keys = jax.random.split(key, 4 + depth)
    tok_emb = jax.random.normal(keys[0], (vocab, emb), jnp.float32).astype(jnp.bfloat16)
    pos_emb = jax.random.normal(keys[1], (seq_len, emb), jnp.float32).astype(jnp.bfloat16)
    w_probs = uniform(keys[2], (emb, n_classes), emb)        # toprobs (transposed)
    b_probs = uniform(keys[3], (1, n_classes), emb)

    eye_h = jnp.eye(heads, dtype=jnp.float32)
    blocks = []
    for d in range(depth):
        bk = jax.random.split(keys[4 + d], 9)
        wq = uniform(bk[0], (s, s), s)     # tokeys/toqueries/tovalues are
        wk = uniform(bk[1], (s, s), s)     # Linear(s, s, bias=False), shared
        wv = uniform(bk[2], (s, s), s)     # across heads.
        blocks.append(dict(
            # Block-diagonal expansion -> one lane-dense (E,E) MXU matmul per
            # projection; emb**-1/4 scaling folded into wq/wk; stored bf16.
            # TODO(synk): if s >= 128, a heads-batched dot_general on the
            # shared (s,s) weight avoids the heads-x FLOP/DMA redundancy.
            wq_bd=(jnp.kron(eye_h, wq) * scale).astype(jnp.bfloat16),
            wk_bd=(jnp.kron(eye_h, wk) * scale).astype(jnp.bfloat16),
            wv_bd=jnp.kron(eye_h, wv).astype(jnp.bfloat16),
            wu=uniform(bk[3], (emb, emb), emb).astype(jnp.bfloat16),   # unifyheads^T
            bu=uniform(bk[4], (1, emb), emb),
            g1=jnp.ones((1, emb), jnp.float32),                        # LayerNorm 1
            be1=jnp.zeros((1, emb), jnp.float32),
            w1=uniform(bk[5], (emb, 4 * emb), emb).astype(jnp.bfloat16),       # ff1^T
            b1=uniform(bk[6], (1, 4 * emb), emb),
            w2=uniform(bk[7], (4 * emb, emb), 4 * emb).astype(jnp.bfloat16),   # ff2^T
            b2=uniform(bk[8], (1, emb), 4 * emb),
            g2=jnp.ones((1, emb), jnp.float32),                        # LayerNorm 2
            be2=jnp.zeros((1, emb), jnp.float32),
        ))
    return dict(tok_emb=tok_emb, pos_emb=pos_emb, blocks=blocks,
                w_probs=w_probs, b_probs=b_probs)


# ---------------------------------------------------------------------------
# Pure-JAX f32 reference (mirrors the PyTorch forward with the same stored
# parameter values)
# ---------------------------------------------------------------------------
def ctransformer_ref(tokens, params, *, heads, pool_type="max"):
    f32 = jnp.float32
    B, T = tokens.shape
    x = params["tok_emb"].astype(f32)[tokens] + params["pos_emb"].astype(f32)[None, :T, :]
    E = x.shape[-1]
    s = E // heads
    for blk in params["blocks"]:
        q = x @ blk["wq_bd"].astype(f32)      # emb^-1/4 scale already folded in
        k = x @ blk["wk_bd"].astype(f32)
        v = x @ blk["wv_bd"].astype(f32)

        def split(a):
            return a.reshape(B, T, heads, s).transpose(0, 2, 1, 3)  # (B,h,T,s)

        qh, kh, vh = split(q), split(k), split(v)
        dot = jnp.einsum("bhts,bhus->bhtu", qh, kh)
        p = jax.nn.softmax(dot, axis=-1)
        out = jnp.einsum("bhtu,bhus->bhts", p, vh)
        out = out.transpose(0, 2, 1, 3).reshape(B, T, E)
        att = out @ blk["wu"].astype(f32) + blk["bu"]
        x1 = _layer_norm(att + x, blk["g1"], blk["be1"])
        h1 = jax.nn.relu(x1 @ blk["w1"].astype(f32) + blk["b1"])
        ff = h1 @ blk["w2"].astype(f32) + blk["b2"]
        x = _layer_norm(ff + x1, blk["g2"], blk["be2"])
    pooled = x.max(axis=1) if pool_type == "max" else x.mean(axis=1)
    logits = pooled @ params["w_probs"] + params["b_probs"]
    return jax.nn.log_softmax(logits, axis=1)


# ---------------------------------------------------------------------------
if __name__ == "__main__":
    B, T, EMB, HEADS, DEPTH, VOCAB, CLASSES = 2, 8, 32, 4, 2, 16, 4
    # TODO(synk): for production sizes pad EMB (and 4*EMB / num_classes) to
    # multiples of 128 for lane-dense vregs; kept small here per the harness.
    key = jax.random.PRNGKey(0)
    k_param, k_tok = jax.random.split(key)

    params = init_params(k_param, vocab=VOCAB, seq_len=T, emb=EMB,
                         heads=HEADS, depth=DEPTH, n_classes=CLASSES)
    tokens = jax.random.randint(k_tok, (B, T), 0, VOCAB, dtype=jnp.int32)

    out = jax.block_until_ready(
        ctransformer_forward(tokens, params, heads=HEADS, pool_type="max"))
    ref = jax.block_until_ready(
        ctransformer_ref(tokens, params, heads=HEADS, pool_type="max"))

    assert out.shape == (B, CLASSES)
    assert bool(jnp.all(jnp.isfinite(out)))
    # bf16 MXU operands + approx reciprocal vs f32 reference -> loosened tol.
    max_err = float(jnp.max(jnp.abs(out - ref)))
    assert jnp.allclose(out, ref, rtol=3e-2, atol=3e-2), (
        f"mismatch vs reference, max abs err = {max_err}")

    print("KERNEL_OK")
</pallas_src>

<mosaic_0001>
module attributes {stable_mosaic.version = 11 : i64} {
  func.func @classifier_head_kernel(%arg0: memref<2x32xf32, #tpu.memory_space<vmem>>, %arg1: memref<32x4xf32, #tpu.memory_space<vmem>>, %arg2: memref<1x4xf32, #tpu.memory_space<vmem>>, %arg3: memref<2x4xf32, #tpu.memory_space<vmem>>) attributes {dimension_semantics = [], scalar_prefetch = 0 : i64, scratch_operands = 0 : i64, tpu.core_type = #tpu.core_type<tc>} {
    %c0 = arith.constant 0 : index
    %c0_0 = arith.constant 0 : index
    %0 = vector.load %arg0[%c0, %c0_0] : memref<2x32xf32, #tpu.memory_space<vmem>>, vector<2x32xf32>
    %c0_1 = arith.constant 0 : index
    %c0_2 = arith.constant 0 : index
    %1 = vector.load %arg1[%c0_1, %c0_2] : memref<32x4xf32, #tpu.memory_space<vmem>>, vector<32x4xf32>
    %cst = arith.constant dense<0.000000e+00> : vector<2x4xf32>
    %2 = tpu.matmul %0, %1, %cst {dimension_numbers = #tpu.dot_dimension_numbers<[1], [0], [0], [1], [0, 0, 1, 1], [], []>} : vector<2x32xf32>, vector<32x4xf32>, vector<2x4xf32> -> vector<2x4xf32>
    %c0_3 = arith.constant 0 : index
    %c0_4 = arith.constant 0 : index
    %3 = vector.load %arg2[%c0_3, %c0_4] : memref<1x4xf32, #tpu.memory_space<vmem>>, vector<1x4xf32>
    %4 = vector.broadcast %3 : vector<1x4xf32> to vector<2x4xf32>
    %5 = arith.addf %2, %4 : vector<2x4xf32>
    %cst_5 = arith.constant dense<0xFF800000> : vector<2xf32>
    %6 = vector.multi_reduction <maximumf>, %5, %cst_5 [1] : vector<2x4xf32> to vector<2xf32>
    %7 = vector.shape_cast %6 : vector<2xf32> to vector<2x1xf32>
    %8 = vector.broadcast %7 : vector<2x1xf32> to vector<2x4xf32>
    %9 = arith.subf %5, %8 : vector<2x4xf32>
    %10 = math.exp %9 : vector<2x4xf32>
    %cst_6 = arith.constant dense<0.000000e+00> : vector<2xf32>
    %11 = vector.multi_reduction <add>, %10, %cst_6 [1] : vector<2x4xf32> to vector<2xf32>
    %12 = vector.shape_cast %11 : vector<2xf32> to vector<2x1xf32>
    %13 = math.log %12 : vector<2x1xf32>
    %14 = vector.broadcast %13 : vector<2x1xf32> to vector<2x4xf32>
    %15 = arith.subf %9, %14 : vector<2x4xf32>
    %c0_7 = arith.constant 0 : index
    %c0_8 = arith.constant 0 : index
    %16 = vector.load %arg3[%c0_7, %c0_8] : memref<2x4xf32, #tpu.memory_space<vmem>>, vector<2x4xf32>
    tpu.vector_store %arg3[%c0_7, %c0_8], %15 {strides = array<i32>} : memref<2x4xf32, #tpu.memory_space<vmem>>, vector<2x4xf32>,
    return
  }
}

module attributes {stable_mosaic.version = 11 : i64} {
  func.func @transformer_block_kernel(%arg0: i32, %arg1: memref<2x8x32xbf16, #tpu.memory_space<vmem>>, %arg2: memref<32x32xbf16, #tpu.memory_space<vmem>>, %arg3: memref<32x32xbf16, #tpu.memory_space<vmem>>, %arg4: memref<32x32xbf16, #tpu.memory_space<vmem>>, %arg5: memref<32x32xbf16, #tpu.memory_space<vmem>>, %arg6: memref<1x32xf32, #tpu.memory_space<vmem>>, %arg7: memref<1x32xf32, #tpu.memory_space<vmem>>, %arg8: memref<1x32xf32, #tpu.memory_space<vmem>>, %arg9: memref<32x128xbf16, #tpu.memory_space<vmem>>, %arg10: memref<1x128xf32, #tpu.memory_space<vmem>>, %arg11: memref<128x32xbf16, #tpu.memory_space<vmem>>, %arg12: memref<1x32xf32, #tpu.memory_space<vmem>>, %arg13: memref<1x32xf32, #tpu.memory_space<vmem>>, %arg14: memref<1x32xf32, #tpu.memory_space<vmem>>, %arg15: memref<2x32xf32, #tpu.memory_space<vmem>>) attributes {dimension_semantics = [#tpu.dimension_semantics<parallel>], iteration_bounds = array<i64: 1>, scalar_prefetch = 0 : i64, scratch_operands = 0 : i64, tpu.core_type = #tpu.core_type<tc>, window_params = [{transform_indices = @transform_0, window_bounds = array<i64: 2, 8, 32>}, {pipeline_mode = #tpu.pipeline_mode<synchronous>, transform_indices = @transform_1, window_bounds = array<i64: 32, 32>}, {pipeline_mode = #tpu.pipeline_mode<synchronous>, transform_indices = @transform_2, window_bounds = array<i64: 32, 32>}, {pipeline_mode = #tpu.pipeline_mode<synchronous>, transform_indices = @transform_3, window_bounds = array<i64: 32, 32>}, {pipeline_mode = #tpu.pipeline_mode<synchronous>, transform_indices = @transform_4, window_bounds = array<i64: 32, 32>}, {pipeline_mode = #tpu.pipeline_mode<synchronous>, transform_indices = @transform_5, window_bounds = array<i64: 1, 32>}, {pipeline_mode = #tpu.pipeline_mode<synchronous>, transform_indices = @transform_6, window_bounds = array<i64: 1, 32>}, {pipeline_mode = #tpu.pipeline_mode<synchronous>, transform_indices = @transform_7, window_bounds = array<i64: 1, 32>}, {pipeline_mode = #tpu.pipeline_mode<synchronous>, transform_indices = @transform_8, window_bounds = array<i64: 32, 128>}, {pipeline_mode = #tpu.pipeline_mode<synchronous>, transform_indices = @transform_9, window_bounds = array<i64: 1, 128>}, {pipeline_mode = #tpu.pipeline_mode<synchronous>, transform_indices = @transform_10, window_bounds = array<i64: 128, 32>}, {pipeline_mode = #tpu.pipeline_mode<synchronous>, transform_indices = @transform_11, window_bounds = array<i64: 1, 32>}, {pipeline_mode = #tpu.pipeline_mode<synchronous>, transform_indices = @transform_12, window_bounds = array<i64: 1, 32>}, {pipeline_mode = #tpu.pipeline_mode<synchronous>, transform_indices = @transform_13, window_bounds = array<i64: 1, 32>}, {transform_indices = @transform_14, window_bounds = array<i64: 2, 32>}]} {
    %c0 = arith.constant 0 : index
    %c0_0 = arith.constant 0 : index
    %c0_1 = arith.constant 0 : index
    %0 = vector.load %arg1[%c0, %c0_0, %c0_1] : memref<2x8x32xbf16, #tpu.memory_space<vmem>>, vector<2x8x32xbf16>
    %1 = vector.shape_cast %0 : vector<2x8x32xbf16> to vector<16x32xbf16>
    %c0_2 = arith.constant 0 : index
    %c0_3 = arith.constant 0 : index
    %2 = vector.load %arg2[%c0_2, %c0_3] : memref<32x32xbf16, #tpu.memory_space<vmem>>, vector<32x32xbf16>
    %cst = arith.constant dense<0.000000e+00> : vector<16x32xf32>
    %3 = tpu.matmul %1, %2, %cst {dimension_numbers = #tpu.dot_dimension_numbers<[1], [0], [0], [1], [0, 0, 1, 1], [], []>} : vector<16x32xbf16>, vector<32x32xbf16>, vector<16x32xf32> -> vector<16x32xf32>
    %c0_4 = arith.constant 0 : index
    %c0_5 = arith.constant 0 : index
    %4 = vector.load %arg3[%c0_4, %c0_5] : memref<32x32xbf16, #tpu.memory_space<vmem>>, vector<32x32xbf16>
    %cst_6 = arith.constant dense<0.000000e+00> : vector<16x32xf32>
    %5 = tpu.matmul %1, %4, %cst_6 {dimension_numbers = #tpu.dot_dimension_numbers<[1], [0], [0], [1], [0, 0, 1, 1], [], []>} : vector<16x32xbf16>, vector<32x32xbf16>, vector<16x32xf32> -> vector<16x32xf32>
    %c0_7 = arith.constant 0 : index
    %c0_8 = arith.constant 0 : index
    %6 = vector.load %arg4[%c0_7, %c0_8] : memref<32x32xbf16, #tpu.memory_space<vmem>>, vector<32x32xbf16>
    %cst_9 = arith.constant dense<0.000000e+00> : vector<16x32xf32>
    %7 = tpu.matmul %1, %6, %cst_9 {dimension_numbers = #tpu.dot_dimension_numbers<[1], [0], [0], [1], [0, 0, 1, 1], [], []>} : vector<16x32xbf16>, vector<32x32xbf16>, vector<16x32xf32> -> vector<16x32xf32>
    %8 = vector.shape_cast %3 : vector<16x32xf32> to vector<2x8x32xf32>
    %9 = arith.truncf %8 : vector<2x8x32xf32> to vector<2x8x32xbf16>
    %10 = vector.shape_cast %5 : vector<16x32xf32> to vector<2x8x32xf32>
    %11 = arith.truncf %10 : vector<2x8x32xf32> to vector<2x8x32xbf16>
    %12 = vector.shape_cast %7 : vector<16x32xf32> to vector<2x8x32xf32>
    %13 = arith.truncf %12 : vector<2x8x32xf32> to vector<2x8x32xbf16>
    %c0_10 = arith.constant 0 : index
    %c0_11 = arith.constant 0 : index
    %14 = vector.load %arg5[%c0_10, %c0_11] : memref<32x32xbf16, #tpu.memory_space<vmem>>, vector<32x32xbf16>
    %cst_12 = arith.constant 0.000000e+00 : f32
    %15 = vector.broadcast %cst_12 : f32 to vector<16x32xf32>
    %16 = vector.extract_strided_slice %9 {offsets = [0, 0, 0], sizes = [2, 8, 8], strides = [1, 1, 1]} : vector<2x8x32xbf16> to vector<2x8x8xbf16>
    %17 = vector.extract_strided_slice %11 {offsets = [0, 0, 0], sizes = [2, 8, 8], strides = [1, 1, 1]} : vector<2x8x32xbf16> to vector<2x8x8xbf16>
    %18 = vector.extract_strided_slice %13 {offsets = [0, 0, 0], sizes = [2, 8, 8], strides = [1, 1, 1]} : vector<2x8x32xbf16> to vector<2x8x8xbf16>
    "tpu.trace_start"() <{level = 10 : i32, message = "bts,bus->btu"}> : () -> ()
    %cst_13 = arith.constant dense<0.000000e+00> : vector<2x8x8xf32>
    %19 = tpu.matmul %16, %17, %cst_13 {dimension_numbers = #tpu.dot_dimension_numbers<[2], [2], [1], [1], [0, 0, 0, 1, 1, 1], [0], [0]>} : vector<2x8x8xbf16>, vector<2x8x8xbf16>, vector<2x8x8xf32> -> vector<2x8x8xf32>
    "tpu.trace_stop"() : () -> ()
    %cst_14 = arith.constant dense<0xFF800000> : vector<2x8xf32>
    %20 = vector.multi_reduction <maximumf>, %19, %cst_14 [2] : vector<2x8x8xf32> to vector<2x8xf32>
    %21 = vector.shape_cast %20 : vector<2x8xf32> to vector<2x8x1xf32>
    %22 = vector.broadcast %21 : vector<2x8x1xf32> to vector<2x8x8xf32>
    %23 = arith.subf %19, %22 : vector<2x8x8xf32>
    %24 = math.exp %23 : vector<2x8x8xf32>
    %cst_15 = arith.constant dense<0.000000e+00> : vector<2x8xf32>
    %25 = vector.multi_reduction <add>, %24, %cst_15 [2] : vector<2x8x8xf32> to vector<2x8xf32>
    %26 = vector.shape_cast %25 : vector<2x8xf32> to vector<2x8x1xf32>
    %27 = tpu.reciprocal %26 {approx = true} : vector<2x8x1xf32> -> vector<2x8x1xf32>
    %28 = vector.broadcast %27 : vector<2x8x1xf32> to vector<2x8x8xf32>
    %29 = arith.mulf %24, %28 : vector<2x8x8xf32>
    %30 = arith.truncf %29 : vector<2x8x8xf32> to vector<2x8x8xbf16>
    "tpu.trace_start"() <{level = 10 : i32, message = "btu,bus->bts"}> : () -> ()
    %cst_16 = arith.constant dense<0.000000e+00> : vector<2x8x8xf32>
    %31 = tpu.matmul %30, %18, %cst_16 {dimension_numbers = #tpu.dot_dimension_numbers<[2], [1], [1], [2], [0, 0, 0, 1, 1, 2], [0], [0]>} : vector<2x8x8xbf16>, vector<2x8x8xbf16>, vector<2x8x8xf32> -> vector<2x8x8xf32>
    "tpu.trace_stop"() : () -> ()
    %32 = vector.shape_cast %31 : vector<2x8x8xf32> to vector<16x8xf32>
    %33 = arith.truncf %32 : vector<16x8xf32> to vector<16x8xbf16>
    %34 = vector.extract_strided_slice %14 {offsets = [0, 0], sizes = [8, 32], strides = [1, 1]} : vector<32x32xbf16> to vector<8x32xbf16>
    %cst_17 = arith.constant dense<0.000000e+00> : vector<16x32xf32>
    %35 = tpu.matmul %33, %34, %cst_17 {dimension_numbers = #tpu.dot_dimension_numbers<[1], [0], [0], [1], [0, 0, 1, 1], [], []>} : vector<16x8xbf16>, vector<8x32xbf16>, vector<16x32xf32> -> vector<16x32xf32>
    %36 = arith.addf %15, %35 : vector<16x32xf32>
    %37 = vector.extract_strided_slice %9 {offsets = [0, 0, 8], sizes = [2, 8, 8], strides = [1, 1, 1]} : vector<2x8x32xbf16> to vector<2x8x8xbf16>
    %38 = vector.extract_strided_slice %11 {offsets = [0, 0, 8], sizes = [2, 8, 8], strides = [1, 1, 1]} : vector<2x8x32xbf16> to vector<2x8x8xbf16>
    %39 = vector.extract_strided_slice %13 {offsets = [0, 0, 8], sizes = [2, 8, 8], strides = [1, 1, 1]} : vector<2x8x32xbf16> to vector<2x8x8xbf16>
    "tpu.trace_start"() <{level = 10 : i32, message = "bts,bus->btu"}> : () -> ()
    %cst_18 = arith.constant dense<0.000000e+00> : vector<2x8x8xf32>
    %40 = tpu.matmul %37, %38, %cst_18 {dimension_numbers = #tpu.dot_dimension_numbers<[2], [2], [1], [1], [0, 0, 0, 1, 1, 1], [0], [0]>} : vector<2x8x8xbf16>, vector<2x8x8xbf16>, vector<2x8x8xf32> -> vector<2x8x8xf32>
    "tpu.trace_stop"() : () -> ()
    %cst_19 = arith.constant dense<0xFF800000> : vector<2x8xf32>
    %41 = vector.multi_reduction <maximumf>, %40, %cst_19 [2] : vector<2x8x8xf32> to vector<2x8xf32>
    %42 = vector.shape_cast %41 : vector<2x8xf32> to vector<2x8x1xf32>
    %43 = vector.broadcast %42 : vector<2x8x1xf32> to vector<2x8x8xf32>
    %44 = arith.subf %40, %43 : vector<2x8x8xf32>
    %45 = math.exp %44 : vector<2x8x8xf32>
    %cst_20 = arith.constant dense<0.000000e+00> : vector<2x8xf32>
    %46 = vector.multi_reduction <add>, %45, %cst_20 [2] : vector<2x8x8xf32> to vector<2x8xf32>
    %47 = vector.shape_cast %46 : vector<2x8xf32> to vector<2x8x1xf32>
    %48 = tpu.reciprocal %47 {approx = true} : vector<2x8x1xf32> -> vector<2x8x1xf32>
    %49 = vector.broadcast %48 : vector<2x8x1xf32> to vector<2x8x8xf32>
    %50 = arith.mulf %45, %49 : vector<2x8x8xf32>
    %51 = arith.truncf %50 : vector<2x8x8xf32> to vector<2x8x8xbf16>
    "tpu.trace_start"() <{level = 10 : i32, message = "btu,bus->bts"}> : () -> ()
    %cst_21 = arith.constant dense<0.000000e+00> : vector<2x8x8xf32>
    %52 = tpu.matmul %51, %39, %cst_21 {dimension_numbers = #tpu.dot_dimension_numbers<[2], [1], [1], [2], [0, 0, 0, 1, 1, 2], [0], [0]>} : vector<2x8x8xbf16>, vector<2x8x8xbf16>, vector<2x8x8xf32> -> vector<2x8x8xf32>
    "tpu.trace_stop"() : () -> ()
    %53 = vector.shape_cast %52 : vector<2x8x8xf32> to vector<16x8xf32>
    %54 = arith.truncf %53 : vector<16x8xf32> to vector<16x8xbf16>
    %55 = vector.extract_strided_slice %14 {offsets = [8, 0], sizes = [8, 32], strides = [1, 1]} : vector<32x32xbf16> to vector<8x32xbf16>
    %cst_22 = arith.constant dense<0.000000e+00> : vector<16x32xf32>
    %56 = tpu.matmul %54, %55, %cst_22 {dimension_numbers = #tpu.dot_dimension_numbers<[1], [0], [0], [1], [0, 0, 1, 1], [], []>} : vector<16x8xbf16>, vector<8x32xbf16>, vector<16x32xf32> -> vector<16x32xf32>
    %57 = arith.addf %36, %56 : vector<16x32xf32>
    %58 = vector.extract_strided_slice %9 {offsets = [0, 0, 16], sizes = [2, 8, 8], strides = [1, 1, 1]} : vector<2x8x32xbf16> to vector<2x8x8xbf16>
    %59 = vector.extract_strided_slice %11 {offsets = [0, 0, 16], sizes = [2, 8, 8], strides = [1, 1, 1]} : vector<2x8x32xbf16> to vector<2x8x8xbf16>
    %60 = vector.extract_strided_slice %13 {offsets = [0, 0, 16], sizes = [2, 8, 8], strides = [1, 1, 1]} : vector<2x8x32xbf16> to vector<2x8x8xbf16>
    "tpu.trace_start"() <{level = 10 : i32, message = "bts,bus->btu"}> : () -> ()
    %cst_23 = arith.constant dense<0.000000e+00> : vector<2x8x8xf32>
    %61 = tpu.matmul %58, %59, %cst_23 {dimension_numbers = #tpu.dot_dimension_numbers<[2], [2], [1], [1], [0, 0, 0, 1, 1, 1], [0], [0]>} : vector<2x8x8xbf16>, vector<2x8x8xbf16>, vector<2x8x8xf32> -> vector<2x8x8xf32>
    "tpu.trace_stop"() : () -> ()
    %cst_24 = arith.constant dense<0xFF800000> : vector<2x8xf32>
    %62 = vector.multi_reduction <maximumf>, %61, %cst_24 [2] : vector<2x8x8xf32> to vector<2x8xf32>
    %63 = vector.shape_cast %62 : vector<2x8xf32> to vector<2x8x1xf32>
    %64 = vector.broadcast %63 : vector<2x8x1xf32> to vector<2x8x8xf32>
    %65 = arith.subf %61, %64 : vector<2x8x8xf32>
    %66 = math.exp %65 : vector<2x8x8xf32>
    %cst_25 = arith.constant dense<0.000000e+00> : vector<2x8xf32>
    %67 = vector.multi_reduction <add>, %66, %cst_25 [2] : vector<2x8x8xf32> to vector<2x8xf32>
    %68 = vector.shape_cast %67 : vector<2x8xf32> to vector<2x8x1xf32>
    %69 = tpu.reciprocal %68 {approx = true} : vector<2x8x1xf32> -> vector<2x8x1xf32>
    %70 = vector.broadcast %69 : vector<2x8x1xf32> to vector<2x8x8xf32>
    %71 = arith.mulf %66, %70 : vector<2x8x8xf32>
    %72 = arith.truncf %71 : vector<2x8x8xf32> to vector<2x8x8xbf16>
    "tpu.trace_start"() <{level = 10 : i32, message = "btu,bus->bts"}> : () -> ()
    %cst_26 = arith.constant dense<0.000000e+00> : vector<2x8x8xf32>
    %73 = tpu.matmul %72, %60, %cst_26 {dimension_numbers = #tpu.dot_dimension_numbers<[2], [1], [1], [2], [0, 0, 0, 1, 1, 2], [0], [0]>} : vector<2x8x8xbf16>, vector<2x8x8xbf16>, vector<2x8x8xf32> -> vector<2x8x8xf32>
    "tpu.trace_stop"() : () -> ()
    %74 = vector.shape_cast %73 : vector<2x8x8xf32> to vector<16x8xf32>
    %75 = arith.truncf %74 : vector<16x8xf32> to vector<16x8xbf16>
    %76 = vector.extract_strided_slice %14 {offsets = [16, 0], sizes = [8, 32], strides = [1, 1]} : vector<32x32xbf16> to vector<8x32xbf16>
    %cst_27 = arith.constant dense<0.000000e+00> : vector<16x32xf32>
    %77 = tpu.matmul %75, %76, %cst_27 {dimension_numbers = #tpu.dot_dimension_numbers<[1], [0], [0], [1], [0, 0, 1, 1], [], []>} : vector<16x8xbf16>, vector<8x32xbf16>, vector<16x32xf32> -> vector<16x32xf32>
    %78 = arith.addf %57, %77 : vector<16x32xf32>
    %79 = vector.extract_strided_slice %9 {offsets = [0, 0, 24], sizes = [2, 8, 8], strides = [1, 1, 1]} : vector<2x8x32xbf16> to vector<2x8x8xbf16>
    %80 = vector.extract_strided_slice %11 {offsets = [0, 0, 24], sizes = [2, 8, 8], strides = [1, 1, 1]} : vector<2x8x32xbf16> to vector<2x8x8xbf16>
    %81 = vector.extract_strided_slice %13 {offsets = [0, 0, 24], sizes = [2, 8, 8], strides = [1, 1, 1]} : vector<2x8x32xbf16> to vector<2x8x8xbf16>
    "tpu.trace_start"() <{level = 10 : i32, message = "bts,bus->btu"}> : () -> ()
    %cst_28 = arith.constant dense<0.000000e+00> : vector<2x8x8xf32>
    %82 = tpu.matmul %79, %80, %cst_28 {dimension_numbers = #tpu.dot_dimension_numbers<[2], [2], [1], [1], [0, 0, 0, 1, 1, 1], [0], [0]>} : vector<2x8x8xbf16>, vector<2x8x8xbf16>, vector<2x8x8xf32> -> vector<2x8x8xf32>
    "tpu.trace_stop"() : () -> ()
    %cst_29 = arith.constant dense<0xFF800000> : vector<2x8xf32>
    %83 = vector.multi_reduction <maximumf>, %82, %cst_29 [2] : vector<2x8x8xf32> to vector<2x8xf32>
    %84 = vector.shape_cast %83 : vector<2x8xf32> to vector<2x8x1xf32>
    %85 = vector.broadcast %84 : vector<2x8x1xf32> to vector<2x8x8xf32>
    %86 = arith.subf %82, %85 : vector<2x8x8xf32>
    %87 = math.exp %86 : vector<2x8x8xf32>
    %cst_30 = arith.constant dense<0.000000e+00> : vector<2x8xf32>
    %88 = vector.multi_reduction <add>, %87, %cst_30 [2] : vector<2x8x8xf32> to vector<2x8xf32>
    %89 = vector.shape_cast %88 : vector<2x8xf32> to vector<2x8x1xf32>
    %90 = tpu.reciprocal %89 {approx = true} : vector<2x8x1xf32> -> vector<2x8x1xf32>
    %91 = vector.broadcast %90 : vector<2x8x1xf32> to vector<2x8x8xf32>
    %92 = arith.mulf %87, %91 : vector<2x8x8xf32>
    %93 = arith.truncf %92 : vector<2x8x8xf32> to vector<2x8x8xbf16>
    "tpu.trace_start"() <{level = 10 : i32, message = "btu,bus->bts"}> : () -> ()
    %cst_31 = arith.constant dense<0.000000e+00> : vector<2x8x8xf32>
    %94 = tpu.matmul %93, %81, %cst_31 {dimension_numbers = #tpu.dot_dimension_numbers<[2], [1], [1], [2], [0, 0, 0, 1, 1, 2], [0], [0]>} : vector<2x8x8xbf16>, vector<2x8x8xbf16>, vector<2x8x8xf32> -> vector<2x8x8xf32>
    "tpu.trace_stop"() : () -> ()
    %95 = vector.shape_cast %94 : vector<2x8x8xf32> to vector<16x8xf32>
    %96 = arith.truncf %95 : vector<16x8xf32> to vector<16x8xbf16>
    %97 = vector.extract_strided_slice %14 {offsets = [24, 0], sizes = [8, 32], strides = [1, 1]} : vector<32x32xbf16> to vector<8x32xbf16>
    %cst_32 = arith.constant dense<0.000000e+00> : vector<16x32xf32>
    %98 = tpu.matmul %96, %97, %cst_32 {dimension_numbers = #tpu.dot_dimension_numbers<[1], [0], [0], [1], [0, 0, 1, 1], [], []>} : vector<16x8xbf16>, vector<8x32xbf16>, vector<16x32xf32> -> vector<16x32xf32>
    %99 = arith.addf %78, %98 : vector<16x32xf32>
    %100 = arith.extf %1 : vector<16x32xbf16> to vector<16x32xf32>
    %c0_33 = arith.constant 0 : index
    %c0_34 = arith.constant 0 : index
    %101 = vector.load %arg6[%c0_33, %c0_34] : memref<1x32xf32, #tpu.memory_space<vmem>>, vector<1x32xf32>
    %102 = vector.broadcast %101 : vector<1x32xf32> to vector<16x32xf32>
    %103 = arith.addf %99, %102 : vector<16x32xf32>
    %104 = arith.addf %103, %100 : vector<16x32xf32>
    %c0_35 = arith.constant 0 : index
    %c0_36 = arith.constant 0 : index
    %105 = vector.load %arg7[%c0_35, %c0_36] : memref<1x32xf32, #tpu.memory_space<vmem>>, vector<1x32xf32>
    %c0_37 = arith.constant 0 : index
    %c0_38 = arith.constant 0 : index
    %106 = vector.load %arg8[%c0_37, %c0_38] : memref<1x32xf32, #tpu.memory_space<vmem>>, vector<1x32xf32>
    %cst_39 = arith.constant dense<0.000000e+00> : vector<16xf32>
    %107 = vector.multi_reduction <add>, %104, %cst_39 [1] : vector<16x32xf32> to vector<16xf32>
    %108 = vector.shape_cast %107 : vector<16xf32> to vector<16x1xf32>
    %cst_40 = arith.constant 3.200000e+01 : f32
    %109 = vector.broadcast %cst_40 : f32 to vector<16x1xf32>
    %110 = arith.divf %108, %109 : vector<16x1xf32>
    %111 = vector.broadcast %110 : vector<16x1xf32> to vector<16x32xf32>
    %112 = arith.subf %104, %111 : vector<16x32xf32>
    %113 = arith.mulf %112, %112 : vector<16x32xf32>
    %cst_41 = arith.constant dense<0.000000e+00> : vector<16xf32>
    %114 = vector.multi_reduction <add>, %113, %cst_41 [1] : vector<16x32xf32> to vector<16xf32>
    %115 = vector.shape_cast %114 : vector<16xf32> to vector<16x1xf32>
    %cst_42 = arith.constant 3.200000e+01 : f32
    %116 = vector.broadcast %cst_42 : f32 to vector<16x1xf32>
    %117 = arith.divf %115, %116 : vector<16x1xf32>
    %cst_43 = arith.constant 9.99999974E-6 : f32
    %118 = vector.broadcast %cst_43 : f32 to vector<16x1xf32>
    %119 = arith.addf %117, %118 : vector<16x1xf32>
    %120 = math.rsqrt %119 : vector<16x1xf32>
    %121 = vector.broadcast %120 : vector<16x1xf32> to vector<16x32xf32>
    %122 = arith.mulf %112, %121 : vector<16x32xf32>
    %123 = vector.broadcast %105 : vector<1x32xf32> to vector<16x32xf32>
    %124 = arith.mulf %122, %123 : vector<16x32xf32>
    %125 = vector.broadcast %106 : vector<1x32xf32> to vector<16x32xf32>
    %126 = arith.addf %124, %125 : vector<16x32xf32>
    %127 = arith.truncf %126 : vector<16x32xf32> to vector<16x32xbf16>
    %c0_44 = arith.constant 0 : index
    %c0_45 = arith.constant 0 : index
    %128 = vector.load %arg9[%c0_44, %c0_45] : memref<32x128xbf16, #tpu.memory_space<vmem>>, vector<32x128xbf16>
    %cst_46 = arith.constant dense<0.000000e+00> : vector<16x128xf32>
    %129 = tpu.matmul %127, %128, %cst_46 {dimension_numbers = #tpu.dot_dimension_numbers<[1], [0], [0], [1], [0, 0, 1, 1], [], []>} : vector<16x32xbf16>, vector<32x128xbf16>, vector<16x128xf32> -> vector<16x128xf32>
    %c0_47 = arith.constant 0 : index
    %c0_48 = arith.constant 0 : index
    %130 = vector.load %arg10[%c0_47, %c0_48] : memref<1x128xf32, #tpu.memory_space<vmem>>, vector<1x128xf32>
    %131 = vector.broadcast %130 : vector<1x128xf32> to vector<16x128xf32>
    %132 = arith.addf %129, %131 : vector<16x128xf32>
    %cst_49 = arith.constant 0.000000e+00 : f32
    %133 = vector.broadcast %cst_49 : f32 to vector<16x128xf32>
    %134 = arith.maximumf %132, %133 : vector<16x128xf32>
    %135 = arith.truncf %134 : vector<16x128xf32> to vector<16x128xbf16>
    %c0_50 = arith.constant 0 : index
    %c0_51 = arith.constant 0 : index
    %136 = vector.load %arg11[%c0_50, %c0_51] : memref<128x32xbf16, #tpu.memory_space<vmem>>, vector<128x32xbf16>
    %cst_52 = arith.constant dense<0.000000e+00> : vector<16x32xf32>
    %137 = tpu.matmul %135, %136, %cst_52 {dimension_numbers = #tpu.dot_dimension_numbers<[1], [0], [0], [1], [0, 0, 1, 1], [], []>} : vector<16x128xbf16>, vector<128x32xbf16>, vector<16x32xf32> -> vector<16x32xf32>
    %c0_53 = arith.constant 0 : index
    %c0_54 = arith.constant 0 : index
    %138 = vector.load %arg12[%c0_53, %c0_54] : memref<1x32xf32, #tpu.memory_space<vmem>>, vector<1x32xf32>
    %139 = vector.broadcast %138 : vector<1x32xf32> to vector<16x32xf32>
    %140 = arith.addf %137, %139 : vector<16x32xf32>
    %141 = arith.addf %140, %126 : vector<16x32xf32>
    %c0_55 = arith.constant 0 : index
    %c0_56 = arith.constant 0 : index
    %142 = vector.load %arg13[%c0_55, %c0_56] : memref<1x32xf32, #tpu.memory_space<vmem>>, vector<1x32xf32>
    %cst_57 = arith.constant 1.000000e+00 : f32
    %143 = vector.broadcast %cst_57 : f32 to vector<1x32xf32>
    %144 = arith.mulf %143, %142 : vector<1x32xf32>
    %c0_58 = arith.constant 0 : index
    %c0_59 = arith.constant 0 : index
    %145 = vector.load %arg14[%c0_58, %c0_59] : memref<1x32xf32, #tpu.memory_space<vmem>>, vector<1x32xf32>
    %cst_60 = arith.constant dense<0.000000e+00> : vector<16xf32>
    %146 = vector.multi_reduction <add>, %141, %cst_60 [1] : vector<16x32xf32> to vector<16xf32>
    %147 = vector.shape_cast %146 : vector<16xf32> to vector<16x1xf32>
    %cst_61 = arith.constant 3.200000e+01 : f32
    %148 = vector.broadcast %cst_61 : f32 to vector<16x1xf32>
    %149 = arith.divf %147, %148 : vector<16x1xf32>
    %150 = vector.broadcast %149 : vector<16x1xf32> to vector<16x32xf32>
    %151 = arith.subf %141, %150 : vector<16x32xf32>
    %152 = arith.mulf %151, %151 : vector<16x32xf32>
    %cst_62 = arith.constant dense<0.000000e+00> : vector<16xf32>
    %153 = vector.multi_reduction <add>, %152, %cst_62 [1] : vector<16x32xf32> to vector<16xf32>
    %154 = vector.shape_cast %153 : vector<16xf32> to vector<16x1xf32>
    %cst_63 = arith.constant 3.200000e+01 : f32
    %155 = vector.broadcast %cst_63 : f32 to vector<16x1xf32>
    %156 = arith.divf %154, %155 : vector<16x1xf32>
    %cst_64 = arith.constant 9.99999974E-6 : f32
    %157 = vector.broadcast %cst_64 : f32 to vector<16x1xf32>
    %158 = arith.addf %156, %157 : vector<16x1xf32>
    %159 = math.rsqrt %158 : vector<16x1xf32>
    %160 = vector.broadcast %159 : vector<16x1xf32> to vector<16x32xf32>
    %161 = arith.mulf %151, %160 : vector<16x32xf32>
    %162 = vector.broadcast %144 : vector<1x32xf32> to vector<16x32xf32>
    %163 = arith.mulf %161, %162 : vector<16x32xf32>
    %164 = vector.broadcast %145 : vector<1x32xf32> to vector<16x32xf32>
    %165 = arith.addf %163, %164 : vector<16x32xf32>
    %166 = vector.shape_cast %165 : vector<16x32xf32> to vector<2x8x32xf32>
    %cst_65 = arith.constant dense<0xFF800000> : vector<2x32xf32>
    %167 = vector.multi_reduction <maximumf>, %166, %cst_65 [1] : vector<2x8x32xf32> to vector<2x32xf32>
    %c0_66 = arith.constant 0 : index
    %c0_67 = arith.constant 0 : index
    %168 = vector.load %arg15[%c0_66, %c0_67] : memref<2x32xf32, #tpu.memory_space<vmem>>, vector<2x32xf32>
    tpu.vector_store %arg15[%c0_66, %c0_67], %167 {strides = array<i32>} : memref<2x32xf32, #tpu.memory_space<vmem>>, vector<2x32xf32>,
    return
  }
  func.func @transform_0(%arg0: i32) -> (i32, i32, i32) {
    %c0_i32 = arith.constant 0 : i32
    %c0_i32_0 = arith.constant 0 : i32
    %c0_i32_1 = arith.constant 0 : i32
    return %arg0, %c0_i32, %c0_i32_0 : i32, i32, i32
  }
  func.func @transform_1(%arg0: i32) -> (i32, i32) {
    %c0_i32 = arith.constant 0 : i32
    %c0_i32_0 = arith.constant 0 : i32
    %c0_i32_1 = arith.constant 0 : i32
    return %c0_i32, %c0_i32_0 : i32, i32
  }
  func.func @transform_2(%arg0: i32) -> (i32, i32) {
    %c0_i32 = arith.constant 0 : i32
    %c0_i32_0 = arith.constant 0 : i32
    %c0_i32_1 = arith.constant 0 : i32
    return %c0_i32, %c0_i32_0 : i32, i32
  }
  func.func @transform_3(%arg0: i32) -> (i32, i32) {
    %c0_i32 = arith.constant 0 : i32
    %c0_i32_0 = arith.constant 0 : i32
    %c0_i32_1 = arith.constant 0 : i32
    return %c0_i32, %c0_i32_0 : i32, i32
  }
  func.func @transform_4(%arg0: i32) -> (i32, i32) {
    %c0_i32 = arith.constant 0 : i32
    %c0_i32_0 = arith.constant 0 : i32
    %c0_i32_1 = arith.constant 0 : i32
    return %c0_i32, %c0_i32_0 : i32, i32
  }
  func.func @transform_5(%arg0: i32) -> (i32, i32) {
    %c0_i32 = arith.constant 0 : i32
    %c0_i32_0 = arith.constant 0 : i32
    %c0_i32_1 = arith.constant 0 : i32
    return %c0_i32, %c0_i32_0 : i32, i32
  }
  func.func @transform_6(%arg0: i32) -> (i32, i32) {
    %c0_i32 = arith.constant 0 : i32
    %c0_i32_0 = arith.constant 0 : i32
    %c0_i32_1 = arith.constant 0 : i32
    return %c0_i32, %c0_i32_0 : i32, i32
  }
  func.func @transform_7(%arg0: i32) -> (i32, i32) {
    %c0_i32 = arith.constant 0 : i32
    %c0_i32_0 = arith.constant 0 : i32
    %c0_i32_1 = arith.constant 0 : i32
    return %c0_i32, %c0_i32_0 : i32, i32
  }
  func.func @transform_8(%arg0: i32) -> (i32, i32) {
    %c0_i32 = arith.constant 0 : i32
    %c0_i32_0 = arith.constant 0 : i32
    %c0_i32_1 = arith.constant 0 : i32
    return %c0_i32, %c0_i32_0 : i32, i32
  }
  func.func @transform_9(%arg0: i32) -> (i32, i32) {
    %c0_i32 = arith.constant 0 : i32
    %c0_i32_0 = arith.constant 0 : i32
    %c0_i32_1 = arith.constant 0 : i32
    return %c0_i32, %c0_i32_0 : i32, i32
  }
  func.func @transform_10(%arg0: i32) -> (i32, i32) {
    %c0_i32 = arith.constant 0 : i32
    %c0_i32_0 = arith.constant 0 : i32
    %c0_i32_1 = arith.constant 0 : i32
    return %c0_i32, %c0_i32_0 : i32, i32
  }
  func.func @transform_11(%arg0: i32) -> (i32, i32) {
    %c0_i32 = arith.constant 0 : i32
    %c0_i32_0 = arith.constant 0 : i32
    %c0_i32_1 = arith.constant 0 : i32
    return %c0_i32, %c0_i32_0 : i32, i32
  }
  func.func @transform_12(%arg0: i32) -> (i32, i32) {
    %c0_i32 = arith.constant 0 : i32
    %c0_i32_0 = arith.constant 0 : i32
    %c0_i32_1 = arith.constant 0 : i32
    return %c0_i32, %c0_i32_0 : i32, i32
  }
  func.func @transform_13(%arg0: i32) -> (i32, i32) {
    %c0_i32 = arith.constant 0 : i32
    %c0_i32_0 = arith.constant 0 : i32
    %c0_i32_1 = arith.constant 0 : i32
    return %c0_i32, %c0_i32_0 : i32, i32
  }
  func.func @transform_14(%arg0: i32) -> (i32, i32) {
    %c0_i32 = arith.constant 0 : i32
    %c0_i32_0 = arith.constant 0 : i32
    return %arg0, %c0_i32 : i32, i32
  }
}

module attributes {stable_mosaic.version = 11 : i64} {
  func.func @transformer_block_kernel(%arg0: i32, %arg1: memref<2x8x32xbf16, #tpu.memory_space<vmem>>, %arg2: memref<8x32xbf16, #tpu.memory_space<vmem>>, %arg3: memref<32x32xbf16, #tpu.memory_space<vmem>>, %arg4: memref<32x32xbf16, #tpu.memory_space<vmem>>, %arg5: memref<32x32xbf16, #tpu.memory_space<vmem>>, %arg6: memref<32x32xbf16, #tpu.memory_space<vmem>>, %arg7: memref<1x32xf32, #tpu.memory_space<vmem>>, %arg8: memref<1x32xf32, #tpu.memory_space<vmem>>, %arg9: memref<1x32xf32, #tpu.memory_space<vmem>>, %arg10: memref<32x128xbf16, #tpu.memory_space<vmem>>, %arg11: memref<1x128xf32, #tpu.memory_space<vmem>>, %arg12: memref<128x32xbf16, #tpu.memory_space<vmem>>, %arg13: memref<1x32xf32, #tpu.memory_space<vmem>>, %arg14: memref<1x32xf32, #tpu.memory_space<vmem>>, %arg15: memref<1x32xf32, #tpu.memory_space<vmem>>, %arg16: memref<2x8x32xbf16, #tpu.memory_space<vmem>>) attributes {dimension_semantics = [#tpu.dimension_semantics<parallel>], iteration_bounds = array<i64: 1>, scalar_prefetch = 0 : i64, scratch_operands = 0 : i64, tpu.core_type = #tpu.core_type<tc>, window_params = [{transform_indices = @transform_0, window_bounds = array<i64: 2, 8, 32>}, {pipeline_mode = #tpu.pipeline_mode<synchronous>, transform_indices = @transform_1, window_bounds = array<i64: 8, 32>}, {pipeline_mode = #tpu.pipeline_mode<synchronous>, transform_indices = @transform_2, window_bounds = array<i64: 32, 32>}, {pipeline_mode = #tpu.pipeline_mode<synchronous>, transform_indices = @transform_3, window_bounds = array<i64: 32, 32>}, {pipeline_mode = #tpu.pipeline_mode<synchronous>, transform_indices = @transform_4, window_bounds = array<i64: 32, 32>}, {pipeline_mode = #tpu.pipeline_mode<synchronous>, transform_indices = @transform_5, window_bounds = array<i64: 32, 32>}, {pipeline_mode = #tpu.pipeline_mode<synchronous>, transform_indices = @transform_6, window_bounds = array<i64: 1, 32>}, {pipeline_mode = #tpu.pipeline_mode<synchronous>, transform_indices = @transform_7, window_bounds = array<i64: 1, 32>}, {pipeline_mode = #tpu.pipeline_mode<synchronous>, transform_indices = @transform_8, window_bounds = array<i64: 1, 32>}, {pipeline_mode = #tpu.pipeline_mode<synchronous>, transform_indices = @transform_9, window_bounds = array<i64: 32, 128>}, {pipeline_mode = #tpu.pipeline_mode<synchronous>, transform_indices = @transform_10, window_bounds = array<i64: 1, 128>}, {pipeline_mode = #tpu.pipeline_mode<synchronous>, transform_indices = @transform_11, window_bounds = array<i64: 128, 32>}, {pipeline_mode = #tpu.pipeline_mode<synchronous>, transform_indices = @transform_12, window_bounds = array<i64: 1, 32>}, {pipeline_mode = #tpu.pipeline_mode<synchronous>, transform_indices = @transform_13, window_bounds = array<i64: 1, 32>}, {pipeline_mode = #tpu.pipeline_mode<synchronous>, transform_indices = @transform_14, window_bounds = array<i64: 1, 32>}, {transform_indices = @transform_15, window_bounds = array<i64: 2, 8, 32>}]} {
    %c0 = arith.constant 0 : index
    %c0_0 = arith.constant 0 : index
    %c0_1 = arith.constant 0 : index
    %0 = vector.load %arg1[%c0, %c0_0, %c0_1] : memref<2x8x32xbf16, #tpu.memory_space<vmem>>, vector<2x8x32xbf16>
    %c0_2 = arith.constant 0 : index
    %c0_3 = arith.constant 0 : index
    %1 = vector.load %arg2[%c0_2, %c0_3] : memref<8x32xbf16, #tpu.memory_space<vmem>>, vector<8x32xbf16>
    %2 = vector.shape_cast %1 : vector<8x32xbf16> to vector<1x8x32xbf16>
    %3 = vector.broadcast %2 : vector<1x8x32xbf16> to vector<2x8x32xbf16>
    %4 = arith.addf %0, %3 : vector<2x8x32xbf16>
    %5 = vector.shape_cast %4 : vector<2x8x32xbf16> to vector<16x32xbf16>
    %c0_4 = arith.constant 0 : index
    %c0_5 = arith.constant 0 : index
    %6 = vector.load %arg3[%c0_4, %c0_5] : memref<32x32xbf16, #tpu.memory_space<vmem>>, vector<32x32xbf16>
    %cst = arith.constant dense<0.000000e+00> : vector<16x32xf32>
    %7 = tpu.matmul %5, %6, %cst {dimension_numbers = #tpu.dot_dimension_numbers<[1], [0], [0], [1], [0, 0, 1, 1], [], []>} : vector<16x32xbf16>, vector<32x32xbf16>, vector<16x32xf32> -> vector<16x32xf32>
    %c0_6 = arith.constant 0 : index
    %c0_7 = arith.constant 0 : index
    %8 = vector.load %arg4[%c0_6, %c0_7] : memref<32x32xbf16, #tpu.memory_space<vmem>>, vector<32x32xbf16>
    %cst_8 = arith.constant dense<0.000000e+00> : vector<16x32xf32>
    %9 = tpu.matmul %5, %8, %cst_8 {dimension_numbers = #tpu.dot_dimension_numbers<[1], [0], [0], [1], [0, 0, 1, 1], [], []>} : vector<16x32xbf16>, vector<32x32xbf16>, vector<16x32xf32> -> vector<16x32xf32>
    %c0_9 = arith.constant 0 : index
    %c0_10 = arith.constant 0 : index
    %10 = vector.load %arg5[%c0_9, %c0_10] : memref<32x32xbf16, #tpu.memory_space<vmem>>, vector<32x32xbf16>
    %cst_11 = arith.constant dense<0.000000e+00> : vector<16x32xf32>
    %11 = tpu.matmul %5, %10, %cst_11 {dimension_numbers = #tpu.dot_dimension_numbers<[1], [0], [0], [1], [0, 0, 1, 1], [], []>} : vector<16x32xbf16>, vector<32x32xbf16>, vector<16x32xf32> -> vector<16x32xf32>
    %12 = vector.shape_cast %7 : vector<16x32xf32> to vector<2x8x32xf32>
    %13 = arith.truncf %12 : vector<2x8x32xf32> to vector<2x8x32xbf16>
    %14 = vector.shape_cast %9 : vector<16x32xf32> to vector<2x8x32xf32>
    %15 = arith.truncf %14 : vector<2x8x32xf32> to vector<2x8x32xbf16>
    %16 = vector.shape_cast %11 : vector<16x32xf32> to vector<2x8x32xf32>
    %17 = arith.truncf %16 : vector<2x8x32xf32> to vector<2x8x32xbf16>
    %c0_12 = arith.constant 0 : index
    %c0_13 = arith.constant 0 : index
    %18 = vector.load %arg6[%c0_12, %c0_13] : memref<32x32xbf16, #tpu.memory_space<vmem>>, vector<32x32xbf16>
    %cst_14 = arith.constant 0.000000e+00 : f32
    %19 = vector.broadcast %cst_14 : f32 to vector<16x32xf32>
    %20 = vector.extract_strided_slice %13 {offsets = [0, 0, 0], sizes = [2, 8, 8], strides = [1, 1, 1]} : vector<2x8x32xbf16> to vector<2x8x8xbf16>
    %21 = vector.extract_strided_slice %15 {offsets = [0, 0, 0], sizes = [2, 8, 8], strides = [1, 1, 1]} : vector<2x8x32xbf16> to vector<2x8x8xbf16>
    %22 = vector.extract_strided_slice %17 {offsets = [0, 0, 0], sizes = [2, 8, 8], strides = [1, 1, 1]} : vector<2x8x32xbf16> to vector<2x8x8xbf16>
    "tpu.trace_start"() <{level = 10 : i32, message = "bts,bus->btu"}> : () -> ()
    %cst_15 = arith.constant dense<0.000000e+00> : vector<2x8x8xf32>
    %23 = tpu.matmul %20, %21, %cst_15 {dimension_numbers = #tpu.dot_dimension_numbers<[2], [2], [1], [1], [0, 0, 0, 1, 1, 1], [0], [0]>} : vector<2x8x8xbf16>, vector<2x8x8xbf16>, vector<2x8x8xf32> -> vector<2x8x8xf32>
    "tpu.trace_stop"() : () -> ()
    %cst_16 = arith.constant dense<0xFF800000> : vector<2x8xf32>
    %24 = vector.multi_reduction <maximumf>, %23, %cst_16 [2] : vector<2x8x8xf32> to vector<2x8xf32>
    %25 = vector.shape_cast %24 : vector<2x8xf32> to vector<2x8x1xf32>
    %26 = vector.broadcast %25 : vector<2x8x1xf32> to vector<2x8x8xf32>
    %27 = arith.subf %23, %26 : vector<2x8x8xf32>
    %28 = math.exp %27 : vector<2x8x8xf32>
    %cst_17 = arith.constant dense<0.000000e+00> : vector<2x8xf32>
    %29 = vector.multi_reduction <add>, %28, %cst_17 [2] : vector<2x8x8xf32> to vector<2x8xf32>
    %30 = vector.shape_cast %29 : vector<2x8xf32> to vector<2x8x1xf32>
    %31 = tpu.reciprocal %30 {approx = true} : vector<2x8x1xf32> -> vector<2x8x1xf32>
    %32 = vector.broadcast %31 : vector<2x8x1xf32> to vector<2x8x8xf32>
    %33 = arith.mulf %28, %32 : vector<2x8x8xf32>
    %34 = arith.truncf %33 : vector<2x8x8xf32> to vector<2x8x8xbf16>
    "tpu.trace_start"() <{level = 10 : i32, message = "btu,bus->bts"}> : () -> ()
    %cst_18 = arith.constant dense<0.000000e+00> : vector<2x8x8xf32>
    %35 = tpu.matmul %34, %22, %cst_18 {dimension_numbers = #tpu.dot_dimension_numbers<[2], [1], [1], [2], [0, 0, 0, 1, 1, 2], [0], [0]>} : vector<2x8x8xbf16>, vector<2x8x8xbf16>, vector<2x8x8xf32> -> vector<2x8x8xf32>
    "tpu.trace_stop"() : () -> ()
    %36 = vector.shape_cast %35 : vector<2x8x8xf32> to vector<16x8xf32>
    %37 = arith.truncf %36 : vector<16x8xf32> to vector<16x8xbf16>
    %38 = vector.extract_strided_slice %18 {offsets = [0, 0], sizes = [8, 32], strides = [1, 1]} : vector<32x32xbf16> to vector<8x32xbf16>
    %cst_19 = arith.constant dense<0.000000e+00> : vector<16x32xf32>
    %39 = tpu.matmul %37, %38, %cst_19 {dimension_numbers = #tpu.dot_dimension_numbers<[1], [0], [0], [1], [0, 0, 1, 1], [], []>} : vector<16x8xbf16>, vector<8x32xbf16>, vector<16x32xf32> -> vector<16x32xf32>
    %40 = arith.addf %19, %39 : vector<16x32xf32>
    %41 = vector.extract_strided_slice %13 {offsets = [0, 0, 8], sizes = [2, 8, 8], strides = [1, 1, 1]} : vector<2x8x32xbf16> to vector<2x8x8xbf16>
    %42 = vector.extract_strided_slice %15 {offsets = [0, 0, 8], sizes = [2, 8, 8], strides = [1, 1, 1]} : vector<2x8x32xbf16> to vector<2x8x8xbf16>
    %43 = vector.extract_strided_slice %17 {offsets = [0, 0, 8], sizes = [2, 8, 8], strides = [1, 1, 1]} : vector<2x8x32xbf16> to vector<2x8x8xbf16>
    "tpu.trace_start"() <{level = 10 : i32, message = "bts,bus->btu"}> : () -> ()
    %cst_20 = arith.constant dense<0.000000e+00> : vector<2x8x8xf32>
    %44 = tpu.matmul %41, %42, %cst_20 {dimension_numbers = #tpu.dot_dimension_numbers<[2], [2], [1], [1], [0, 0, 0, 1, 1, 1], [0], [0]>} : vector<2x8x8xbf16>, vector<2x8x8xbf16>, vector<2x8x8xf32> -> vector<2x8x8xf32>
    "tpu.trace_stop"() : () -> ()
    %cst_21 = arith.constant dense<0xFF800000> : vector<2x8xf32>
    %45 = vector.multi_reduction <maximumf>, %44, %cst_21 [2] : vector<2x8x8xf32> to vector<2x8xf32>
    %46 = vector.shape_cast %45 : vector<2x8xf32> to vector<2x8x1xf32>
    %47 = vector.broadcast %46 : vector<2x8x1xf32> to vector<2x8x8xf32>
    %48 = arith.subf %44, %47 : vector<2x8x8xf32>
    %49 = math.exp %48 : vector<2x8x8xf32>
    %cst_22 = arith.constant dense<0.000000e+00> : vector<2x8xf32>
    %50 = vector.multi_reduction <add>, %49, %cst_22 [2] : vector<2x8x8xf32> to vector<2x8xf32>
    %51 = vector.shape_cast %50 : vector<2x8xf32> to vector<2x8x1xf32>
    %52 = tpu.reciprocal %51 {approx = true} : vector<2x8x1xf32> -> vector<2x8x1xf32>
    %53 = vector.broadcast %52 : vector<2x8x1xf32> to vector<2x8x8xf32>
    %54 = arith.mulf %49, %53 : vector<2x8x8xf32>
    %55 = arith.truncf %54 : vector<2x8x8xf32> to vector<2x8x8xbf16>
    "tpu.trace_start"() <{level = 10 : i32, message = "btu,bus->bts"}> : () -> ()
    %cst_23 = arith.constant dense<0.000000e+00> : vector<2x8x8xf32>
    %56 = tpu.matmul %55, %43, %cst_23 {dimension_numbers = #tpu.dot_dimension_numbers<[2], [1], [1], [2], [0, 0, 0, 1, 1, 2], [0], [0]>} : vector<2x8x8xbf16>, vector<2x8x8xbf16>, vector<2x8x8xf32> -> vector<2x8x8xf32>
    "tpu.trace_stop"() : () -> ()
    %57 = vector.shape_cast %56 : vector<2x8x8xf32> to vector<16x8xf32>
    %58 = arith.truncf %57 : vector<16x8xf32> to vector<16x8xbf16>
    %59 = vector.extract_strided_slice %18 {offsets = [8, 0], sizes = [8, 32], strides = [1, 1]} : vector<32x32xbf16> to vector<8x32xbf16>
    %cst_24 = arith.constant dense<0.000000e+00> : vector<16x32xf32>
    %60 = tpu.matmul %58, %59, %cst_24 {dimension_numbers = #tpu.dot_dimension_numbers<[1], [0], [0], [1], [0, 0, 1, 1], [], []>} : vector<16x8xbf16>, vector<8x32xbf16>, vector<16x32xf32> -> vector<16x32xf32>
    %61 = arith.addf %40, %60 : vector<16x32xf32>
    %62 = vector.extract_strided_slice %13 {offsets = [0, 0, 16], sizes = [2, 8, 8], strides = [1, 1, 1]} : vector<2x8x32xbf16> to vector<2x8x8xbf16>
    %63 = vector.extract_strided_slice %15 {offsets = [0, 0, 16], sizes = [2, 8, 8], strides = [1, 1, 1]} : vector<2x8x32xbf16> to vector<2x8x8xbf16>
    %64 = vector.extract_strided_slice %17 {offsets = [0, 0, 16], sizes = [2, 8, 8], strides = [1, 1, 1]} : vector<2x8x32xbf16> to vector<2x8x8xbf16>
    "tpu.trace_start"() <{level = 10 : i32, message = "bts,bus->btu"}> : () -> ()
    %cst_25 = arith.constant dense<0.000000e+00> : vector<2x8x8xf32>
    %65 = tpu.matmul %62, %63, %cst_25 {dimension_numbers = #tpu.dot_dimension_numbers<[2], [2], [1], [1], [0, 0, 0, 1, 1, 1], [0], [0]>} : vector<2x8x8xbf16>, vector<2x8x8xbf16>, vector<2x8x8xf32> -> vector<2x8x8xf32>
    "tpu.trace_stop"() : () -> ()
    %cst_26 = arith.constant dense<0xFF800000> : vector<2x8xf32>
    %66 = vector.multi_reduction <maximumf>, %65, %cst_26 [2] : vector<2x8x8xf32> to vector<2x8xf32>
    %67 = vector.shape_cast %66 : vector<2x8xf32> to vector<2x8x1xf32>
    %68 = vector.broadcast %67 : vector<2x8x1xf32> to vector<2x8x8xf32>
    %69 = arith.subf %65, %68 : vector<2x8x8xf32>
    %70 = math.exp %69 : vector<2x8x8xf32>
    %cst_27 = arith.constant dense<0.000000e+00> : vector<2x8xf32>
    %71 = vector.multi_reduction <add>, %70, %cst_27 [2] : vector<2x8x8xf32> to vector<2x8xf32>
    %72 = vector.shape_cast %71 : vector<2x8xf32> to vector<2x8x1xf32>
    %73 = tpu.reciprocal %72 {approx = true} : vector<2x8x1xf32> -> vector<2x8x1xf32>
    %74 = vector.broadcast %73 : vector<2x8x1xf32> to vector<2x8x8xf32>
    %75 = arith.mulf %70, %74 : vector<2x8x8xf32>
    %76 = arith.truncf %75 : vector<2x8x8xf32> to vector<2x8x8xbf16>
    "tpu.trace_start"() <{level = 10 : i32, message = "btu,bus->bts"}> : () -> ()
    %cst_28 = arith.constant dense<0.000000e+00> : vector<2x8x8xf32>
    %77 = tpu.matmul %76, %64, %cst_28 {dimension_numbers = #tpu.dot_dimension_numbers<[2], [1], [1], [2], [0, 0, 0, 1, 1, 2], [0], [0]>} : vector<2x8x8xbf16>, vector<2x8x8xbf16>, vector<2x8x8xf32> -> vector<2x8x8xf32>
    "tpu.trace_stop"() : () -> ()
    %78 = vector.shape_cast %77 : vector<2x8x8xf32> to vector<16x8xf32>
    %79 = arith.truncf %78 : vector<16x8xf32> to vector<16x8xbf16>
    %80 = vector.extract_strided_slice %18 {offsets = [16, 0], sizes = [8, 32], strides = [1, 1]} : vector<32x32xbf16> to vector<8x32xbf16>
    %cst_29 = arith.constant dense<0.000000e+00> : vector<16x32xf32>
    %81 = tpu.matmul %79, %80, %cst_29 {dimension_numbers = #tpu.dot_dimension_numbers<[1], [0], [0], [1], [0, 0, 1, 1], [], []>} : vector<16x8xbf16>, vector<8x32xbf16>, vector<16x32xf32> -> vector<16x32xf32>
    %82 = arith.addf %61, %81 : vector<16x32xf32>
    %83 = vector.extract_strided_slice %13 {offsets = [0, 0, 24], sizes = [2, 8, 8], strides = [1, 1, 1]} : vector<2x8x32xbf16> to vector<2x8x8xbf16>
    %84 = vector.extract_strided_slice %15 {offsets = [0, 0, 24], sizes = [2, 8, 8], strides = [1, 1, 1]} : vector<2x8x32xbf16> to vector<2x8x8xbf16>
    %85 = vector.extract_strided_slice %17 {offsets = [0, 0, 24], sizes = [2, 8, 8], strides = [1, 1, 1]} : vector<2x8x32xbf16> to vector<2x8x8xbf16>
    "tpu.trace_start"() <{level = 10 : i32, message = "bts,bus->btu"}> : () -> ()
    %cst_30 = arith.constant dense<0.000000e+00> : vector<2x8x8xf32>
    %86 = tpu.matmul %83, %84, %cst_30 {dimension_numbers = #tpu.dot_dimension_numbers<[2], [2], [1], [1], [0, 0, 0, 1, 1, 1], [0], [0]>} : vector<2x8x8xbf16>, vector<2x8x8xbf16>, vector<2x8x8xf32> -> vector<2x8x8xf32>
    "tpu.trace_stop"() : () -> ()
    %cst_31 = arith.constant dense<0xFF800000> : vector<2x8xf32>
    %87 = vector.multi_reduction <maximumf>, %86, %cst_31 [2] : vector<2x8x8xf32> to vector<2x8xf32>
    %88 = vector.shape_cast %87 : vector<2x8xf32> to vector<2x8x1xf32>
    %89 = vector.broadcast %88 : vector<2x8x1xf32> to vector<2x8x8xf32>
    %90 = arith.subf %86, %89 : vector<2x8x8xf32>
    %91 = math.exp %90 : vector<2x8x8xf32>
    %cst_32 = arith.constant dense<0.000000e+00> : vector<2x8xf32>
    %92 = vector.multi_reduction <add>, %91, %cst_32 [2] : vector<2x8x8xf32> to vector<2x8xf32>
    %93 = vector.shape_cast %92 : vector<2x8xf32> to vector<2x8x1xf32>
    %94 = tpu.reciprocal %93 {approx = true} : vector<2x8x1xf32> -> vector<2x8x1xf32>
    %95 = vector.broadcast %94 : vector<2x8x1xf32> to vector<2x8x8xf32>
    %96 = arith.mulf %91, %95 : vector<2x8x8xf32>
    %97 = arith.truncf %96 : vector<2x8x8xf32> to vector<2x8x8xbf16>
    "tpu.trace_start"() <{level = 10 : i32, message = "btu,bus->bts"}> : () -> ()
    %cst_33 = arith.constant dense<0.000000e+00> : vector<2x8x8xf32>
    %98 = tpu.matmul %97, %85, %cst_33 {dimension_numbers = #tpu.dot_dimension_numbers<[2], [1], [1], [2], [0, 0, 0, 1, 1, 2], [0], [0]>} : vector<2x8x8xbf16>, vector<2x8x8xbf16>, vector<2x8x8xf32> -> vector<2x8x8xf32>
    "tpu.trace_stop"() : () -> ()
    %99 = vector.shape_cast %98 : vector<2x8x8xf32> to vector<16x8xf32>
    %100 = arith.truncf %99 : vector<16x8xf32> to vector<16x8xbf16>
    %101 = vector.extract_strided_slice %18 {offsets = [24, 0], sizes = [8, 32], strides = [1, 1]} : vector<32x32xbf16> to vector<8x32xbf16>
    %cst_34 = arith.constant dense<0.000000e+00> : vector<16x32xf32>
    %102 = tpu.matmul %100, %101, %cst_34 {dimension_numbers = #tpu.dot_dimension_numbers<[1], [0], [0], [1], [0, 0, 1, 1], [], []>} : vector<16x8xbf16>, vector<8x32xbf16>, vector<16x32xf32> -> vector<16x32xf32>
    %103 = arith.addf %82, %102 : vector<16x32xf32>
    %104 = arith.extf %5 : vector<16x32xbf16> to vector<16x32xf32>
    %c0_35 = arith.constant 0 : index
    %c0_36 = arith.constant 0 : index
    %105 = vector.load %arg7[%c0_35, %c0_36] : memref<1x32xf32, #tpu.memory_space<vmem>>, vector<1x32xf32>
    %106 = vector.broadcast %105 : vector<1x32xf32> to vector<16x32xf32>
    %107 = arith.addf %103, %106 : vector<16x32xf32>
    %108 = arith.addf %107, %104 : vector<16x32xf32>
    %c0_37 = arith.constant 0 : index
    %c0_38 = arith.constant 0 : index
    %109 = vector.load %arg8[%c0_37, %c0_38] : memref<1x32xf32, #tpu.memory_space<vmem>>, vector<1x32xf32>
    %c0_39 = arith.constant 0 : index
    %c0_40 = arith.constant 0 : index
    %110 = vector.load %arg9[%c0_39, %c0_40] : memref<1x32xf32, #tpu.memory_space<vmem>>, vector<1x32xf32>
    %cst_41 = arith.constant dense<0.000000e+00> : vector<16xf32>
    %111 = vector.multi_reduction <add>, %108, %cst_41 [1] : vector<16x32xf32> to vector<16xf32>
    %112 = vector.shape_cast %111 : vector<16xf32> to vector<16x1xf32>
    %cst_42 = arith.constant 3.200000e+01 : f32
    %113 = vector.broadcast %cst_42 : f32 to vector<16x1xf32>
    %114 = arith.divf %112, %113 : vector<16x1xf32>
    %115 = vector.broadcast %114 : vector<16x1xf32> to vector<16x32xf32>
    %116 = arith.subf %108, %115 : vector<16x32xf32>
    %117 = arith.mulf %116, %116 : vector<16x32xf32>
    %cst_43 = arith.constant dense<0.000000e+00> : vector<16xf32>
    %118 = vector.multi_reduction <add>, %117, %cst_43 [1] : vector<16x32xf32> to vector<16xf32>
    %119 = vector.shape_cast %118 : vector<16xf32> to vector<16x1xf32>
    %cst_44 = arith.constant 3.200000e+01 : f32
    %120 = vector.broadcast %cst_44 : f32 to vector<16x1xf32>
    %121 = arith.divf %119, %120 : vector<16x1xf32>
    %cst_45 = arith.constant 9.99999974E-6 : f32
    %122 = vector.broadcast %cst_45 : f32 to vector<16x1xf32>
    %123 = arith.addf %121, %122 : vector<16x1xf32>
    %124 = math.rsqrt %123 : vector<16x1xf32>
    %125 = vector.broadcast %124 : vector<16x1xf32> to vector<16x32xf32>
    %126 = arith.mulf %116, %125 : vector<16x32xf32>
    %127 = vector.broadcast %109 : vector<1x32xf32> to vector<16x32xf32>
    %128 = arith.mulf %126, %127 : vector<16x32xf32>
    %129 = vector.broadcast %110 : vector<1x32xf32> to vector<16x32xf32>
    %130 = arith.addf %128, %129 : vector<16x32xf32>
    %131 = arith.truncf %130 : vector<16x32xf32> to vector<16x32xbf16>
    %c0_46 = arith.constant 0 : index
    %c0_47 = arith.constant 0 : index
    %132 = vector.load %arg10[%c0_46, %c0_47] : memref<32x128xbf16, #tpu.memory_space<vmem>>, vector<32x128xbf16>
    %cst_48 = arith.constant dense<0.000000e+00> : vector<16x128xf32>
    %133 = tpu.matmul %131, %132, %cst_48 {dimension_numbers = #tpu.dot_dimension_numbers<[1], [0], [0], [1], [0, 0, 1, 1], [], []>} : vector<16x32xbf16>, vector<32x128xbf16>, vector<16x128xf32> -> vector<16x128xf32>
    %c0_49 = arith.constant 0 : index
    %c0_50 = arith.constant 0 : index
    %134 = vector.load %arg11[%c0_49, %c0_50] : memref<1x128xf32, #tpu.memory_space<vmem>>, vector<1x128xf32>
    %135 = vector.broadcast %134 : vector<1x128xf32> to vector<16x128xf32>
    %136 = arith.addf %133, %135 : vector<16x128xf32>
    %cst_51 = arith.constant 0.000000e+00 : f32
    %137 = vector.broadcast %cst_51 : f32 to vector<16x128xf32>
    %138 = arith.maximumf %136, %137 : vector<16x128xf32>
    %139 = arith.truncf %138 : vector<16x128xf32> to vector<16x128xbf16>
    %c0_52 = arith.constant 0 : index
    %c0_53 = arith.constant 0 : index
    %140 = vector.load %arg12[%c0_52, %c0_53] : memref<128x32xbf16, #tpu.memory_space<vmem>>, vector<128x32xbf16>
    %cst_54 = arith.constant dense<0.000000e+00> : vector<16x32xf32>
    %141 = tpu.matmul %139, %140, %cst_54 {dimension_numbers = #tpu.dot_dimension_numbers<[1], [0], [0], [1], [0, 0, 1, 1], [], []>} : vector<16x128xbf16>, vector<128x32xbf16>, vector<16x32xf32> -> vector<16x32xf32>
    %c0_55 = arith.constant 0 : index
    %c0_56 = arith.constant 0 : index
    %142 = vector.load %arg13[%c0_55, %c0_56] : memref<1x32xf32, #tpu.memory_space<vmem>>, vector<1x32xf32>
    %143 = vector.broadcast %142 : vector<1x32xf32> to vector<16x32xf32>
    %144 = arith.addf %141, %143 : vector<16x32xf32>
    %145 = arith.addf %144, %130 : vector<16x32xf32>
    %c0_57 = arith.constant 0 : index
    %c0_58 = arith.constant 0 : index
    %146 = vector.load %arg14[%c0_57, %c0_58] : memref<1x32xf32, #tpu.memory_space<vmem>>, vector<1x32xf32>
    %cst_59 = arith.constant 1.000000e+00 : f32
    %147 = vector.broadcast %cst_59 : f32 to vector<1x32xf32>
    %148 = arith.mulf %147, %146 : vector<1x32xf32>
    %c0_60 = arith.constant 0 : index
    %c0_61 = arith.constant 0 : index
    %149 = vector.load %arg15[%c0_60, %c0_61] : memref<1x32xf32, #tpu.memory_space<vmem>>, vector<1x32xf32>
    %cst_62 = arith.constant dense<0.000000e+00> : vector<16xf32>
    %150 = vector.multi_reduction <add>, %145, %cst_62 [1] : vector<16x32xf32> to vector<16xf32>
    %151 = vector.shape_cast %150 : vector<16xf32> to vector<16x1xf32>
    %cst_63 = arith.constant 3.200000e+01 : f32
    %152 = vector.broadcast %cst_63 : f32 to vector<16x1xf32>
    %153 = arith.divf %151, %152 : vector<16x1xf32>
    %154 = vector.broadcast %153 : vector<16x1xf32> to vector<16x32xf32>
    %155 = arith.subf %145, %154 : vector<16x32xf32>
    %156 = arith.mulf %155, %155 : vector<16x32xf32>
    %cst_64 = arith.constant dense<0.000000e+00> : vector<16xf32>
    %157 = vector.multi_reduction <add>, %156, %cst_64 [1] : vector<16x32xf32> to vector<16xf32>
    %158 = vector.shape_cast %157 : vector<16xf32> to vector<16x1xf32>
    %cst_65 = arith.constant 3.200000e+01 : f32
    %159 = vector.broadcast %cst_65 : f32 to vector<16x1xf32>
    %160 = arith.divf %158, %159 : vector<16x1xf32>
    %cst_66 = arith.constant 9.99999974E-6 : f32
    %161 = vector.broadcast %cst_66 : f32 to vector<16x1xf32>
    %162 = arith.addf %160, %161 : vector<16x1xf32>
    %163 = math.rsqrt %162 : vector<16x1xf32>
    %164 = vector.broadcast %163 : vector<16x1xf32> to vector<16x32xf32>
    %165 = arith.mulf %155, %164 : vector<16x32xf32>
    %166 = vector.broadcast %148 : vector<1x32xf32> to vector<16x32xf32>
    %167 = arith.mulf %165, %166 : vector<16x32xf32>
    %168 = vector.broadcast %149 : vector<1x32xf32> to vector<16x32xf32>
    %169 = arith.addf %167, %168 : vector<16x32xf32>
    %170 = vector.shape_cast %169 : vector<16x32xf32> to vector<2x8x32xf32>
    %171 = arith.truncf %170 : vector<2x8x32xf32> to vector<2x8x32xbf16>
    %c0_67 = arith.constant 0 : index
    %c0_68 = arith.constant 0 : index
    %c0_69 = arith.constant 0 : index
    %172 = vector.load %arg16[%c0_67, %c0_68, %c0_69] : memref<2x8x32xbf16, #tpu.memory_space<vmem>>, vector<2x8x32xbf16>
    tpu.vector_store %arg16[%c0_67, %c0_68, %c0_69], %171 {strides = array<i32>} : memref<2x8x32xbf16, #tpu.memory_space<vmem>>, vector<2x8x32xbf16>,
    return
  }
  func.func @transform_0(%arg0: i32) -> (i32, i32, i32) {
    %c0_i32 = arith.constant 0 : i32
    %c0_i32_0 = arith.constant 0 : i32
    %c0_i32_1 = arith.constant 0 : i32
    return %arg0, %c0_i32, %c0_i32_0 : i32, i32, i32
  }
  func.func @transform_1(%arg0: i32) -> (i32, i32) {
    %c0_i32 = arith.constant 0 : i32
    %c0_i32_0 = arith.constant 0 : i32
    %c0_i32_1 = arith.constant 0 : i32
    return %c0_i32, %c0_i32_0 : i32, i32
  }
  func.func @transform_2(%arg0: i32) -> (i32, i32) {
    %c0_i32 = arith.constant 0 : i32
    %c0_i32_0 = arith.constant 0 : i32
    %c0_i32_1 = arith.constant 0 : i32
    return %c0_i32, %c0_i32_0 : i32, i32
  }
  func.func @transform_3(%arg0: i32) -> (i32, i32) {
    %c0_i32 = arith.constant 0 : i32
    %c0_i32_0 = arith.constant 0 : i32
    %c0_i32_1 = arith.constant 0 : i32
    return %c0_i32, %c0_i32_0 : i32, i32
  }
  func.func @transform_4(%arg0: i32) -> (i32, i32) {
    %c0_i32 = arith.constant 0 : i32
    %c0_i32_0 = arith.constant 0 : i32
    %c0_i32_1 = arith.constant 0 : i32
    return %c0_i32, %c0_i32_0 : i32, i32
  }
  func.func @transform_5(%arg0: i32) -> (i32, i32) {
    %c0_i32 = arith.constant 0 : i32
    %c0_i32_0 = arith.constant 0 : i32
    %c0_i32_1 = arith.constant 0 : i32
    return %c0_i32, %c0_i32_0 : i32, i32
  }
  func.func @transform_6(%arg0: i32) -> (i32, i32) {
    %c0_i32 = arith.constant 0 : i32
    %c0_i32_0 = arith.constant 0 : i32
    %c0_i32_1 = arith.constant 0 : i32
    return %c0_i32, %c0_i32_0 : i32, i32
  }
  func.func @transform_7(%arg0: i32) -> (i32, i32) {
    %c0_i32 = arith.constant 0 : i32
    %c0_i32_0 = arith.constant 0 : i32
    %c0_i32_1 = arith.constant 0 : i32
    return %c0_i32, %c0_i32_0 : i32, i32
  }
  func.func @transform_8(%arg0: i32) -> (i32, i32) {
    %c0_i32 = arith.constant 0 : i32
    %c0_i32_0 = arith.constant 0 : i32
    %c0_i32_1 = arith.constant 0 : i32
    return %c0_i32, %c0_i32_0 : i32, i32
  }
  func.func @transform_9(%arg0: i32) -> (i32, i32) {
    %c0_i32 = arith.constant 0 : i32
    %c0_i32_0 = arith.constant 0 : i32
    %c0_i32_1 = arith.constant 0 : i32
    return %c0_i32, %c0_i32_0 : i32, i32
  }
  func.func @transform_10(%arg0: i32) -> (i32, i32) {
    %c0_i32 = arith.constant 0 : i32
    %c0_i32_0 = arith.constant 0 : i32
    %c0_i32_1 = arith.constant 0 : i32
    return %c0_i32, %c0_i32_0 : i32, i32
  }
  func.func @transform_11(%arg0: i32) -> (i32, i32) {
    %c0_i32 = arith.constant 0 : i32
    %c0_i32_0 = arith.constant 0 : i32
    %c0_i32_1 = arith.constant 0 : i32
    return %c0_i32, %c0_i32_0 : i32, i32
  }
  func.func @transform_12(%arg0: i32) -> (i32, i32) {
    %c0_i32 = arith.constant 0 : i32
    %c0_i32_0 = arith.constant 0 : i32
    %c0_i32_1 = arith.constant 0 : i32
    return %c0_i32, %c0_i32_0 : i32, i32
  }
  func.func @transform_13(%arg0: i32) -> (i32, i32) {
    %c0_i32 = arith.constant 0 : i32
    %c0_i32_0 = arith.constant 0 : i32
    %c0_i32_1 = arith.constant 0 : i32
    return %c0_i32, %c0_i32_0 : i32, i32
  }
  func.func @transform_14(%arg0: i32) -> (i32, i32) {
    %c0_i32 = arith.constant 0 : i32
    %c0_i32_0 = arith.constant 0 : i32
    %c0_i32_1 = arith.constant 0 : i32
    return %c0_i32, %c0_i32_0 : i32, i32
  }
  func.func @transform_15(%arg0: i32) -> (i32, i32, i32) {
    %c0_i32 = arith.constant 0 : i32
    %c0_i32_0 = arith.constant 0 : i32
    %c0_i32_1 = arith.constant 0 : i32
    return %arg0, %c0_i32, %c0_i32_0 : i32, i32, i32
  }
}

</mosaic_0001>

<llo_original>
// kernel: ctransformer_forward.5
$region0: #{ctransformer_forward.5}
  #allocation0 [shape = 'u32[]', space=smem, size = 0x4, offset = 0x4, fixed_abs, tag = 'smem constant byte address 0x4 - core index']
  #allocation1 [shape = 'u32[144,128]{1,0:T(1,128)}', space=vmem, size = 0x12000, scoped, tag = 'internal scratch']
  %s0 = inlined_call_operand.vmem [shape: f32[2,32], index: 0, kind: input, shape index: {}]
  %s1 = inlined_call_operand.vmem [shape: f32[32,4], index: 1, kind: input, shape index: {}]
  %s2 = inlined_call_operand.vmem [shape: f32[1,4], index: 2, kind: input, shape index: {}]
  %s3 = inlined_call_operand.hbm [shape: f32[2,4], index: 3, kind: output, shape index: {}]
  %s4 = sld [smem:[#allocation0]]
  $region22: #{ctransformer_forward.5} parent=0
    _
  %s6 = ssub.s32 1, %s4
  %s7 = scalar_select 0, %s6, %s4
  $region1: #{ctransformer_forward.5} parent=0
    #allocation2 [shape = 'u8[1024]{0}', space=vmem, size = 0x400, scoped, tag = 'output window, operand 0, single buffered']
    #allocation3 [shape = 's32[1]{0}', space=sflag, size = 0x4, scoped, tag = 'scoped memory for ctransformer_forward.5']
    %8 = vsyncpa [#allocation3], 0
    // Predicated region
    $region2: #{ctransformer_forward.5} parent=1 // pred_check
      _
    $region3: #{ctransformer_forward.5} parent=1 // pred_check_branch
      %10 = sbr.rel (0) target = $region5
    $region4: #{ctransformer_forward.5} parent=1 // pred_region
      _
    $region5: #{ctransformer_forward.5} parent=1 // pred_fallthru
      _
    // Predicated region
    $region6: #{ctransformer_forward.5} parent=1 // pred_check
      _
    $region7: #{ctransformer_forward.5} parent=1 // pred_check_branch
      %12 = sbr.rel (0) target = $region9
    $region8: #{ctransformer_forward.5} parent=1 // pred_region
      _
    $region9: #{ctransformer_forward.5} parent=1 // pred_fallthru
      _
    // Predicated region
    $region10: #{ctransformer_forward.5} parent=1 // pred_check
      _
    $region11: #{ctransformer_forward.5} parent=1 // pred_check_branch
      %14 = sbr.rel (0) target = $region13
    $region12: #{ctransformer_forward.5} parent=1 // pred_region
      _
    $region13: #{ctransformer_forward.5} parent=1 // pred_fallthru
      _
    %v15 = vld [vmem:[%s0] sm:$0x3]
    %v16 = vld [vmem:[%s1] sm:$0xff]
    %v17 = vld [vmem:[%s1 + $0x8] sm:$0xff]
    %v18 = vld [vmem:[%s1 + $0x10] sm:$0xff]
    %v19 = vld [vmem:[%s1 + $0x18] sm:$0xff]
    %v20 = vld [vmem:[%s2] sm:$0x1]
    %v22 = vlaneseq
    %v23 = vshrl.u32 %v22, 7
    %v24 = vsub.s32 0, %v23
    %v25 = vrot.slane %v20, %v24
    %vm27 = vcmask 261120
    %v29 = vsel %vm27, %v15, 0
    %31 = vmatprep.subr.mxu0 0.0
    %32 = vmatpush1.msra.mxu0 0.0
    %33 = vmatprep.subr.mxu0 0.0
    %34 = vmatpush1.msra.mxu0 0.0
    %35 = vmatprep.subr.mxu0 0.0
    %36 = vmatpush1.msra.mxu0 0.0
    %37 = vmatprep.subr.mxu0 0.0
    %38 = vmatpush1.msra.mxu0 0.0
    %39 = vmatprep.subr.mxu0 0.0
    %40 = vmatpush1.msra.mxu0 0.0
    %41 = vmatprep.subr.mxu0 0.0
    %42 = vmatpush1.msra.mxu0 0.0
    %43 = vmatprep.subr.mxu0 0.0
    %44 = vmatpush1.msra.mxu0 0.0
    %45 = vmatprep.subr.mxu0 0.0
    %46 = vmatpush1.msra.mxu0 0.0
    %47 = vmatprep.subr.mxu0 0.0
    %48 = vmatpush1.msra.mxu0 0.0
    %49 = vmatprep.subr.mxu0 0.0
    %50 = vmatpush1.msra.mxu0 0.0
    %51 = vmatprep.subr.mxu0 0.0
    %52 = vmatpush1.msra.mxu0 0.0
    %53 = vmatprep.subr.mxu0 0.0
    %54 = vmatpush1.msra.mxu0 0.0
    %55 = vmatprep.subr.mxu0 0.0
    %56 = vmatpush1.msra.mxu0 %v19
    %57 = vmatprep.subr.mxu0 0.0
    %58 = vmatpush1.msra.mxu0 %v18
    %59 = vmatprep.subr.mxu0 0.0
    %60 = vmatpush1.msra.mxu0 %v17
    %61 = vmatprep.subr.mxu0 0.0
    %62 = vmatpush1.msra.mxu0 %v16
    %63 = vmatprep.subr.mxu0 0.0
    %64 = vmatpush2.msra.mxu0 0.0
    %65 = vmatprep.subr.mxu0 0.0
    %66 = vmatpush2.msra.mxu0 0.0
    %67 = vmatprep.subr.mxu0 0.0
    %68 = vmatpush2.msra.mxu0 0.0
    %69 = vmatprep.subr.mxu0 0.0
    %70 = vmatpush2.msra.mxu0 0.0
    %71 = vmatprep.subr.mxu0 0.0
    %72 = vmatpush2.msra.mxu0 0.0
    %73 = vmatprep.subr.mxu0 0.0
    %74 = vmatpush2.msra.mxu0 0.0
    %75 = vmatprep.subr.mxu0 0.0
    %76 = vmatpush2.msra.mxu0 0.0
    %77 = vmatprep.subr.mxu0 0.0
    %78 = vmatpush2.msra.mxu0 0.0
    %79 = vmatprep.subr.mxu0 0.0
    %80 = vmatpush2.msra.mxu0 0.0
    %81 = vmatprep.subr.mxu0 0.0
    %82 = vmatpush2.msra.mxu0 0.0
    %83 = vmatprep.subr.mxu0 0.0
    %84 = vmatpush2.msra.mxu0 0.0
    %85 = vmatprep.subr.mxu0 0.0
    %86 = vmatpush2.msra.mxu0 0.0
    %87 = vmatprep.subr.mxu0 0.0
    %88 = vmatpush2.msra.mxu0 0.0
    %89 = vmatprep.subr.mxu0 0.0
    %90 = vmatpush2.msra.mxu0 0.0
    %91 = vmatprep.subr.mxu0 0.0
    %92 = vmatpush2.msra.mxu0 0.0
    %93 = vmatprep.subr.mxu0 0.0
    %94 = vmatpush2.msra.mxu0 0.0
    %95 = vmatprep.mubr.f32.mxu0 0.0
    %96 = vmatmul.mubr.f32.gmra.mxu0 %v29
    %v97 = vpop.f32.mrf.mxu0
    %v98 = vadd.f32 %v25, %v97
    %v99 = vpop.f32.mrf.mxu0
    %100 = vdwg.mxu0
    %vm101 = vcmask 25600
    %v102 = vsel %vm101, %v98, -inf
    %103 = vmax.xlane.f32.xlu0 %v102
    %v104 = vpop.xlane.xlu0 %103
    %v105 = vsub.f32 %v98, %v104
    %v106 = vmul.f32 %v105, 1.442695
    %v107 = vpow.pop %v106
    %v108 = vsel %vm101, %v107, 0.0
    %109 = vadd.xlane.f32.xlu0 %v108
    %v110 = vpop.xlane.xlu0 %109
    %v111 = vlog2.pop %v110
    %v112 = vmul.f32 %v111, 0.6931472
    %v113 = vsub.f32 %v105, %v112
    %114 = vst.msk [vmem:[#allocation2] sm:$0x3] %vm101, %v113
    // Predicated region
    $region14: #{ctransformer_forward.5} parent=1 // pred_check
      _
    $region15: #{ctransformer_forward.5} parent=1 // pred_check_branch
      %116 = sbr.rel (0) target = $region17
    $region16: #{ctransformer_forward.5} parent=1 // pred_region
      %s118 = ssub.s32 32, 32
      %119 = vsyncadd [#allocation3], %s118
      %s121 = sshll.u32 [#allocation2], 4
      %s122 = int_to_ptr.vmem [resolvable:$true] %s121
      %124 = dma.vmem_to_hbm [thread:$0]  %s122, 32, %s3, [#allocation3]
    $region17: #{ctransformer_forward.5} parent=1 // pred_fallthru
      _
    // Predicated region
    $region18: #{ctransformer_forward.5} parent=1 // pred_check
      _
    $region19: #{ctransformer_forward.5} parent=1 // pred_check_branch
      %126 = sbr.rel (0) target = $region21
    $region20: #{ctransformer_forward.5} parent=1 // pred_region
      %127 = dma.done [#allocation3], 32
    $region21: #{ctransformer_forward.5} parent=1 // pred_fallthru
      _
    %128 = vsyncpa [#allocation3], 1

// kernel: ctransformer_forward.4
$region0: #{ctransformer_forward.4}
  #allocation0 [shape = 'u32[]', space=smem, size = 0x4, offset = 0x4, fixed_abs, tag = 'smem constant byte address 0x4 - core index']
  #allocation1 [shape = 'u32[144,128]{1,0:T(1,128)}', space=vmem, size = 0x12000, scoped, tag = 'internal scratch']
  %s0 = inlined_call_operand.vmem [shape: bf16[2,8,32], index: 0, kind: input, shape index: {}]
  %s1 = inlined_call_operand.vmem [shape: bf16[32,32], index: 1, kind: input, shape index: {}]
  %s2 = inlined_call_operand.vmem [shape: bf16[32,32], index: 2, kind: input, shape index: {}]
  %s3 = inlined_call_operand.vmem [shape: bf16[32,32], index: 3, kind: input, shape index: {}]
  %s4 = inlined_call_operand.vmem [shape: bf16[32,32], index: 4, kind: input, shape index: {}]
  %s5 = inlined_call_operand.vmem [shape: f32[1,32], index: 5, kind: input, shape index: {}]
  %s6 = inlined_call_operand.vmem [shape: f32[1,32], index: 6, kind: input, shape index: {}]
  %s7 = inlined_call_operand.vmem [shape: f32[1,32], index: 7, kind: input, shape index: {}]
  %s8 = inlined_call_operand.vmem [shape: bf16[32,128], index: 8, kind: input, shape index: {}]
  %s9 = inlined_call_operand.vmem [shape: f32[1,128], index: 9, kind: input, shape index: {}]
  %s10 = inlined_call_operand.vmem [shape: bf16[128,32], index: 10, kind: input, shape index: {}]
  %s11 = inlined_call_operand.vmem [shape: f32[1,32], index: 11, kind: input, shape index: {}]
  %s12 = inlined_call_operand.vmem [shape: f32[1,32], index: 12, kind: input, shape index: {}]
  %s13 = inlined_call_operand.vmem [shape: f32[1,32], index: 13, kind: input, shape index: {}]
  %s14 = inlined_call_operand.vmem [shape: f32[2,32], index: 14, kind: output, shape index: {}]
  %s15 = sld [smem:[#allocation0]]
  $region66: #{ctransformer_forward.4} parent=0
    _
  %s17 = ssub.s32 1, %s15
  %s18 = scalar_select 0, %s17, %s15
  // Predicated region
  $region2: #{ctransformer_forward.4} parent=0 // pred_check
    _
  $region3: #{ctransformer_forward.4} parent=0 // pred_check_branch
    %20 = sbr.rel (0) target = $region5
  $region4: #{ctransformer_forward.4} parent=0 // pred_region
    _
  $region5: #{ctransformer_forward.4} parent=0 // pred_fallthru
    _
  // Predicated region
  $region6: #{ctransformer_forward.4} parent=0 // pred_check
    _
  $region7: #{ctransformer_forward.4} parent=0 // pred_check_branch
    %22 = sbr.rel (0) target = $region9
  $region8: #{ctransformer_forward.4} parent=0 // pred_region
    _
  $region9: #{ctransformer_forward.4} parent=0 // pred_fallthru
    _
  // Predicated region
  $region10: #{ctransformer_forward.4} parent=0 // pred_check
    _
  $region11: #{ctransformer_forward.4} parent=0 // pred_check_branch
    %24 = sbr.rel (0) target = $region13
  $region12: #{ctransformer_forward.4} parent=0 // pred_region
    _
  $region13: #{ctransformer_forward.4} parent=0 // pred_fallthru
    _
  // Predicated region
  $region14: #{ctransformer_forward.4} parent=0 // pred_check
    _
  $region15: #{ctransformer_forward.4} parent=0 // pred_check_branch
    %26 = sbr.rel (0) target = $region17
  $region16: #{ctransformer_forward.4} parent=0 // pred_region
    _
  $region17: #{ctransformer_forward.4} parent=0 // pred_fallthru
    _
  // Predicated region
  $region18: #{ctransformer_forward.4} parent=0 // pred_check
    _
  $region19: #{ctransformer_forward.4} parent=0 // pred_check_branch
    %28 = sbr.rel (0) target = $region21
  $region20: #{ctransformer_forward.4} parent=0 // pred_region
    _
  $region21: #{ctransformer_forward.4} parent=0 // pred_fallthru
    _
  // Predicated region
  $region22: #{ctransformer_forward.4} parent=0 // pred_check
    _
  $region23: #{ctransformer_forward.4} parent=0 // pred_check_branch
    %30 = sbr.rel (0) target = $region25
  $region24: #{ctransformer_forward.4} parent=0 // pred_region
    _
  $region25: #{ctransformer_forward.4} parent=0 // pred_fallthru
    _
  // Predicated region
  $region26: #{ctransformer_forward.4} parent=0 // pred_check
    _
  $region27: #{ctransformer_forward.4} parent=0 // pred_check_branch
    %32 = sbr.rel (0) target = $region29
  $region28: #{ctransformer_forward.4} parent=0 // pred_region
    _
  $region29: #{ctransformer_forward.4} parent=0 // pred_fallthru
    _
  // Predicated region
  $region30: #{ctransformer_forward.4} parent=0 // pred_check
    _
  $region31: #{ctransformer_forward.4} parent=0 // pred_check_branch
    %34 = sbr.rel (0) target = $region33
  $region32: #{ctransformer_forward.4} parent=0 // pred_region
    _
  $region33: #{ctransformer_forward.4} parent=0 // pred_fallthru
    _
  // Predicated region
  $region34: #{ctransformer_forward.4} parent=0 // pred_check
    _
  $region35: #{ctransformer_forward.4} parent=0 // pred_check_branch
    %36 = sbr.rel (0) target = $region37
  $region36: #{ctransformer_forward.4} parent=0 // pred_region
    _
  $region37: #{ctransformer_forward.4} parent=0 // pred_fallthru
    _
  // Predicated region
  $region38: #{ctransformer_forward.4} parent=0 // pred_check
    _
  $region39: #{ctransformer_forward.4} parent=0 // pred_check_branch
    %38 = sbr.rel (0) target = $region41
  $region40: #{ctransformer_forward.4} parent=0 // pred_region
    _
  $region41: #{ctransformer_forward.4} parent=0 // pred_fallthru
    _
  // Predicated region
  $region42: #{ctransformer_forward.4} parent=0 // pred_check
    _
  $region43: #{ctransformer_forward.4} parent=0 // pred_check_branch
    %40 = sbr.rel (0) target = $region45
  $region44: #{ctransformer_forward.4} parent=0 // pred_region
    _
  $region45: #{ctransformer_forward.4} parent=0 // pred_fallthru
    _
  // Predicated region
  $region46: #{ctransformer_forward.4} parent=0 // pred_check
    _
  $region47: #{ctransformer_forward.4} parent=0 // pred_check_branch
    %42 = sbr.rel (0) target = $region49
  $region48: #{ctransformer_forward.4} parent=0 // pred_region
    _
  $region49: #{ctransformer_forward.4} parent=0 // pred_fallthru
    _
  // Predicated region
  $region50: #{ctransformer_forward.4} parent=0 // pred_check
    _
  $region51: #{ctransformer_forward.4} parent=0 // pred_check_branch
    %44 = sbr.rel (0) target = $region53
  $region52: #{ctransformer_forward.4} parent=0 // pred_region
    _
  $region53: #{ctransformer_forward.4} parent=0 // pred_fallthru
    _
  // Predicated region
  $region54: #{ctransformer_forward.4} parent=0 // pred_check
    _
  $region55: #{ctransformer_forward.4} parent=0 // pred_check_branch
    %46 = sbr.rel (0) target = $region57
  $region56: #{ctransformer_forward.4} parent=0 // pred_region
    _
  $region57: #{ctransformer_forward.4} parent=0 // pred_fallthru
    _
  %v48 = vld [vmem:[%s0] sm:$0xf]
  %v49 = vld [vmem:[%s0 + $0x4] sm:$0xf]
  %v50 = vld [vmem:[%s1] sm:$0xf]
  %v51 = vld [vmem:[%s1 + $0x4] sm:$0xf]
  %v52 = vld [vmem:[%s1 + $0x8] sm:$0xf]
  %v53 = vld [vmem:[%s1 + $0xc] sm:$0xf]
  %v56 = vunpack.c.l.b16 %v48
  %v57 = vunpack.c.l.b16 %v49
  %v58 = vpack.c.b16 %v57, %v56
  %v63 = vunpack.c.l.b16 %v50
  %v64 = vunpack.c.l.b16 %v51
  %v65 = vunpack.c.l.b16 %v52
  %v66 = vunpack.c.l.b16 %v53
  %v67 = vpack.c.b16 %v64, %v63
  %v68 = vpack.c.b16 %v66, %v65
  %vm71 = vcmask 261120
  %v73 = vsel %vm71, %v58, 0
  %75 = vmatprep.subr.bf16.mxu0 0
  %76 = vmatpush1.bf16.msra.mxu0 0
  %77 = vmatprep.subr.bf16.mxu0 0
  %78 = vmatpush1.bf16.msra.mxu0 0
  %79 = vmatprep.subr.bf16.mxu0 0
  %80 = vmatpush1.bf16.msra.mxu0 0
  %81 = vmatprep.subr.bf16.mxu0 0
  %82 = vmatpush1.bf16.msra.mxu0 0
  %83 = vmatprep.subr.bf16.mxu0 0
  %84 = vmatpush1.bf16.msra.mxu0 0
  %85 = vmatprep.subr.bf16.mxu0 0
  %86 = vmatpush1.bf16.msra.mxu0 0
  %87 = vmatprep.subr.bf16.mxu0 0
  %88 = vmatpush1.bf16.msra.mxu0 %v68
  %89 = vmatprep.subr.bf16.mxu0 0
  %90 = vmatpush1.bf16.msra.mxu0 %v67
  %91 = vmatprep.subr.bf16.mxu0 0
  %92 = vmatpush2.bf16.msra.mxu0 0
  %93 = vmatprep.subr.bf16.mxu0 0
  %94 = vmatpush2.bf16.msra.mxu0 0
  %95 = vmatprep.subr.bf16.mxu0 0
  %96 = vmatpush2.bf16.msra.mxu0 0
  %97 = vmatprep.subr.bf16.mxu0 0
  %98 = vmatpush2.bf16.msra.mxu0 0
  %99 = vmatprep.subr.bf16.mxu0 0
  %100 = vmatpush2.bf16.msra.mxu0 0
  %101 = vmatprep.subr.bf16.mxu0 0
  %102 = vmatpush2.bf16.msra.mxu0 0
  %103 = vmatprep.subr.bf16.mxu0 0
  %104 = vmatpush2.bf16.msra.mxu0 0
  %105 = vmatprep.subr.bf16.mxu0 0
  %106 = vmatpush2.bf16.msra.mxu0 0
  %107 = vmatprep.mubr.bf16.mxu0 0
  %108 = vmatmul.mubr.bf16.gmra.mxu0 %v73
  %v109 = vpop.f32.mrf.mxu0
  %v110 = vadd.f32 0.0, %v109
  %v111 = vpop.f32.mrf.mxu0
  %v112 = vpop.f32.mrf.mxu0
  %v113 = vadd.f32 0.0, %v112
  %v114 = vpop.f32.mrf.mxu0
  %115 = vdwg.mxu0
  %v116 = vld [vmem:[%s2] sm:$0xf]
  %v117 = vld [vmem:[%s2 + $0x4] sm:$0xf]
  %v118 = vld [vmem:[%s2 + $0x8] sm:$0xf]
  %v119 = vld [vmem:[%s2 + $0xc] sm:$0xf]
  %v124 = vunpack.c.l.b16 %v116
  %v125 = vunpack.c.l.b16 %v117
  %v126 = vunpack.c.l.b16 %v118
  %v127 = vunpack.c.l.b16 %v119
  %v128 = vpack.c.b16 %v125, %v124
  %v129 = vpack.c.b16 %v127, %v126
  %132 = vmatprep.subr.bf16.mxu0 0
  %133 = vmatpush1.bf16.msra.mxu0 0
  %134 = vmatprep.subr.bf16.mxu0 0
  %135 = vmatpush1.bf16.msra.mxu0 0
  %136 = vmatprep.subr.bf16.mxu0 0
  %137 = vmatpush1.bf16.msra.mxu0 0
  %138 = vmatprep.subr.bf16.mxu0 0
  %139 = vmatpush1.bf16.msra.mxu0 0
  %140 = vmatprep.subr.bf16.mxu0 0
  %141 = vmatpush1.bf16.msra.mxu0 0
  %142 = vmatprep.subr.bf16.mxu0 0
  %143 = vmatpush1.bf16.msra.mxu0 0
  %144 = vmatprep.subr.bf16.mxu0 0
  %145 = vmatpush1.bf16.msra.mxu0 %v129
  %146 = vmatprep.subr.bf16.mxu0 0
  %147 = vmatpush1.bf16.msra.mxu0 %v128
  %148 = vmatprep.subr.bf16.mxu0 0
  %149 = vmatpush2.bf16.msra.mxu0 0
  %150 = vmatprep.subr.bf16.mxu0 0
  %151 = vmatpush2.bf16.msra.mxu0 0
  %152 = vmatprep.subr.bf16.mxu0 0
  %153 = vmatpush2.bf16.msra.mxu0 0
  %154 = vmatprep.subr.bf16.mxu0 0
  %155 = vmatpush2.bf16.msra.mxu0 0
  %156 = vmatprep.subr.bf16.mxu0 0
  %157 = vmatpush2.bf16.msra.mxu0 0
  %158 = vmatprep.subr.bf16.mxu0 0
  %159 = vmatpush2.bf16.msra.mxu0 0
  %160 = vmatprep.subr.bf16.mxu0 0
  %161 = vmatpush2.bf16.msra.mxu0 0
  %162 = vmatprep.subr.bf16.mxu0 0
  %163 = vmatpush2.bf16.msra.mxu0 0
  %164 = vmatprep.mubr.bf16.mxu0 0
  %165 = vmatmul.mubr.bf16.gmra.mxu0 %v73
  %v166 = vpop.f32.mrf.mxu0
  %v167 = vadd.f32 0.0, %v166
  %v168 = vpop.f32.mrf.mxu0
  %v169 = vpop.f32.mrf.mxu0
  %v170 = vadd.f32 0.0, %v169
  %v171 = vpop.f32.mrf.mxu0
  %172 = vdwg.mxu0
  %v173 = vld [vmem:[%s3] sm:$0xf]
  %v174 = vld [vmem:[%s3 + $0x4] sm:$0xf]
  %v175 = vld [vmem:[%s3 + $0x8] sm:$0xf]
  %v176 = vld [vmem:[%s3 + $0xc] sm:$0xf]
  %v181 = vunpack.c.l.b16 %v173
  %v182 = vunpack.c.l.b16 %v174
  %v183 = vunpack.c.l.b16 %v175
  %v184 = vunpack.c.l.b16 %v176
  %v185 = vpack.c.b16 %v182, %v181
  %v186 = vpack.c.b16 %v184, %v183
  %189 = vmatprep.subr.bf16.mxu0 0
  %190 = vmatpush1.bf16.msra.mxu0 0
  %191 = vmatprep.subr.bf16.mxu0 0
  %192 = vmatpush1.bf16.msra.mxu0 0
  %193 = vmatprep.subr.bf16.mxu0 0
  %194 = vmatpush1.bf16.msra.mxu0 0
  %195 = vmatprep.subr.bf16.mxu0 0
  %196 = vmatpush1.bf16.msra.mxu0 0
  %197 = vmatprep.subr.bf16.mxu0 0
  %198 = vmatpush1.bf16.msra.mxu0 0
  %199 = vmatprep.subr.bf16.mxu0 0
  %200 = vmatpush1.bf16.msra.mxu0 0
  %201 = vmatprep.subr.bf16.mxu0 0
  %202 = vmatpush1.bf16.msra.mxu0 %v186
  %203 = vmatprep.subr.bf16.mxu0 0
  %204 = vmatpush1.bf16.msra.mxu0 %v185
  %205 = vmatprep.subr.bf16.mxu0 0
  %206 = vmatpush2.bf16.msra.mxu0 0
  %207 = vmatprep.subr.bf16.mxu0 0
  %208 = vmatpush2.bf16.msra.mxu0 0
  %209 = vmatprep.subr.bf16.mxu0 0
  %210 = vmatpush2.bf16.msra.mxu0 0
  %211 = vmatprep.subr.bf16.mxu0 0
  %212 = vmatpush2.bf16.msra.mxu0 0
  %213 = vmatprep.subr.bf16.mxu0 0
  %214 = vmatpush2.bf16.msra.mxu0 0
  %215 = vmatprep.subr.bf16.mxu0 0
  %216 = vmatpush2.bf16.msra.mxu0 0
  %217 = vmatprep.subr.bf16.mxu0 0
  %218 = vmatpush2.bf16.msra.mxu0 0
  %219 = vmatprep.subr.bf16.mxu0 0
  %220 = vmatpush2.bf16.msra.mxu0 0
  %221 = vmatprep.mubr.bf16.mxu0 0
  %222 = vmatmul.mubr.bf16.gmra.mxu0 %v73
  %v223 = vpop.f32.mrf.mxu0
  %v224 = vadd.f32 0.0, %v223
  %v225 = vpop.f32.mrf.mxu0
  %v226 = vpop.f32.mrf.mxu0
  %v227 = vadd.f32 0.0, %v226
  %v228 = vpop.f32.mrf.mxu0
  %229 = vdwg.mxu0
  %v230 = vpack.c.bf16 %v110, %v110
  %v231 = vpack.c.bf16 %v113, %v113
  %v232 = vpack.c.bf16 %v167, %v167
  %v233 = vpack.c.bf16 %v170, %v170
  %v234 = vpack.c.bf16 %v224, %v224
  %v235 = vpack.c.bf16 %v227, %v227
  %v236 = vld [vmem:[%s4] sm:$0xf]
  %v237 = vld [vmem:[%s4 + $0x4] sm:$0xf]
  %v238 = vld [vmem:[%s4 + $0x8] sm:$0xf]
  %v239 = vld [vmem:[%s4 + $0xc] sm:$0xf]
  %vm240 = vcmask 64512
  %v242 = vsel %vm240, %v230, 0
  %v245 = vsel %vm240, %v232, 0
  %247 = vmatprep.subr.bf16.mxu0 0
  %248 = vmatpush1.bf16.xpose.msra.mxu0 0
  %249 = vmatprep.subr.bf16.mxu0 0
  %250 = vmatpush1.bf16.xpose.msra.mxu0 0
  %251 = vmatprep.subr.bf16.mxu0 0
  %252 = vmatpush1.bf16.xpose.msra.mxu0 0
  %253 = vmatprep.subr.bf16.mxu0 0
  %254 = vmatpush1.bf16.xpose.msra.mxu0 0
  %255 = vmatprep.subr.bf16.mxu0 0
  %256 = vmatpush1.bf16.xpose.msra.mxu0 0
  %257 = vmatprep.subr.bf16.mxu0 0
  %258 = vmatpush1.bf16.xpose.msra.mxu0 0
  %259 = vmatprep.subr.bf16.mxu0 0
  %260 = vmatpush1.bf16.xpose.msra.mxu0 0
  %261 = vmatprep.subr.bf16.mxu0 0
  %262 = vmatpush1.bf16.xpose.msra.mxu0 %v245
  %263 = vmatprep.subr.bf16.mxu0 0
  %264 = vmatpush2.bf16.xpose.msra.mxu0 0
  %265 = vmatprep.subr.bf16.mxu0 0
  %266 = vmatpush2.bf16.xpose.msra.mxu0 0
  %267 = vmatprep.subr.bf16.mxu0 0
  %268 = vmatpush2.bf16.xpose.msra.mxu0 0
  %269 = vmatprep.subr.bf16.mxu0 0
  %270 = vmatpush2.bf16.xpose.msra.mxu0 0
  %271 = vmatprep.subr.bf16.mxu0 0
  %272 = vmatpush2.bf16.xpose.msra.mxu0 0
  %273 = vmatprep.subr.bf16.mxu0 0
  %274 = vmatpush2.bf16.xpose.msra.mxu0 0
  %275 = vmatprep.subr.bf16.mxu0 0
  %276 = vmatpush2.bf16.xpose.msra.mxu0 0
  %277 = vmatprep.subr.bf16.mxu0 0
  %278 = vmatpush2.bf16.xpose.msra.mxu0 0
  %279 = vmatprep.mubr.bf16.mxu0 0
  %280 = vmatmul.mubr.bf16.gmra.mxu0 %v242
  %v281 = vpop.f32.mrf.mxu0
  %v282 = vadd.f32 0.0, %v281
  %v283 = vpop.f32.mrf.mxu0
  %v284 = vpop.f32.mrf.mxu0
  %v285 = vpop.f32.mrf.mxu0
  %286 = vdwg.mxu0
  %v288 = vsel %vm240, %v231, 0
  %v291 = vsel %vm240, %v233, 0
  %293 = vmatprep.subr.bf16.mxu0 0
  %294 = vmatpush1.bf16.xpose.msra.mxu0 0
  %295 = vmatprep.subr.bf16.mxu0 0
  %296 = vmatpush1.bf16.xpose.msra.mxu0 0
  %297 = vmatprep.subr.bf16.mxu0 0
  %298 = vmatpush1.bf16.xpose.msra.mxu0 0
  %299 = vmatprep.subr.bf16.mxu0 0
  %300 = vmatpush1.bf16.xpose.msra.mxu0 0
  %301 = vmatprep.subr.bf16.mxu0 0
  %302 = vmatpush1.bf16.xpose.msra.mxu0 0
  %303 = vmatprep.subr.bf16.mxu0 0
  %304 = vmatpush1.bf16.xpose.msra.mxu0 0
  %305 = vmatprep.subr.bf16.mxu0 0
  %306 = vmatpush1.bf16.xpose.msra.mxu0 0
  %307 = vmatprep.subr.bf16.mxu0 0
  %308 = vmatpush1.bf16.xpose.msra.mxu0 %v291
  %309 = vmatprep.subr.bf16.mxu0 0
  %310 = vmatpush2.bf16.xpose.msra.mxu0 0
  %311 = vmatprep.subr.bf16.mxu0 0
  %312 = vmatpush2.bf16.xpose.msra.mxu0 0
  %313 = vmatprep.subr.bf16.mxu0 0
  %314 = vmatpush2.bf16.xpose.msra.mxu0 0
  %315 = vmatprep.subr.bf16.mxu0 0
  %316 = vmatpush2.bf16.xpose.msra.mxu0 0
  %317 = vmatprep.subr.bf16.mxu0 0
  %318 = vmatpush2.bf16.xpose.msra.mxu0 0
  %319 = vmatprep.subr.bf16.mxu0 0
  %320 = vmatpush2.bf16.xpose.msra.mxu0 0
  %321 = vmatprep.subr.bf16.mxu0 0
  %322 = vmatpush2.bf16.xpose.msra.mxu0 0
  %323 = vmatprep.subr.bf16.mxu0 0
  %324 = vmatpush2.bf16.xpose.msra.mxu0 0
  %325 = vmatprep.mubr.bf16.mxu0 0
  %326 = vmatmul.mubr.bf16.gmra.mxu0 %v288
  %v327 = vpop.f32.mrf.mxu0
  %v328 = vadd.f32 0.0, %v327
  %v329 = vpop.f32.mrf.mxu0
  %v330 = vpop.f32.mrf.mxu0
  %v331 = vpop.f32.mrf.mxu0
  %332 = vdwg.mxu0
  %v333 = vsel %vm240, %v282, -inf
  %334 = vmax.xlane.f32.xlu0 %v333
  %v335 = vpop.xlane.xlu0 %334
  %v336 = vsel %vm240, %v328, -inf
  %337 = vmax.xlane.f32.xlu0 %v336
  %v338 = vpop.xlane.xlu0 %337
  %v339 = vsub.f32 %v282, %v335
  %v340 = vsub.f32 %v328, %v338
  %v341 = vmul.f32 %v339, 1.442695
  %v342 = vpow.pop %v341
  %v343 = vmul.f32 %v340, 1.442695
  %v344 = vpow.pop %v343
  %v345 = vsel %vm240, %v342, 0.0
  %346 = vadd.xlane.f32.xlu0 %v345
  %v347 = vpop.xlane.xlu0 %346
  %v348 = vsel %vm240, %v344, 0.0
  %349 = vadd.xlane.f32.xlu0 %v348
  %v350 = vpop.xlane.xlu0 %349
  %v351 = vrcp.pop %v347
  %v352 = vrcp.pop %v350
  %v353 = vmul.f32 %v342, %v351
  %v354 = vmul.f32 %v344, %v352
  %v355 = vpack.c.bf16 %v353, %v353
  %v356 = vpack.c.bf16 %v354, %v354
  %v358 = vsel %vm240, %v355, 0
  %vm360 = vcmask 1043456
  %v362 = vsel %vm360, %v234, 0
  %364 = vmatprep.subr.bf16.mxu0 0
  %365 = vmatpush1.bf16.msra.mxu0 0
  %366 = vmatprep.subr.bf16.mxu0 0
  %367 = vmatpush1.bf16.msra.mxu0 0
  %368 = vmatprep.subr.bf16.mxu0 0
  %369 = vmatpush1.bf16.msra.mxu0 0
  %370 = vmatprep.subr.bf16.mxu0 0
  %371 = vmatpush1.bf16.msra.mxu0 0
  %372 = vmatprep.subr.bf16.mxu0 0
  %373 = vmatpush1.bf16.msra.mxu0 0
  %374 = vmatprep.subr.bf16.mxu0 0
  %375 = vmatpush1.bf16.msra.mxu0 0
  %376 = vmatprep.subr.bf16.mxu0 0
  %377 = vmatpush1.bf16.msra.mxu0 0
  %378 = vmatprep.subr.bf16.mxu0 0
  %379 = vmatpush1.bf16.msra.mxu0 %v362
  %380 = vmatprep.subr.bf16.mxu0 0
  %381 = vmatpush2.bf16.msra.mxu0 0
  %382 = vmatprep.subr.bf16.mxu0 0
  %383 = vmatpush2.bf16.msra.mxu0 0
  %384 = vmatprep.subr.bf16.mxu0 0
  %385 = vmatpush2.bf16.msra.mxu0 0
  %386 = vmatprep.subr.bf16.mxu0 0
  %387 = vmatpush2.bf16.msra.mxu0 0
  %388 = vmatprep.subr.bf16.mxu0 0
  %389 = vmatpush2.bf16.msra.mxu0 0
  %390 = vmatprep.subr.bf16.mxu0 0
  %391 = vmatpush2.bf16.msra.mxu0 0
  %392 = vmatprep.subr.bf16.mxu0 0
  %393 = vmatpush2.bf16.msra.mxu0 0
  %394 = vmatprep.subr.bf16.mxu0 0
  %395 = vmatpush2.bf16.msra.mxu0 0
  %396 = vmatprep.mubr.bf16.mxu0 0
  %397 = vmatmul.mubr.bf16.gmra.mxu0 %v358
  %v398 = vpop.f32.mrf.mxu0
  %v399 = vadd.f32 0.0, %v398
  %v400 = vpop.f32.mrf.mxu0
  %v401 = vpop.f32.mrf.mxu0
  %v402 = vpop.f32.mrf.mxu0
  %403 = vdwg.mxu0
  %v405 = vsel %vm240, %v356, 0
  %v408 = vsel %vm360, %v235, 0
  %410 = vmatprep.subr.bf16.mxu0 0
  %411 = vmatpush1.bf16.msra.mxu0 0
  %412 = vmatprep.subr.bf16.mxu0 0
  %413 = vmatpush1.bf16.msra.mxu0 0
  %414 = vmatprep.subr.bf16.mxu0 0
  %415 = vmatpush1.bf16.msra.mxu0 0
  %416 = vmatprep.subr.bf16.mxu0 0
  %417 = vmatpush1.bf16.msra.mxu0 0
  %418 = vmatprep.subr.bf16.mxu0 0
  %419 = vmatpush1.bf16.msra.mxu0 0
  %420 = vmatprep.subr.bf16.mxu0 0
  %421 = vmatpush1.bf16.msra.mxu0 0
  %422 = vmatprep.subr.bf16.mxu0 0
  %423 = vmatpush1.bf16.msra.mxu0 0
  %424 = vmatprep.subr.bf16.mxu0 0
  %425 = vmatpush1.bf16.msra.mxu0 %v408
  %426 = vmatprep.subr.bf16.mxu0 0
  %427 = vmatpush2.bf16.msra.mxu0 0
  %428 = vmatprep.subr.bf16.mxu0 0
  %429 = vmatpush2.bf16.msra.mxu0 0
  %430 = vmatprep.subr.bf16.mxu0 0
  %431 = vmatpush2.bf16.msra.mxu0 0
  %432 = vmatprep.subr.bf16.mxu0 0
  %433 = vmatpush2.bf16.msra.mxu0 0
  %434 = vmatprep.subr.bf16.mxu0 0
  %435 = vmatpush2.bf16.msra.mxu0 0
  %436 = vmatprep.subr.bf16.mxu0 0
  %437 = vmatpush2.bf16.msra.mxu0 0
  %438 = vmatprep.subr.bf16.mxu0 0
  %439 = vmatpush2.bf16.msra.mxu0 0
  %440 = vmatprep.subr.bf16.mxu0 0
  %441 = vmatpush2.bf16.msra.mxu0 0
  %442 = vmatprep.mubr.bf16.mxu0 0
  %443 = vmatmul.mubr.bf16.gmra.mxu0 %v405
  %v444 = vpop.f32.mrf.mxu0
  %v445 = vadd.f32 0.0, %v444
  %v446 = vpop.f32.mrf.mxu0
  %v447 = vpop.f32.mrf.mxu0
  %v448 = vpop.f32.mrf.mxu0
  %449 = vdwg.mxu0
  %v450 = vpack.c.bf16 %v445, %v399
  %452 = vrot.lane.b32.xlu0 %v230, 120
  %v453 = vpop.permute.xlu0 %452
  %455 = vrot.lane.b32.xlu0 %v232, 120
  %v456 = vpop.permute.xlu0 %455
  %v458 = vsel %vm240, %v453, 0
  %v461 = vsel %vm240, %v456, 0
  %463 = vmatprep.subr.bf16.mxu0 0
  %464 = vmatpush1.bf16.xpose.msra.mxu0 0
  %465 = vmatprep.subr.bf16.mxu0 0
  %466 = vmatpush1.bf16.xpose.msra.mxu0 0
  %467 = vmatprep.subr.bf16.mxu0 0
  %468 = vmatpush1.bf16.xpose.msra.mxu0 0
  %469 = vmatprep.subr.bf16.mxu0 0
  %470 = vmatpush1.bf16.xpose.msra.mxu0 0
  %471 = vmatprep.subr.bf16.mxu0 0
  %472 = vmatpush1.bf16.xpose.msra.mxu0 0
  %473 = vmatprep.subr.bf16.mxu0 0
  %474 = vmatpush1.bf16.xpose.msra.mxu0 0
  %475 = vmatprep.subr.bf16.mxu0 0
  %476 = vmatpush1.bf16.xpose.msra.mxu0 0
  %477 = vmatprep.subr.bf16.mxu0 0
  %478 = vmatpush1.bf16.xpose.msra.mxu0 %v461
  %479 = vmatprep.subr.bf16.mxu0 0
  %480 = vmatpush2.bf16.xpose.msra.mxu0 0
  %481 = vmatprep.subr.bf16.mxu0 0
  %482 = vmatpush2.bf16.xpose.msra.mxu0 0
  %483 = vmatprep.subr.bf16.mxu0 0
  %484 = vmatpush2.bf16.xpose.msra.mxu0 0
  %485 = vmatprep.subr.bf16.mxu0 0
  %486 = vmatpush2.bf16.xpose.msra.mxu0 0
  %487 = vmatprep.subr.bf16.mxu0 0
  %488 = vmatpush2.bf16.xpose.msra.mxu0 0
  %489 = vmatprep.subr.bf16.mxu0 0
  %490 = vmatpush2.bf16.xpose.msra.mxu0 0
  %491 = vmatprep.subr.bf16.mxu0 0
  %492 = vmatpush2.bf16.xpose.msra.mxu0 0
  %493 = vmatprep.subr.bf16.mxu0 0
  %494 = vmatpush2.bf16.xpose.msra.mxu0 0
  %495 = vmatprep.mubr.bf16.mxu0 0
  %496 = vmatmul.mubr.bf16.gmra.mxu0 %v458
  %v497 = vpop.f32.mrf.mxu0
  %v498 = vadd.f32 0.0, %v497
  %v499 = vpop.f32.mrf.mxu0
  %v500 = vpop.f32.mrf.mxu0
  %v501 = vpop.f32.mrf.mxu0
  %502 = vdwg.mxu0
  %504 = vrot.lane.b32.xlu0 %v231, 120
  %v505 = vpop.permute.xlu0 %504
  %507 = vrot.lane.b32.xlu0 %v233, 120
  %v508 = vpop.permute.xlu0 %507
  %v510 = vsel %vm240, %v505, 0
  %v513 = vsel %vm240, %v508, 0
  %515 = vmatprep.subr.bf16.mxu0 0
  %516 = vmatpush1.bf16.xpose.msra.mxu0 0
  %517 = vmatprep.subr.bf16.mxu0 0
  %518 = vmatpush1.bf16.xpose.msra.mxu0 0
  %519 = vmatprep.subr.bf16.mxu0 0
  %520 = vmatpush1.bf16.xpose.msra.mxu0 0
  %521 = vmatprep.subr.bf16.mxu0 0
  %522 = vmatpush1.bf16.xpose.msra.mxu0 0
  %523 = vmatprep.subr.bf16.mxu0 0
  %524 = vmatpush1.bf16.xpose.msra.mxu0 0
  %525 = vmatprep.subr.bf16.mxu0 0
  %526 = vmatpush1.bf16.xpose.msra.mxu0 0
  %527 = vmatprep.subr.bf16.mxu0 0
  %528 = vmatpush1.bf16.xpose.msra.mxu0 0
  %529 = vmatprep.subr.bf16.mxu0 0
  %530 = vmatpush1.bf16.xpose.msra.mxu0 %v513
  %531 = vmatprep.subr.bf16.mxu0 0
  %532 = vmatpush2.bf16.xpose.msra.mxu0 0
  %533 = vmatprep.subr.bf16.mxu0 0
  %534 = vmatpush2.bf16.xpose.msra.mxu0 0
  %535 = vmatprep.subr.bf16.mxu0 0
  %536 = vmatpush2.bf16.xpose.msra.mxu0 0
  %537 = vmatprep.subr.bf16.mxu0 0
  %538 = vmatpush2.bf16.xpose.msra.mxu0 0
  %539 = vmatprep.subr.bf16.mxu0 0
  %540 = vmatpush2.bf16.xpose.msra.mxu0 0
  %541 = vmatprep.subr.bf16.mxu0 0
  %542 = vmatpush2.bf16.xpose.msra.mxu0 0
  %543 = vmatprep.subr.bf16.mxu0 0
  %544 = vmatpush2.bf16.xpose.msra.mxu0 0
  %545 = vmatprep.subr.bf16.mxu0 0
  %546 = vmatpush2.bf16.xpose.msra.mxu0 0
  %547 = vmatprep.mubr.bf16.mxu0 0
  %548 = vmatmul.mubr.bf16.gmra.mxu0 %v510
  %v549 = vpop.f32.mrf.mxu0
  %v550 = vadd.f32 0.0, %v549
  %v551 = vpop.f32.mrf.mxu0
  %v552 = vpop.f32.mrf.mxu0
  %v553 = vpop.f32.mrf.mxu0
  %554 = vdwg.mxu0
  %v555 = vsel %vm240, %v498, -inf
  %556 = vmax.xlane.f32.xlu0 %v555
  %v557 = vpop.xlane.xlu0 %556
  %v558 = vsel %vm240, %v550, -inf
  %559 = vmax.xlane.f32.xlu0 %v558
  %v560 = vpop.xlane.xlu0 %559
  %v561 = vsub.f32 %v498, %v557
  %v562 = vsub.f32 %v550, %v560
  %v563 = vmul.f32 %v561, 1.442695
  %v564 = vpow.pop %v563
  %v565 = vmul.f32 %v562, 1.442695
  %v566 = vpow.pop %v565
  %v567 = vsel %vm240, %v564, 0.0
  %568 = vadd.xlane.f32.xlu0 %v567
  %v569 = vpop.xlane.xlu0 %568
  %v570 = vsel %vm240, %v566, 0.0
  %571 = vadd.xlane.f32.xlu0 %v570
  %v572 = vpop.xlane.xlu0 %571
  %v573 = vrcp.pop %v569
  %v574 = vrcp.pop %v572
  %v575 = vmul.f32 %v564, %v573
  %v576 = vmul.f32 %v566, %v574
  %v577 = vpack.c.bf16 %v575, %v575
  %v578 = vpack.c.bf16 %v576, %v576
  %580 = vrot.lane.b32.xlu0 %v234, 120
  %v581 = vpop.permute.xlu0 %580
  %v583 = vsel %vm240, %v577, 0
  %v586 = vsel %vm360, %v581, 0
  %588 = vmatprep.subr.bf16.mxu0 0
  %589 = vmatpush1.bf16.msra.mxu0 0
  %590 = vmatprep.subr.bf16.mxu0 0
  %591 = vmatpush1.bf16.msra.mxu0 0
  %592 = vmatprep.subr.bf16.mxu0 0
  %593 = vmatpush1.bf16.msra.mxu0 0
  %594 = vmatprep.subr.bf16.mxu0 0
  %595 = vmatpush1.bf16.msra.mxu0 0
  %596 = vmatprep.subr.bf16.mxu0 0
  %597 = vmatpush1.bf16.msra.mxu0 0
  %598 = vmatprep.subr.bf16.mxu0 0
  %599 = vmatpush1.bf16.msra.mxu0 0
  %600 = vmatprep.subr.bf16.mxu0 0
  %601 = vmatpush1.bf16.msra.mxu0 0
  %602 = vmatprep.subr.bf16.mxu0 0
  %603 = vmatpush1.bf16.msra.mxu0 %v586
  %604 = vmatprep.subr.bf16.mxu0 0
  %605 = vmatpush2.bf16.msra.mxu0 0
  %606 = vmatprep.subr.bf16.mxu0 0
  %607 = vmatpush2.bf16.msra.mxu0 0
  %608 = vmatprep.subr.bf16.mxu0 0
  %609 = vmatpush2.bf16.msra.mxu0 0
  %610 = vmatprep.subr.bf16.mxu0 0
  %611 = vmatpush2.bf16.msra.mxu0 0
  %612 = vmatprep.subr.bf16.mxu0 0
  %613 = vmatpush2.bf16.msra.mxu0 0
  %614 = vmatprep.subr.bf16.mxu0 0
  %615 = vmatpush2.bf16.msra.mxu0 0
  %616 = vmatprep.subr.bf16.mxu0 0
  %617 = vmatpush2.bf16.msra.mxu0 0
  %618 = vmatprep.subr.bf16.mxu0 0
  %619 = vmatpush2.bf16.msra.mxu0 0
  %620 = vmatprep.mubr.bf16.mxu0 0
  %621 = vmatmul.mubr.bf16.gmra.mxu0 %v583
  %v622 = vpop.f32.mrf.mxu0
  %v623 = vadd.f32 0.0, %v622
  %v624 = vpop.f32.mrf.mxu0
  %v625 = vpop.f32.mrf.mxu0
  %v626 = vpop.f32.mrf.mxu0
  %627 = vdwg.mxu0
  %629 = vrot.lane.b32.xlu0 %v235, 120
  %v630 = vpop.permute.xlu0 %629
  %v632 = vsel %vm240, %v578, 0
  %v635 = vsel %vm360, %v630, 0
  %637 = vmatprep.subr.bf16.mxu0 0
  %638 = vmatpush1.bf16.msra.mxu0 0
  %639 = vmatprep.subr.bf16.mxu0 0
  %640 = vmatpush1.bf16.msra.mxu0 0
  %641 = vmatprep.subr.bf16.mxu0 0
  %642 = vmatpush1.bf16.msra.mxu0 0
  %643 = vmatprep.subr.bf16.mxu0 0
  %644 = vmatpush1.bf16.msra.mxu0 0
  %645 = vmatprep.subr.bf16.mxu0 0
  %646 = vmatpush1.bf16.msra.mxu0 0
  %647 = vmatprep.subr.bf16.mxu0 0
  %648 = vmatpush1.bf16.msra.mxu0 0
  %649 = vmatprep.subr.bf16.mxu0 0
  %650 = vmatpush1.bf16.msra.mxu0 0
  %651 = vmatprep.subr.bf16.mxu0 0
  %652 = vmatpush1.bf16.msra.mxu0 %v635
  %653 = vmatprep.subr.bf16.mxu0 0
  %654 = vmatpush2.bf16.msra.mxu0 0
  %655 = vmatprep.subr.bf16.mxu0 0
  %656 = vmatpush2.bf16.msra.mxu0 0
  %657 = vmatprep.subr.bf16.mxu0 0
  %658 = vmatpush2.bf16.msra.mxu0 0
  %659 = vmatprep.subr.bf16.mxu0 0
  %660 = vmatpush2.bf16.msra.mxu0 0
  %661 = vmatprep.subr.bf16.mxu0 0
  %662 = vmatpush2.bf16.msra.mxu0 0
  %663 = vmatprep.subr.bf16.mxu0 0
  %664 = vmatpush2.bf16.msra.mxu0 0
  %665 = vmatprep.subr.bf16.mxu0 0
  %666 = vmatpush2.bf16.msra.mxu0 0
  %667 = vmatprep.subr.bf16.mxu0 0
  %668 = vmatpush2.bf16.msra.mxu0 0
  %669 = vmatprep.mubr.bf16.mxu0 0
  %670 = vmatmul.mubr.bf16.gmra.mxu0 %v632
  %v671 = vpop.f32.mrf.mxu0
  %v672 = vadd.f32 0.0, %v671
  %v673 = vpop.f32.mrf.mxu0
  %v674 = vpop.f32.mrf.mxu0
  %v675 = vpop.f32.mrf.mxu0
  %676 = vdwg.mxu0
  %v677 = vpack.c.bf16 %v672, %v623
  %v679 = vsel %vm240, %v677, 0
  %v682 = vsel %vm360, %v237, 0
  %684 = vmatprep.subr.bf16.mxu0 0
  %685 = vmatpush1.bf16.msra.mxu0 0
  %686 = vmatprep.subr.bf16.mxu0 0
  %687 = vmatpush1.bf16.msra.mxu0 0
  %688 = vmatprep.subr.bf16.mxu0 0
  %689 = vmatpush1.bf16.msra.mxu0 0
  %690 = vmatprep.subr.bf16.mxu0 0
  %691 = vmatpush1.bf16.msra.mxu0 0
  %692 = vmatprep.subr.bf16.mxu0 0
  %693 = vmatpush1.bf16.msra.mxu0 0
  %694 = vmatprep.subr.bf16.mxu0 0
  %695 = vmatpush1.bf16.msra.mxu0 0
  %696 = vmatprep.subr.bf16.mxu0 0
  %697 = vmatpush1.bf16.msra.mxu0 0
  %698 = vmatprep.subr.bf16.mxu0 0
  %699 = vmatpush1.bf16.msra.mxu0 %v682
  %700 = vmatprep.subr.bf16.mxu0 0
  %701 = vmatpush2.bf16.msra.mxu0 0
  %702 = vmatprep.subr.bf16.mxu0 0
  %703 = vmatpush2.bf16.msra.mxu0 0
  %704 = vmatprep.subr.bf16.mxu0 0
  %705 = vmatpush2.bf16.msra.mxu0 0
  %706 = vmatprep.subr.bf16.mxu0 0
  %707 = vmatpush2.bf16.msra.mxu0 0
  %708 = vmatprep.subr.bf16.mxu0 0
  %709 = vmatpush2.bf16.msra.mxu0 0
  %710 = vmatprep.subr.bf16.mxu0 0
  %711 = vmatpush2.bf16.msra.mxu0 0
  %712 = vmatprep.subr.bf16.mxu0 0
  %713 = vmatpush2.bf16.msra.mxu0 0
  %714 = vmatprep.subr.bf16.mxu0 0
  %715 = vmatpush2.bf16.msra.mxu0 0
  %716 = vmatprep.mubr.bf16.mxu0 0
  %717 = vmatmul.mubr.bf16.gmra.mxu0 %v679
  %v718 = vpop.f32.mrf.mxu0
  %v719 = vadd.f32 0.0, %v718
  %v720 = vpop.f32.mrf.mxu0
  %v721 = vpop.f32.mrf.mxu0
  %v722 = vadd.f32 0.0, %v721
  %v723 = vpop.f32.mrf.mxu0
  %724 = vdwg.mxu0
  %v726 = vsel %vm240, %v450, 0
  %v729 = vsel %vm360, %v236, 0
  %731 = vmatprep.subr.bf16.mxu0 0
  %732 = vmatpush1.bf16.msra.mxu0 0
  %733 = vmatprep.subr.bf16.mxu0 0
  %734 = vmatpush1.bf16.msra.mxu0 0
  %735 = vmatprep.subr.bf16.mxu0 0
  %736 = vmatpush1.bf16.msra.mxu0 0
  %737 = vmatprep.subr.bf16.mxu0 0
  %738 = vmatpush1.bf16.msra.mxu0 0
  %739 = vmatprep.subr.bf16.mxu0 0
  %740 = vmatpush1.bf16.msra.mxu0 0
  %741 = vmatprep.subr.bf16.mxu0 0
  %742 = vmatpush1.bf16.msra.mxu0 0
  %743 = vmatprep.subr.bf16.mxu0 0
  %744 = vmatpush1.bf16.msra.mxu0 0
  %745 = vmatprep.subr.bf16.mxu0 0
  %746 = vmatpush1.bf16.msra.mxu0 %v729
  %747 = vmatprep.subr.bf16.mxu0 0
  %748 = vmatpush2.bf16.msra.mxu0 0
  %749 = vmatprep.subr.bf16.mxu0 0
  %750 = vmatpush2.bf16.msra.mxu0 0
  %751 = vmatprep.subr.bf16.mxu0 0
  %752 = vmatpush2.bf16.msra.mxu0 0
  %753 = vmatprep.subr.bf16.mxu0 0
  %754 = vmatpush2.bf16.msra.mxu0 0
  %755 = vmatprep.subr.bf16.mxu0 0
  %756 = vmatpush2.bf16.msra.mxu0 0
  %757 = vmatprep.subr.bf16.mxu0 0
  %758 = vmatpush2.bf16.msra.mxu0 0
  %759 = vmatprep.subr.bf16.mxu0 0
  %760 = vmatpush2.bf16.msra.mxu0 0
  %761 = vmatprep.subr.bf16.mxu0 0
  %762 = vmatpush2.bf16.msra.mxu0 0
  %763 = vmatprep.mubr.bf16.mxu0 0
  %764 = vmatmul.mubr.bf16.gmra.mxu0 %v726
  %v765 = vpop.f32.mrf.mxu0
  %v766 = vadd.f32 %v719, %v765
  %v767 = vpop.f32.mrf.mxu0
  %v768 = vpop.f32.mrf.mxu0
  %v769 = vadd.f32 %v722, %v768
  %v770 = vpop.f32.mrf.mxu0
  %771 = vdwg.mxu0
  %772 = vrot.lane.b32.xlu0 %v230, 112
  %v773 = vpop.permute.xlu0 %772
  %774 = vrot.lane.b32.xlu0 %v232, 112
  %v775 = vpop.permute.xlu0 %774
  %v777 = vsel %vm240, %v773, 0
  %v780 = vsel %vm240, %v775, 0
  %782 = vmatprep.subr.bf16.mxu0 0
  %783 = vmatpush1.bf16.xpose.msra.mxu0 0
  %784 = vmatprep.subr.bf16.mxu0 0
  %785 = vmatpush1.bf16.xpose.msra.mxu0 0
  %786 = vmatprep.subr.bf16.mxu0 0
  %787 = vmatpush1.bf16.xpose.msra.mxu0 0
  %788 = vmatprep.subr.bf16.mxu0 0
  %789 = vmatpush1.bf16.xpose.msra.mxu0 0
  %790 = vmatprep.subr.bf16.mxu0 0
  %791 = vmatpush1.bf16.xpose.msra.mxu0 0
  %792 = vmatprep.subr.bf16.mxu0 0
  %793 = vmatpush1.bf16.xpose.msra.mxu0 0
  %794 = vmatprep.subr.bf16.mxu0 0
  %795 = vmatpush1.bf16.xpose.msra.mxu0 0
  %796 = vmatprep.subr.bf16.mxu0 0
  %797 = vmatpush1.bf16.xpose.msra.mxu0 %v780
  %798 = vmatprep.subr.bf16.mxu0 0
  %799 = vmatpush2.bf16.xpose.msra.mxu0 0
  %800 = vmatprep.subr.bf16.mxu0 0
  %801 = vmatpush2.bf16.xpose.msra.mxu0 0
  %802 = vmatprep.subr.bf16.mxu0 0
  %803 = vmatpush2.bf16.xpose.msra.mxu0 0
  %804 = vmatprep.subr.bf16.mxu0 0
  %805 = vmatpush2.bf16.xpose.msra.mxu0 0
  %806 = vmatprep.subr.bf16.mxu0 0
  %807 = vmatpush2.bf16.xpose.msra.mxu0 0
  %808 = vmatprep.subr.bf16.mxu0 0
  %809 = vmatpush2.bf16.xpose.msra.mxu0 0
  %810 = vmatprep.subr.bf16.mxu0 0
  %811 = vmatpush2.bf16.xpose.msra.mxu0 0
  %812 = vmatprep.subr.bf16.mxu0 0
  %813 = vmatpush2.bf16.xpose.msra.mxu0 0
  %814 = vmatprep.mubr.bf16.mxu0 0
  %815 = vmatmul.mubr.bf16.gmra.mxu0 %v777
  %v816 = vpop.f32.mrf.mxu0
  %v817 = vadd.f32 0.0, %v816
  %v818 = vpop.f32.mrf.mxu0
  %v819 = vpop.f32.mrf.mxu0
  %v820 = vpop.f32.mrf.mxu0
  %821 = vdwg.mxu0
  %822 = vrot.lane.b32.xlu0 %v231, 112
  %v823 = vpop.permute.xlu0 %822
  %824 = vrot.lane.b32.xlu0 %v233, 112
  %v825 = vpop.permute.xlu0 %824
  %v827 = vsel %vm240, %v823, 0
  %v830 = vsel %vm240, %v825, 0
  %832 = vmatprep.subr.bf16.mxu0 0
  %833 = vmatpush1.bf16.xpose.msra.mxu0 0
  %834 = vmatprep.subr.bf16.mxu0 0
  %835 = vmatpush1.bf16.xpose.msra.mxu0 0
  %836 = vmatprep.subr.bf16.mxu0 0
  %837 = vmatpush1.bf16.xpose.msra.mxu0 0
  %838 = vmatprep.subr.bf16.mxu0 0
  %839 = vmatpush1.bf16.xpose.msra.mxu0 0
  %840 = vmatprep.subr.bf16.mxu0 0
  %841 = vmatpush1.bf16.xpose.msra.mxu0 0
  %842 = vmatprep.subr.bf16.mxu0 0
  %843 = vmatpush1.bf16.xpose.msra.mxu0 0
  %844 = vmatprep.subr.bf16.mxu0 0
  %845 = vmatpush1.bf16.xpose.msra.mxu0 0
  %846 = vmatprep.subr.bf16.mxu0 0
  %847 = vmatpush1.bf16.xpose.msra.mxu0 %v830
  %848 = vmatprep.subr.bf16.mxu0 0
  %849 = vmatpush2.bf16.xpose.msra.mxu0 0
  %850 = vmatprep.subr.bf16.mxu0 0
  %851 = vmatpush2.bf16.xpose.msra.mxu0 0
  %852 = vmatprep.subr.bf16.mxu0 0
  %853 = vmatpush2.bf16.xpose.msra.mxu0 0
  %854 = vmatprep.subr.bf16.mxu0 0
  %855 = vmatpush2.bf16.xpose.msra.mxu0 0
  %856 = vmatprep.subr.bf16.mxu0 0
  %857 = vmatpush2.bf16.xpose.msra.mxu0 0
  %858 = vmatprep.subr.bf16.mxu0 0
  %859 = vmatpush2.bf16.xpose.msra.mxu0 0
  %860 = vmatprep.subr.bf16.mxu0 0
  %861 = vmatpush2.bf16.xpose.msra.mxu0 0
  %862 = vmatprep.subr.bf16.mxu0 0
  %863 = vmatpush2.bf16.xpose.msra.mxu0 0
  %864 = vmatprep.mubr.bf16.mxu0 0
  %865 = vmatmul.mubr.bf16.gmra.mxu0 %v827
  %v866 = vpop.f32.mrf.mxu0
  %v867 = vadd.f32 0.0, %v866
  %v868 = vpop.f32.mrf.mxu0
  %v869 = vpop.f32.mrf.mxu0
  %v870 = vpop.f32.mrf.mxu0
  %871 = vdwg.mxu0
  %v872 = vsel %vm240, %v817, -inf
  %873 = vmax.xlane.f32.xlu0 %v872
  %v874 = vpop.xlane.xlu0 %873
  %v875 = vsel %vm240, %v867, -inf
  %876 = vmax.xlane.f32.xlu0 %v875
  %v877 = vpop.xlane.xlu0 %876
  %v878 = vsub.f32 %v817, %v874
  %v879 = vsub.f32 %v867, %v877
  %v880 = vmul.f32 %v878, 1.442695
  %v881 = vpow.pop %v880
  %v882 = vmul.f32 %v879, 1.442695
  %v883 = vpow.pop %v882
  %v884 = vsel %vm240, %v881, 0.0
  %885 = vadd.xlane.f32.xlu0 %v884
  %v886 = vpop.xlane.xlu0 %885
  %v887 = vsel %vm240, %v883, 0.0
  %888 = vadd.xlane.f32.xlu0 %v887
  %v889 = vpop.xlane.xlu0 %888
  %v890 = vrcp.pop %v886
  %v891 = vrcp.pop %v889
  %v892 = vmul.f32 %v881, %v890
  %v893 = vmul.f32 %v883, %v891
  %v894 = vpack.c.bf16 %v892, %v892
  %v895 = vpack.c.bf16 %v893, %v893
  %896 = vrot.lane.b32.xlu0 %v234, 112
  %v897 = vpop.permute.xlu0 %896
  %v899 = vsel %vm240, %v894, 0
  %v902 = vsel %vm360, %v897, 0
  %904 = vmatprep.subr.bf16.mxu0 0
  %905 = vmatpush1.bf16.msra.mxu0 0
  %906 = vmatprep.subr.bf16.mxu0 0
  %907 = vmatpush1.bf16.msra.mxu0 0
  %908 = vmatprep.subr.bf16.mxu0 0
  %909 = vmatpush1.bf16.msra.mxu0 0
  %910 = vmatprep.subr.bf16.mxu0 0
  %911 = vmatpush1.bf16.msra.mxu0 0
  %912 = vmatprep.subr.bf16.mxu0 0
  %913 = vmatpush1.bf16.msra.mxu0 0
  %914 = vmatprep.subr.bf16.mxu0 0
  %915 = vmatpush1.bf16.msra.mxu0 0
  %916 = vmatprep.subr.bf16.mxu0 0
  %917 = vmatpush1.bf16.msra.mxu0 0
  %918 = vmatprep.subr.bf16.mxu0 0
  %919 = vmatpush1.bf16.msra.mxu0 %v902
  %920 = vmatprep.subr.bf16.mxu0 0
  %921 = vmatpush2.bf16.msra.mxu0 0
  %922 = vmatprep.subr.bf16.mxu0 0
  %923 = vmatpush2.bf16.msra.mxu0 0
  %924 = vmatprep.subr.bf16.mxu0 0
  %925 = vmatpush2.bf16.msra.mxu0 0
  %926 = vmatprep.subr.bf16.mxu0 0
  %927 = vmatpush2.bf16.msra.mxu0 0
  %928 = vmatprep.subr.bf16.mxu0 0
  %929 = vmatpush2.bf16.msra.mxu0 0
  %930 = vmatprep.subr.bf16.mxu0 0
  %931 = vmatpush2.bf16.msra.mxu0 0
  %932 = vmatprep.subr.bf16.mxu0 0
  %933 = vmatpush2.bf16.msra.mxu0 0
  %934 = vmatprep.subr.bf16.mxu0 0
  %935 = vmatpush2.bf16.msra.mxu0 0
  %936 = vmatprep.mubr.bf16.mxu0 0
  %937 = vmatmul.mubr.bf16.gmra.mxu0 %v899
  %v938 = vpop.f32.mrf.mxu0
  %v939 = vadd.f32 0.0, %v938
  %v940 = vpop.f32.mrf.mxu0
  %v941 = vpop.f32.mrf.mxu0
  %v942 = vpop.f32.mrf.mxu0
  %943 = vdwg.mxu0
  %944 = vrot.lane.b32.xlu0 %v235, 112
  %v945 = vpop.permute.xlu0 %944
  %v947 = vsel %vm240, %v895, 0
  %v950 = vsel %vm360, %v945, 0
  %952 = vmatprep.subr.bf16.mxu0 0
  %953 = vmatpush1.bf16.msra.mxu0 0
  %954 = vmatprep.subr.bf16.mxu0 0
  %955 = vmatpush1.bf16.msra.mxu0 0
  %956 = vmatprep.subr.bf16.mxu0 0
  %957 = vmatpush1.bf16.msra.mxu0 0
  %958 = vmatprep.subr.bf16.mxu0 0
  %959 = vmatpush1.bf16.msra.mxu0 0
  %960 = vmatprep.subr.bf16.mxu0 0
  %961 = vmatpush1.bf16.msra.mxu0 0
  %962 = vmatprep.subr.bf16.mxu0 0
  %963 = vmatpush1.bf16.msra.mxu0 0
  %964 = vmatprep.subr.bf16.mxu0 0
  %965 = vmatpush1.bf16.msra.mxu0 0
  %966 = vmatprep.subr.bf16.mxu0 0
  %967 = vmatpush1.bf16.msra.mxu0 %v950
  %968 = vmatprep.subr.bf16.mxu0 0
  %969 = vmatpush2.bf16.msra.mxu0 0
  %970 = vmatprep.subr.bf16.mxu0 0
  %971 = vmatpush2.bf16.msra.mxu0 0
  %972 = vmatprep.subr.bf16.mxu0 0
  %973 = vmatpush2.bf16.msra.mxu0 0
  %974 = vmatprep.subr.bf16.mxu0 0
  %975 = vmatpush2.bf16.msra.mxu0 0
  %976 = vmatprep.subr.bf16.mxu0 0
  %977 = vmatpush2.bf16.msra.mxu0 0
  %978 = vmatprep.subr.bf16.mxu0 0
  %979 = vmatpush2.bf16.msra.mxu0 0
  %980 = vmatprep.subr.bf16.mxu0 0
  %981 = vmatpush2.bf16.msra.mxu0 0
  %982 = vmatprep.subr.bf16.mxu0 0
  %983 = vmatpush2.bf16.msra.mxu0 0
  %984 = vmatprep.mubr.bf16.mxu0 0
  %985 = vmatmul.mubr.bf16.gmra.mxu0 %v947
  %v986 = vpop.f32.mrf.mxu0
  %v987 = vadd.f32 0.0, %v986
  %v988 = vpop.f32.mrf.mxu0
  %v989 = vpop.f32.mrf.mxu0
  %v990 = vpop.f32.mrf.mxu0
  %991 = vdwg.mxu0
  %v992 = vpack.c.bf16 %v987, %v939
  %v994 = vsel %vm240, %v992, 0
  %v997 = vsel %vm360, %v238, 0
  %999 = vmatprep.subr.bf16.mxu0 0
  %1000 = vmatpush1.bf16.msra.mxu0 0
  %1001 = vmatprep.subr.bf16.mxu0 0
  %1002 = vmatpush1.bf16.msra.mxu0 0
  %1003 = vmatprep.subr.bf16.mxu0 0
  %1004 = vmatpush1.bf16.msra.mxu0 0
  %1005 = vmatprep.subr.bf16.mxu0 0
  %1006 = vmatpush1.bf16.msra.mxu0 0
  %1007 = vmatprep.subr.bf16.mxu0 0
  %1008 = vmatpush1.bf16.msra.mxu0 0
  %1009 = vmatprep.subr.bf16.mxu0 0
  %1010 = vmatpush1.bf16.msra.mxu0 0
  %1011 = vmatprep.subr.bf16.mxu0 0
  %1012 = vmatpush1.bf16.msra.mxu0 0
  %1013 = vmatprep.subr.bf16.mxu0 0
  %1014 = vmatpush1.bf16.msra.mxu0 %v997
  %1015 = vmatprep.subr.bf16.mxu0 0
  %1016 = vmatpush2.bf16.msra.mxu0 0
  %1017 = vmatprep.subr.bf16.mxu0 0
  %1018 = vmatpush2.bf16.msra.mxu0 0
  %1019 = vmatprep.subr.bf16.mxu0 0
  %1020 = vmatpush2.bf16.msra.mxu0 0
  %1021 = vmatprep.subr.bf16.mxu0 0
  %1022 = vmatpush2.bf16.msra.mxu0 0
  %1023 = vmatprep.subr.bf16.mxu0 0
  %1024 = vmatpush2.bf16.msra.mxu0 0
  %1025 = vmatprep.subr.bf16.mxu0 0
  %1026 = vmatpush2.bf16.msra.mxu0 0
  %1027 = vmatprep.subr.bf16.mxu0 0
  %1028 = vmatpush2.bf16.msra.mxu0 0
  %1029 = vmatprep.subr.bf16.mxu0 0
  %1030 = vmatpush2.bf16.msra.mxu0 0
  %1031 = vmatprep.mubr.bf16.mxu0 0
  %1032 = vmatmul.mubr.bf16.gmra.mxu0 %v994
  %v1033 = vpop.f32.mrf.mxu0
  %v1034 = vadd.f32 0.0, %v1033
  %v1035 = vpop.f32.mrf.mxu0
  %v1036 = vpop.f32.mrf.mxu0
  %v1037 = vadd.f32 0.0, %v1036
  %v1038 = vpop.f32.mrf.mxu0
  %1039 = vdwg.mxu0
  %v1040 = vadd.f32 %v766, %v1034
  %v1041 = vadd.f32 %v769, %v1037
  %1042 = vrot.lane.b32.xlu0 %v230, 104
  %v1043 = vpop.permute.xlu0 %1042
  %1044 = vrot.lane.b32.xlu0 %v232, 104
  %v1045 = vpop.permute.xlu0 %1044
  %v1047 = vsel %vm240, %v1043, 0
  %v1050 = vsel %vm240, %v1045, 0
  %1052 = vmatprep.subr.bf16.mxu0 0
  %1053 = vmatpush1.bf16.xpose.msra.mxu0 0
  %1054 = vmatprep.subr.bf16.mxu0 0
  %1055 = vmatpush1.bf16.xpose.msra.mxu0 0
  %1056 = vmatprep.subr.bf16.mxu0 0
  %1057 = vmatpush1.bf16.xpose.msra.mxu0 0
  %1058 = vmatprep.subr.bf16.mxu0 0
  %1059 = vmatpush1.bf16.xpose.msra.mxu0 0
  %1060 = vmatprep.subr.bf16.mxu0 0
  %1061 = vmatpush1.bf16.xpose.msra.mxu0 0
  %1062 = vmatprep.subr.bf16.mxu0 0
  %1063 = vmatpush1.bf16.xpose.msra.mxu0 0
  %1064 = vmatprep.subr.bf16.mxu0 0
  %1065 = vmatpush1.bf16.xpose.msra.mxu0 0
  %1066 = vmatprep.subr.bf16.mxu0 0
  %1067 = vmatpush1.bf16.xpose.msra.mxu0 %v1050
  %1068 = vmatprep.subr.bf16.mxu0 0
  %1069 = vmatpush2.bf16.xpose.msra.mxu0 0
  %1070 = vmatprep.subr.bf16.mxu0 0
  %1071 = vmatpush2.bf16.xpose.msra.mxu0 0
  %1072 = vmatprep.subr.bf16.mxu0 0
  %1073 = vmatpush2.bf16.xpose.msra.mxu0 0
  %1074 = vmatprep.subr.bf16.mxu0 0
  %1075 = vmatpush2.bf16.xpose.msra.mxu0 0
  %1076 = vmatprep.subr.bf16.mxu0 0
  %1077 = vmatpush2.bf16.xpose.msra.mxu0 0
  %1078 = vmatprep.subr.bf16.mxu0 0
  %1079 = vmatpush2.bf16.xpose.msra.mxu0 0
  %1080 = vmatprep.subr.bf16.mxu0 0
  %1081 = vmatpush2.bf16.xpose.msra.mxu0 0
  %1082 = vmatprep.subr.bf16.mxu0 0
  %1083 = vmatpush2.bf16.xpose.msra.mxu0 0
  %1084 = vmatprep.mubr.bf16.mxu0 0
  %1085 = vmatmul.mubr.bf16.gmra.mxu0 %v1047
  %v1086 = vpop.f32.mrf.mxu0
  %v1087 = vadd.f32 0.0, %v1086
  %v1088 = vpop.f32.mrf.mxu0
  %v1089 = vpop.f32.mrf.mxu0
  %v1090 = vpop.f32.mrf.mxu0
  %1091 = vdwg.mxu0
  %1092 = vrot.lane.b32.xlu0 %v231, 104
  %v1093 = vpop.permute.xlu0 %1092
  %1094 = vrot.lane.b32.xlu0 %v233, 104
  %v1095 = vpop.permute.xlu0 %1094
  %v1097 = vsel %vm240, %v1093, 0
  %v1100 = vsel %vm240, %v1095, 0
  %1102 = vmatprep.subr.bf16.mxu0 0
  %1103 = vmatpush1.bf16.xpose.msra.mxu0 0
  %1104 = vmatprep.subr.bf16.mxu0 0
  %1105 = vmatpush1.bf16.xpose.msra.mxu0 0
  %1106 = vmatprep.subr.bf16.mxu0 0
  %1107 = vmatpush1.bf16.xpose.msra.mxu0 0
  %1108 = vmatprep.subr.bf16.mxu0 0
  %1109 = vmatpush1.bf16.xpose.msra.mxu0 0
  %1110 = vmatprep.subr.bf16.mxu0 0
  %1111 = vmatpush1.bf16.xpose.msra.mxu0 0
  %1112 = vmatprep.subr.bf16.mxu0 0
  %1113 = vmatpush1.bf16.xpose.msra.mxu0 0
  %1114 = vmatprep.subr.bf16.mxu0 0
  %1115 = vmatpush1.bf16.xpose.msra.mxu0 0
  %1116 = vmatprep.subr.bf16.mxu0 0
  %1117 = vmatpush1.bf16.xpose.msra.mxu0 %v1100
  %1118 = vmatprep.subr.bf16.mxu0 0
  %1119 = vmatpush2.bf16.xpose.msra.mxu0 0
  %1120 = vmatprep.subr.bf16.mxu0 0
  %1121 = vmatpush2.bf16.xpose.msra.mxu0 0
  %1122 = vmatprep.subr.bf16.mxu0 0
  %1123 = vmatpush2.bf16.xpose.msra.mxu0 0
  %1124 = vmatprep.subr.bf16.mxu0 0
  %1125 = vmatpush2.bf16.xpose.msra.mxu0 0
  %1126 = vmatprep.subr.bf16.mxu0 0
  %1127 = vmatpush2.bf16.xpose.msra.mxu0 0
  %1128 = vmatprep.subr.bf16.mxu0 0
  %1129 = vmatpush2.bf16.xpose.msra.mxu0 0
  %1130 = vmatprep.subr.bf16.mxu0 0
  %1131 = vmatpush2.bf16.xpose.msra.mxu0 0
  %1132 = vmatprep.subr.bf16.mxu0 0
  %1133 = vmatpush2.bf16.xpose.msra.mxu0 0
  %1134 = vmatprep.mubr.bf16.mxu0 0
  %1135 = vmatmul.mubr.bf16.gmra.mxu0 %v1097
  %v1136 = vpop.f32.mrf.mxu0
  %v1137 = vadd.f32 0.0, %v1136
  %v1138 = vpop.f32.mrf.mxu0
  %v1139 = vpop.f32.mrf.mxu0
  %v1140 = vpop.f32.mrf.mxu0
  %1141 = vdwg.mxu0
  %v1142 = vsel %vm240, %v1087, -inf
  %1143 = vmax.xlane.f32.xlu0 %v1142
  %v1144 = vpop.xlane.xlu0 %1143
  %v1145 = vsel %vm240, %v1137, -inf
  %1146 = vmax.xlane.f32.xlu0 %v1145
  %v1147 = vpop.xlane.xlu0 %1146
  %v1148 = vsub.f32 %v1087, %v1144
  %v1149 = vsub.f32 %v1137, %v1147
  %v1150 = vmul.f32 %v1148, 1.442695
  %v1151 = vpow.pop %v1150
  %v1152 = vmul.f32 %v1149, 1.442695
  %v1153 = vpow.pop %v1152
  %v1154 = vsel %vm240, %v1151, 0.0
  %1155 = vadd.xlane.f32.xlu0 %v1154
  %v1156 = vpop.xlane.xlu0 %1155
  %v1157 = vsel %vm240, %v1153, 0.0
  %1158 = vadd.xlane.f32.xlu0 %v1157
  %v1159 = vpop.xlane.xlu0 %1158
  %v1160 = vrcp.pop %v1156
  %v1161 = vrcp.pop %v1159
  %v1162 = vmul.f32 %v1151, %v1160
  %v1163 = vmul.f32 %v1153, %v1161
  %v1164 = vpack.c.bf16 %v1162, %v1162
  %v1165 = vpack.c.bf16 %v1163, %v1163
  %1166 = vrot.lane.b32.xlu0 %v234, 104
  %v1167 = vpop.permute.xlu0 %1166
  %v1169 = vsel %vm240, %v1164, 0
  %v1172 = vsel %vm360, %v1167, 0
  %1174 = vmatprep.subr.bf16.mxu0 0
  %1175 = vmatpush1.bf16.msra.mxu0 0
  %1176 = vmatprep.subr.bf16.mxu0 0
  %1177 = vmatpush1.bf16.msra.mxu0 0
  %1178 = vmatprep.subr.bf16.mxu0 0
  %1179 = vmatpush1.bf16.msra.mxu0 0
  %1180 = vmatprep.subr.bf16.mxu0 0
  %1181 = vmatpush1.bf16.msra.mxu0 0
  %1182 = vmatprep.subr.bf16.mxu0 0
  %1183 = vmatpush1.bf16.msra.mxu0 0
  %1184 = vmatprep.subr.bf16.mxu0 0
  %1185 = vmatpush1.bf16.msra.mxu0 0
  %1186 = vmatprep.subr.bf16.mxu0 0
  %1187 = vmatpush1.bf16.msra.mxu0 0
  %1188 = vmatprep.subr.bf16.mxu0 0
  %1189 = vmatpush1.bf16.msra.mxu0 %v1172
  %1190 = vmatprep.subr.bf16.mxu0 0
  %1191 = vmatpush2.bf16.msra.mxu0 0
  %1192 = vmatprep.subr.bf16.mxu0 0
  %1193 = vmatpush2.bf16.msra.mxu0 0
  %1194 = vmatprep.subr.bf16.mxu0 0
  %1195 = vmatpush2.bf16.msra.mxu0 0
  %1196 = vmatprep.subr.bf16.mxu0 0
  %1197 = vmatpush2.bf16.msra.mxu0 0
  %1198 = vmatprep.subr.bf16.mxu0 0
  %1199 = vmatpush2.bf16.msra.mxu0 0
  %1200 = vmatprep.subr.bf16.mxu0 0
  %1201 = vmatpush2.bf16.msra.mxu0 0
  %1202 = vmatprep.subr.bf16.mxu0 0
  %1203 = vmatpush2.bf16.msra.mxu0 0
  %1204 = vmatprep.subr.bf16.mxu0 0
  %1205 = vmatpush2.bf16.msra.mxu0 0
  %1206 = vmatprep.mubr.bf16.mxu0 0
  %1207 = vmatmul.mubr.bf16.gmra.mxu0 %v1169
  %v1208 = vpop.f32.mrf.mxu0
  %v1209 = vadd.f32 0.0, %v1208
  %v1210 = vpop.f32.mrf.mxu0
  %v1211 = vpop.f32.mrf.mxu0
  %v1212 = vpop.f32.mrf.mxu0
  %1213 = vdwg.mxu0
  %1214 = vrot.lane.b32.xlu0 %v235, 104
  %v1215 = vpop.permute.xlu0 %1214
  %v1217 = vsel %vm240, %v1165, 0
  %v1220 = vsel %vm360, %v1215, 0
  %1222 = vmatprep.subr.bf16.mxu0 0
  %1223 = vmatpush1.bf16.msra.mxu0 0
  %1224 = vmatprep.subr.bf16.mxu0 0
  %1225 = vmatpush1.bf16.msra.mxu0 0
  %1226 = vmatprep.subr.bf16.mxu0 0
  %1227 = vmatpush1.bf16.msra.mxu0 0
  %1228 = vmatprep.subr.bf16.mxu0 0
  %1229 = vmatpush1.bf16.msra.mxu0 0
  %1230 = vmatprep.subr.bf16.mxu0 0
  %1231 = vmatpush1.bf16.msra.mxu0 0
  %1232 = vmatprep.subr.bf16.mxu0 0
  %1233 = vmatpush1.bf16.msra.mxu0 0
  %1234 = vmatprep.subr.bf16.mxu0 0
  %1235 = vmatpush1.bf16.msra.mxu0 0
  %1236 = vmatprep.subr.bf16.mxu0 0
  %1237 = vmatpush1.bf16.msra.mxu0 %v1220
  %1238 = vmatprep.subr.bf16.mxu0 0
  %1239 = vmatpush2.bf16.msra.mxu0 0
  %1240 = vmatprep.subr.bf16.mxu0 0
  %1241 = vmatpush2.bf16.msra.mxu0 0
  %1242 = vmatprep.subr.bf16.mxu0 0
  %1243 = vmatpush2.bf16.msra.mxu0 0
  %1244 = vmatprep.subr.bf16.mxu0 0
  %1245 = vmatpush2.bf16.msra.mxu0 0
  %1246 = vmatprep.subr.bf16.mxu0 0
  %1247 = vmatpush2.bf16.msra.mxu0 0
  %1248 = vmatprep.subr.bf16.mxu0 0
  %1249 = vmatpush2.bf16.msra.mxu0 0
  %1250 = vmatprep.subr.bf16.mxu0 0
  %1251 = vmatpush2.bf16.msra.mxu0 0
  %1252 = vmatprep.subr.bf16.mxu0 0
  %1253 = vmatpush2.bf16.msra.mxu0 0
  %1254 = vmatprep.mubr.bf16.mxu0 0
  %1255 = vmatmul.mubr.bf16.gmra.mxu0 %v1217
  %v1256 = vpop.f32.mrf.mxu0
  %v1257 = vadd.f32 0.0, %v1256
  %v1258 = vpop.f32.mrf.mxu0
  %v1259 = vpop.f32.mrf.mxu0
  %v1260 = vpop.f32.mrf.mxu0
  %1261 = vdwg.mxu0
  %v1262 = vpack.c.bf16 %v1257, %v1209
  %v1264 = vsel %vm240, %v1262, 0
  %v1267 = vsel %vm360, %v239, 0
  %1269 = vmatprep.subr.bf16.mxu0 0
  %1270 = vmatpush1.bf16.msra.mxu0 0
  %1271 = vmatprep.subr.bf16.mxu0 0
  %1272 = vmatpush1.bf16.msra.mxu0 0
  %1273 = vmatprep.subr.bf16.mxu0 0
  %1274 = vmatpush1.bf16.msra.mxu0 0
  %1275 = vmatprep.subr.bf16.mxu0 0
  %1276 = vmatpush1.bf16.msra.mxu0 0
  %1277 = vmatprep.subr.bf16.mxu0 0
  %1278 = vmatpush1.bf16.msra.mxu0 0
  %1279 = vmatprep.subr.bf16.mxu0 0
  %1280 = vmatpush1.bf16.msra.mxu0 0
  %1281 = vmatprep.subr.bf16.mxu0 0
  %1282 = vmatpush1.bf16.msra.mxu0 0
  %1283 = vmatprep.subr.bf16.mxu0 0
  %1284 = vmatpush1.bf16.msra.mxu0 %v1267
  %1285 = vmatprep.subr.bf16.mxu0 0
  %1286 = vmatpush2.bf16.msra.mxu0 0
  %1287 = vmatprep.subr.bf16.mxu0 0
  %1288 = vmatpush2.bf16.msra.mxu0 0
  %1289 = vmatprep.subr.bf16.mxu0 0
  %1290 = vmatpush2.bf16.msra.mxu0 0
  %1291 = vmatprep.subr.bf16.mxu0 0
  %1292 = vmatpush2.bf16.msra.mxu0 0
  %1293 = vmatprep.subr.bf16.mxu0 0
  %1294 = vmatpush2.bf16.msra.mxu0 0
  %1295 = vmatprep.subr.bf16.mxu0 0
  %1296 = vmatpush2.bf16.msra.mxu0 0
  %1297 = vmatprep.subr.bf16.mxu0 0
  %1298 = vmatpush2.bf16.msra.mxu0 0
  %1299 = vmatprep.subr.bf16.mxu0 0
  %1300 = vmatpush2.bf16.msra.mxu0 0
  %1301 = vmatprep.mubr.bf16.mxu0 0
  %1302 = vmatmul.mubr.bf16.gmra.mxu0 %v1264
  %v1303 = vpop.f32.mrf.mxu0
  %v1304 = vadd.f32 0.0, %v1303
  %v1305 = vpop.f32.mrf.mxu0
  %v1306 = vpop.f32.mrf.mxu0
  %v1307 = vadd.f32 0.0, %v1306
  %v1308 = vpop.f32.mrf.mxu0
  %1309 = vdwg.mxu0
  %v1310 = vadd.f32 %v1040, %v1304
  %v1311 = vadd.f32 %v1041, %v1307
  %v1312 = vunpack.c.l.bf16 %v48
  %v1313 = vunpack.c.l.bf16 %v49
  %v1314 = vld [vmem:[%s5] sm:$0x1]
  %v1316 = vlaneseq
  %v1317 = vshrl.u32 %v1316, 7
  %v1318 = vsub.s32 0, %v1317
  %v1319 = vrot.slane %v1314, %v1318
  %v1321 = vadd.f32 %v1310, %v1319
  %v1322 = vadd.f32 %v1311, %v1319
  %v1323 = vadd.f32 %v1321, %v1312
  %v1324 = vadd.f32 %v1322, %v1313
  %v1325 = vld [vmem:[%s6] sm:$0x1]
  %v1326 = vld [vmem:[%s7] sm:$0x1]
  %v1327 = vsel %vm71, %v1323, 0.0
  %1328 = vadd.xlane.f32.xlu0 %v1327
  %v1329 = vpop.xlane.xlu0 %1328
  %v1330 = vsel %vm71, %v1324, 0.0
  %1331 = vadd.xlane.f32.xlu0 %v1330
  %v1332 = vpop.xlane.xlu0 %1331
  %v1333 = vrcp.pop 32.0
  %v1334 = vmul.f32 %v1329, %v1333
  %v1335 = vmul.f32 %v1332, %v1333
  %v1336 = vsub.f32 %v1323, %v1334
  %v1337 = vsub.f32 %v1324, %v1335
  %v1338 = vmul.f32 %v1336, %v1336
  %v1339 = vmul.f32 %v1337, %v1337
  %v1340 = vsel %vm71, %v1338, 0.0
  %1341 = vadd.xlane.f32.xlu0 %v1340
  %v1342 = vpop.xlane.xlu0 %1341
  %v1343 = vsel %vm71, %v1339, 0.0
  %1344 = vadd.xlane.f32.xlu0 %v1343
  %v1345 = vpop.xlane.xlu0 %1344
  %v1346 = vmul.f32 %v1342, %v1333
  %v1347 = vmul.f32 %v1345, %v1333
  %v1348 = vadd.f32 %v1346, 1e-05
  %v1349 = vadd.f32 %v1347, 1e-05
  %v1350 = vrsqrt.pop %v1348
  %v1351 = vrsqrt.pop %v1349
  %v1352 = vmul.f32 %v1336, %v1350
  %v1353 = vmul.f32 %v1337, %v1351
  %v1355 = vlaneseq
  %v1356 = vshrl.u32 %v1355, 7
  %v1357 = vsub.s32 0, %v1356
  %v1358 = vrot.slane %v1325, %v1357
  %v1360 = vmul.f32 %v1352, %v1358
  %v1361 = vmul.f32 %v1353, %v1358
  %v1363 = vlaneseq
  %v1364 = vshrl.u32 %v1363, 7
  %v1365 = vsub.s32 0, %v1364
  %v1366 = vrot.slane %v1326, %v1365
  %v1368 = vadd.f32 %v1360, %v1366
  %v1369 = vadd.f32 %v1361, %v1366
  %v1370 = vpack.c.bf16 %v1369, %v1368
  %v1371 = vld [vmem:[%s8] sm:$0xf]
  %v1372 = vld [vmem:[%s8 + $0x4] sm:$0xf]
  %v1373 = vld [vmem:[%s8 + $0x8] sm:$0xf]
  %v1374 = vld [vmem:[%s8 + $0xc] sm:$0xf]
  %v1375 = vld [vmem:[%s9] sm:$0x1]
  %v1377 = vlaneseq
  %v1378 = vshrl.u32 %v1377, 7
  %v1379 = vsub.s32 0, %v1378
  %v1380 = vrot.slane %v1375, %v1379
  %v1386 = vunpack.c.l.b16 %v1371
  %v1387 = vunpack.c.l.b16 %v1372
  %v1388 = vunpack.c.l.b16 %v1373
  %v1389 = vunpack.c.l.b16 %v1374
  %v1390 = vpack.c.b16 %v1387, %v1386
  %v1391 = vpack.c.b16 %v1389, %v1388
  %v1395 = vsel %vm71, %v1370, 0
  %1397 = vmatprep.subr.bf16.mxu0 0
  %1398 = vmatpush1.bf16.msra.mxu0 0
  %1399 = vmatprep.subr.bf16.mxu0 0
  %1400 = vmatpush1.bf16.msra.mxu0 0
  %1401 = vmatprep.subr.bf16.mxu0 0
  %1402 = vmatpush1.bf16.msra.mxu0 0
  %1403 = vmatprep.subr.bf16.mxu0 0
  %1404 = vmatpush1.bf16.msra.mxu0 0
  %1405 = vmatprep.subr.bf16.mxu0 0
  %1406 = vmatpush1.bf16.msra.mxu0 0
  %1407 = vmatprep.subr.bf16.mxu0 0
  %1408 = vmatpush1.bf16.msra.mxu0 0
  %1409 = vmatprep.subr.bf16.mxu0 0
  %1410 = vmatpush1.bf16.msra.mxu0 %v1391
  %1411 = vmatprep.subr.bf16.mxu0 0
  %1412 = vmatpush1.bf16.msra.mxu0 %v1390
  %1413 = vmatprep.subr.bf16.mxu0 0
  %1414 = vmatpush2.bf16.msra.mxu0 0
  %1415 = vmatprep.subr.bf16.mxu0 0
  %1416 = vmatpush2.bf16.msra.mxu0 0
  %1417 = vmatprep.subr.bf16.mxu0 0
  %1418 = vmatpush2.bf16.msra.mxu0 0
  %1419 = vmatprep.subr.bf16.mxu0 0
  %1420 = vmatpush2.bf16.msra.mxu0 0
  %1421 = vmatprep.subr.bf16.mxu0 0
  %1422 = vmatpush2.bf16.msra.mxu0 0
  %1423 = vmatprep.subr.bf16.mxu0 0
  %1424 = vmatpush2.bf16.msra.mxu0 0
  %1425 = vmatprep.subr.bf16.mxu0 0
  %1426 = vmatpush2.bf16.msra.mxu0 0
  %1427 = vmatprep.subr.bf16.mxu0 0
  %1428 = vmatpush2.bf16.msra.mxu0 0
  %1429 = vmatprep.mubr.bf16.mxu0 0
  %1430 = vmatmul.mubr.bf16.gmra.mxu0 %v1395
  %v1431 = vpop.f32.mrf.mxu0
  %v1432 = vadd.f32 %v1380, %v1431
  %v1433 = vpop.f32.mrf.mxu0
  %v1434 = vpop.f32.mrf.mxu0
  %v1435 = vadd.f32 %v1380, %v1434
  %v1436 = vpop.f32.mrf.mxu0
  %1437 = vdwg.mxu0
  %v1438 = vmax.f32 %v1432, 0.0
  %v1439 = vmax.f32 %v1435, 0.0
  %v1440 = vpack.c.bf16 %v1439, %v1438
  %v1441 = vld [vmem:[%s10] sm:$0xf]
  %v1442 = vld [vmem:[%s10 + $0x4] sm:$0xf]
  %v1443 = vld [vmem:[%s10 + $0x8] sm:$0xf]
  %v1444 = vld [vmem:[%s10 + $0xc] sm:$0xf]
  %v1445 = vld [vmem:[%s10 + $0x10] sm:$0xf]
  %v1446 = vld [vmem:[%s10 + $0x14] sm:$0xf]
  %v1447 = vld [vmem:[%s10 + $0x18] sm:$0xf]
  %v1448 = vld [vmem:[%s10 + $0x1c] sm:$0xf]
  %v1449 = vld [vmem:[%s10 + $0x20] sm:$0xf]
  %v1450 = vld [vmem:[%s10 + $0x24] sm:$0xf]
  %v1451 = vld [vmem:[%s10 + $0x28] sm:$0xf]
  %v1452 = vld [vmem:[%s10 + $0x2c] sm:$0xf]
  %v1453 = vld [vmem:[%s10 + $0x30] sm:$0xf]
  %v1454 = vld [vmem:[%s10 + $0x34] sm:$0xf]
  %v1455 = vld [vmem:[%s10 + $0x38] sm:$0xf]
  %v1456 = vld [vmem:[%s10 + $0x3c] sm:$0xf]
  %v1457 = vld [vmem:[%s11] sm:$0x1]
  %v1459 = vlaneseq
  %v1460 = vshrl.u32 %v1459, 7
  %v1461 = vsub.s32 0, %v1460
  %v1462 = vrot.slane %v1457, %v1461
  %v1480 = vunpack.c.l.b16 %v1441
  %v1481 = vunpack.c.l.b16 %v1442
  %v1482 = vunpack.c.l.b16 %v1443
  %v1483 = vunpack.c.l.b16 %v1444
  %v1484 = vunpack.c.l.b16 %v1445
  %v1485 = vunpack.c.l.b16 %v1446
  %v1486 = vunpack.c.l.b16 %v1447
  %v1487 = vunpack.c.l.b16 %v1448
  %v1488 = vunpack.c.l.b16 %v1449
  %v1489 = vunpack.c.l.b16 %v1450
  %v1490 = vunpack.c.l.b16 %v1451
  %v1491 = vunpack.c.l.b16 %v1452
  %v1492 = vunpack.c.l.b16 %v1453
  %v1493 = vunpack.c.l.b16 %v1454
  %v1494 = vunpack.c.l.b16 %v1455
  %v1495 = vunpack.c.l.b16 %v1456
  %v1496 = vpack.c.b16 %v1481, %v1480
  %v1497 = vpack.c.b16 %v1483, %v1482
  %v1498 = vpack.c.b16 %v1485, %v1484
  %v1499 = vpack.c.b16 %v1487, %v1486
  %v1500 = vpack.c.b16 %v1489, %v1488
  %v1501 = vpack.c.b16 %v1491, %v1490
  %v1502 = vpack.c.b16 %v1493, %v1492
  %v1503 = vpack.c.b16 %v1495, %v1494
  %1512 = vmatprep.subr.bf16.mxu0 0
  %1513 = vmatpush1.bf16.msra.mxu0 %v1503
  %1514 = vmatprep.subr.bf16.mxu0 0
  %1515 = vmatpush1.bf16.msra.mxu0 %v1502
  %1516 = vmatprep.subr.bf16.mxu0 0
  %1517 = vmatpush1.bf16.msra.mxu0 %v1501
  %1518 = vmatprep.subr.bf16.mxu0 0
  %1519 = vmatpush1.bf16.msra.mxu0 %v1500
  %1520 = vmatprep.subr.bf16.mxu0 0
  %1521 = vmatpush1.bf16.msra.mxu0 %v1499
  %1522 = vmatprep.subr.bf16.mxu0 0
  %1523 = vmatpush1.bf16.msra.mxu0 %v1498
  %1524 = vmatprep.subr.bf16.mxu0 0
  %1525 = vmatpush1.bf16.msra.mxu0 %v1497
  %1526 = vmatprep.subr.bf16.mxu0 0
  %1527 = vmatpush1.bf16.msra.mxu0 %v1496
  %1528 = vmatprep.subr.bf16.mxu0 0
  %1529 = vmatpush2.bf16.msra.mxu0 0
  %1530 = vmatprep.subr.bf16.mxu0 0
  %1531 = vmatpush2.bf16.msra.mxu0 0
  %1532 = vmatprep.subr.bf16.mxu0 0
  %1533 = vmatpush2.bf16.msra.mxu0 0
  %1534 = vmatprep.subr.bf16.mxu0 0
  %1535 = vmatpush2.bf16.msra.mxu0 0
  %1536 = vmatprep.subr.bf16.mxu0 0
  %1537 = vmatpush2.bf16.msra.mxu0 0
  %1538 = vmatprep.subr.bf16.mxu0 0
  %1539 = vmatpush2.bf16.msra.mxu0 0
  %1540 = vmatprep.subr.bf16.mxu0 0
  %1541 = vmatpush2.bf16.msra.mxu0 0
  %1542 = vmatprep.subr.bf16.mxu0 0
  %1543 = vmatpush2.bf16.msra.mxu0 0
  %1544 = vmatprep.mubr.bf16.mxu0 0
  %1545 = vmatmul.mubr.bf16.gmra.mxu0 %v1440
  %v1546 = vpop.f32.mrf.mxu0
  %v1547 = vadd.f32 %v1462, %v1546
  %v1548 = vpop.f32.mrf.mxu0
  %v1549 = vpop.f32.mrf.mxu0
  %v1550 = vadd.f32 %v1462, %v1549
  %v1551 = vpop.f32.mrf.mxu0
  %1552 = vdwg.mxu0
  %v1553 = vadd.f32 %v1547, %v1368
  %v1554 = vadd.f32 %v1550, %v1369
  %v1555 = vld [vmem:[%s12] sm:$0x1]
  %v1556 = vld [vmem:[%s13] sm:$0x1]
  %v1557 = vsel %vm71, %v1553, 0.0
  %1558 = vadd.xlane.f32.xlu0 %v1557
  %v1559 = vpop.xlane.xlu0 %1558
  %v1560 = vsel %vm71, %v1554, 0.0
  %1561 = vadd.xlane.f32.xlu0 %v1560
  %v1562 = vpop.xlane.xlu0 %1561
  %v1563 = vmul.f32 %v1559, %v1333
  %v1564 = vmul.f32 %v1562, %v1333
  %v1565 = vsub.f32 %v1553, %v1563
  %v1566 = vsub.f32 %v1554, %v1564
  %v1567 = vmul.f32 %v1565, %v1565
  %v1568 = vmul.f32 %v1566, %v1566
  %v1569 = vsel %vm71, %v1567, 0.0
  %1570 = vadd.xlane.f32.xlu0 %v1569
  %v1571 = vpop.xlane.xlu0 %1570
  %v1572 = vsel %vm71, %v1568, 0.0
  %1573 = vadd.xlane.f32.xlu0 %v1572
  %v1574 = vpop.xlane.xlu0 %1573
  %v1575 = vmul.f32 %v1571, %v1333
  %v1576 = vmul.f32 %v1574, %v1333
  %v1577 = vadd.f32 %v1575, 1e-05
  %v1578 = vadd.f32 %v1576, 1e-05
  %v1579 = vrsqrt.pop %v1577
  %v1580 = vrsqrt.pop %v1578
  %v1581 = vmul.f32 %v1565, %v1579
  %v1582 = vmul.f32 %v1566, %v1580
  %v1584 = vlaneseq
  %v1585 = vshrl.u32 %v1584, 7
  %v1586 = vsub.s32 0, %v1585
  %v1587 = vrot.slane %v1555, %v1586
  %v1589 = vmul.f32 %v1581, %v1587
  %v1590 = vmul.f32 %v1582, %v1587
  %v1592 = vlaneseq
  %v1593 = vshrl.u32 %v1592, 7
  %v1594 = vsub.s32 0, %v1593
  %v1595 = vrot.slane %v1556, %v1594
  %v1597 = vadd.f32 %v1589, %v1595
  %v1598 = vadd.f32 %v1590, %v1595
  %v1599 = vsel %vm71, %v1597, -inf
  %v1600 = vrot.slane %v1599, 4
  %v1601 = vmax.f32 %v1599, %v1600
  %v1602 = vrot.slane %v1601, 2
  %v1603 = vmax.f32 %v1601, %v1602
  %v1604 = vrot.slane %v1603, 1
  %v1605 = vmax.f32 %v1603, %v1604
  %v1606 = vsel %vm71, %v1598, -inf
  %v1607 = vrot.slane %v1606, 4
  %v1608 = vmax.f32 %v1606, %v1607
  %v1609 = vrot.slane %v1608, 2
  %v1610 = vmax.f32 %v1608, %v1609
  %v1611 = vrot.slane %v1610, 1
  %v1612 = vmax.f32 %v1610, %v1611
  %vm1615 = vcmask 1041409
  %v1616 = vsel %vm1615, %v1612, %v1605
  %vm1618 = vcmask 254976
  %1619 = vst.msk [vmem:[%s14] sm:$0x3] %vm1618, %v1616
  // Predicated region
  $region58: #{ctransformer_forward.4} parent=0 // pred_check
    _
  $region59: #{ctransformer_forward.4} parent=0 // pred_check_branch
    %1621 = sbr.rel (0) target = $region61
  $region60: #{ctransformer_forward.4} parent=0 // pred_region
    _
  $region61: #{ctransformer_forward.4} parent=0 // pred_fallthru
    _
  // Predicated region
  $region62: #{ctransformer_forward.4} parent=0 // pred_check
    _
  $region63: #{ctransformer_forward.4} parent=0 // pred_check_branch
    %1623 = sbr.rel (0) target = $region65
  $region64: #{ctransformer_forward.4} parent=0 // pred_region
    _
  $region65: #{ctransformer_forward.4} parent=0 // pred_fallthru
    _

// kernel: ctransformer_forward.3
$region0: #{ctransformer_forward.3}
  #allocation0 [shape = 'u32[]', space=smem, size = 0x4, offset = 0x4, fixed_abs, tag = 'smem constant byte address 0x4 - core index']
  #allocation1 [shape = 'u32[144,128]{1,0:T(1,128)}', space=vmem, size = 0x12000, scoped, tag = 'internal scratch']
  %s0 = inlined_call_operand.vmem [shape: bf16[2,8,32], index: 0, kind: input, shape index: {}]
  %s1 = inlined_call_operand.vmem [shape: bf16[8,32], index: 1, kind: input, shape index: {}]
  %s2 = inlined_call_operand.vmem [shape: bf16[32,32], index: 2, kind: input, shape index: {}]
  %s3 = inlined_call_operand.vmem [shape: bf16[32,32], index: 3, kind: input, shape index: {}]
  %s4 = inlined_call_operand.vmem [shape: bf16[32,32], index: 4, kind: input, shape index: {}]
  %s5 = inlined_call_operand.vmem [shape: bf16[32,32], index: 5, kind: input, shape index: {}]
  %s6 = inlined_call_operand.vmem [shape: f32[1,32], index: 6, kind: input, shape index: {}]
  %s7 = inlined_call_operand.vmem [shape: f32[1,32], index: 7, kind: input, shape index: {}]
  %s8 = inlined_call_operand.vmem [shape: f32[1,32], index: 8, kind: input, shape index: {}]
  %s9 = inlined_call_operand.vmem [shape: bf16[32,128], index: 9, kind: input, shape index: {}]
  %s10 = inlined_call_operand.vmem [shape: f32[1,128], index: 10, kind: input, shape index: {}]
  %s11 = inlined_call_operand.vmem [shape: bf16[128,32], index: 11, kind: input, shape index: {}]
  %s12 = inlined_call_operand.vmem [shape: f32[1,32], index: 12, kind: input, shape index: {}]
  %s13 = inlined_call_operand.vmem [shape: f32[1,32], index: 13, kind: input, shape index: {}]
  %s14 = inlined_call_operand.vmem [shape: f32[1,32], index: 14, kind: input, shape index: {}]
  %s15 = inlined_call_operand.vmem [shape: bf16[2,8,32], index: 15, kind: output, shape index: {}]
  %s16 = sld [smem:[#allocation0]]
  $region70: #{ctransformer_forward.3} parent=0
    _
  %s18 = ssub.s32 1, %s16
  %s19 = scalar_select 0, %s18, %s16
  // Predicated region
  $region2: #{ctransformer_forward.3} parent=0 // pred_check
    _
  $region3: #{ctransformer_forward.3} parent=0 // pred_check_branch
    %21 = sbr.rel (0) target = $region5
  $region4: #{ctransformer_forward.3} parent=0 // pred_region
    _
  $region5: #{ctransformer_forward.3} parent=0 // pred_fallthru
    _
  // Predicated region
  $region6: #{ctransformer_forward.3} parent=0 // pred_check
    _
  $region7: #{ctransformer_forward.3} parent=0 // pred_check_branch
    %23 = sbr.rel (0) target = $region9
  $region8: #{ctransformer_forward.3} parent=0 // pred_region
    _
  $region9: #{ctransformer_forward.3} parent=0 // pred_fallthru
    _
  // Predicated region
  $region10: #{ctransformer_forward.3} parent=0 // pred_check
    _
  $region11: #{ctransformer_forward.3} parent=0 // pred_check_branch
    %25 = sbr.rel (0) target = $region13
  $region12: #{ctransformer_forward.3} parent=0 // pred_region
    _
  $region13: #{ctransformer_forward.3} parent=0 // pred_fallthru
    _
  // Predicated region
  $region14: #{ctransformer_forward.3} parent=0 // pred_check
    _
  $region15: #{ctransformer_forward.3} parent=0 // pred_check_branch
    %27 = sbr.rel (0) target = $region17
  $region16: #{ctransformer_forward.3} parent=0 // pred_region
    _
  $region17: #{ctransformer_forward.3} parent=0 // pred_fallthru
    _
  // Predicated region
  $region18: #{ctransformer_forward.3} parent=0 // pred_check
    _
  $region19: #{ctransformer_forward.3} parent=0 // pred_check_branch
    %29 = sbr.rel (0) target = $region21
  $region20: #{ctransformer_forward.3} parent=0 // pred_region
    _
  $region21: #{ctransformer_forward.3} parent=0 // pred_fallthru
    _
  // Predicated region
  $region22: #{ctransformer_forward.3} parent=0 // pred_check
    _
  $region23: #{ctransformer_forward.3} parent=0 // pred_check_branch
    %31 = sbr.rel (0) target = $region25
  $region24: #{ctransformer_forward.3} parent=0 // pred_region
    _
  $region25: #{ctransformer_forward.3} parent=0 // pred_fallthru
    _
  // Predicated region
  $region26: #{ctransformer_forward.3} parent=0 // pred_check
    _
  $region27: #{ctransformer_forward.3} parent=0 // pred_check_branch
    %33 = sbr.rel (0) target = $region29
  $region28: #{ctransformer_forward.3} parent=0 // pred_region
    _
  $region29: #{ctransformer_forward.3} parent=0 // pred_fallthru
    _
  // Predicated region
  $region30: #{ctransformer_forward.3} parent=0 // pred_check
    _
  $region31: #{ctransformer_forward.3} parent=0 // pred_check_branch
    %35 = sbr.rel (0) target = $region33
  $region32: #{ctransformer_forward.3} parent=0 // pred_region
    _
  $region33: #{ctransformer_forward.3} parent=0 // pred_fallthru
    _
  // Predicated region
  $region34: #{ctransformer_forward.3} parent=0 // pred_check
    _
  $region35: #{ctransformer_forward.3} parent=0 // pred_check_branch
    %37 = sbr.rel (0) target = $region37
  $region36: #{ctransformer_forward.3} parent=0 // pred_region
    _
  $region37: #{ctransformer_forward.3} parent=0 // pred_fallthru
    _
  // Predicated region
  $region38: #{ctransformer_forward.3} parent=0 // pred_check
    _
  $region39: #{ctransformer_forward.3} parent=0 // pred_check_branch
    %39 = sbr.rel (0) target = $region41
  $region40: #{ctransformer_forward.3} parent=0 // pred_region
    _
  $region41: #{ctransformer_forward.3} parent=0 // pred_fallthru
    _
  // Predicated region
  $region42: #{ctransformer_forward.3} parent=0 // pred_check
    _
  $region43: #{ctransformer_forward.3} parent=0 // pred_check_branch
    %41 = sbr.rel (0) target = $region45
  $region44: #{ctransformer_forward.3} parent=0 // pred_region
    _
  $region45: #{ctransformer_forward.3} parent=0 // pred_fallthru
    _
  // Predicated region
  $region46: #{ctransformer_forward.3} parent=0 // pred_check
    _
  $region47: #{ctransformer_forward.3} parent=0 // pred_check_branch
    %43 = sbr.rel (0) target = $region49
  $region48: #{ctransformer_forward.3} parent=0 // pred_region
    _
  $region49: #{ctransformer_forward.3} parent=0 // pred_fallthru
    _
  // Predicated region
  $region50: #{ctransformer_forward.3} parent=0 // pred_check
    _
  $region51: #{ctransformer_forward.3} parent=0 // pred_check_branch
    %45 = sbr.rel (0) target = $region53
  $region52: #{ctransformer_forward.3} parent=0 // pred_region
    _
  $region53: #{ctransformer_forward.3} parent=0 // pred_fallthru
    _
  // Predicated region
  $region54: #{ctransformer_forward.3} parent=0 // pred_check
    _
  $region55: #{ctransformer_forward.3} parent=0 // pred_check_branch
    %47 = sbr.rel (0) target = $region57
  $region56: #{ctransformer_forward.3} parent=0 // pred_region
    _
  $region57: #{ctransformer_forward.3} parent=0 // pred_fallthru
    _
  // Predicated region
  $region58: #{ctransformer_forward.3} parent=0 // pred_check
    _
  $region59: #{ctransformer_forward.3} parent=0 // pred_check_branch
    %49 = sbr.rel (0) target = $region61
  $region60: #{ctransformer_forward.3} parent=0 // pred_region
    _
  $region61: #{ctransformer_forward.3} parent=0 // pred_fallthru
    _
  %v51 = vld [vmem:[%s0] sm:$0xf]
  %v52 = vld [vmem:[%s0 + $0x4] sm:$0xf]
  %v53 = vld [vmem:[%s1] sm:$0xf]
  %v54 = vadd.bf16 %v51, %v53
  %v55 = vadd.bf16 %v52, %v53
  %v56 = vld [vmem:[%s2] sm:$0xf]
  %v57 = vld [vmem:[%s2 + $0x4] sm:$0xf]
  %v58 = vld [vmem:[%s2 + $0x8] sm:$0xf]
  %v59 = vld [vmem:[%s2 + $0xc] sm:$0xf]
  %v62 = vunpack.c.l.b16 %v54
  %v63 = vunpack.c.l.b16 %v55
  %v64 = vpack.c.b16 %v63, %v62
  %v69 = vunpack.c.l.b16 %v56
  %v70 = vunpack.c.l.b16 %v57
  %v71 = vunpack.c.l.b16 %v58
  %v72 = vunpack.c.l.b16 %v59
  %v73 = vpack.c.b16 %v70, %v69
  %v74 = vpack.c.b16 %v72, %v71
  %vm77 = vcmask 261120
  %v79 = vsel %vm77, %v64, 0
  %81 = vmatprep.subr.bf16.mxu0 0
  %82 = vmatpush1.bf16.msra.mxu0 0
  %83 = vmatprep.subr.bf16.mxu0 0
  %84 = vmatpush1.bf16.msra.mxu0 0
  %85 = vmatprep.subr.bf16.mxu0 0
  %86 = vmatpush1.bf16.msra.mxu0 0
  %87 = vmatprep.subr.bf16.mxu0 0
  %88 = vmatpush1.bf16.msra.mxu0 0
  %89 = vmatprep.subr.bf16.mxu0 0
  %90 = vmatpush1.bf16.msra.mxu0 0
  %91 = vmatprep.subr.bf16.mxu0 0
  %92 = vmatpush1.bf16.msra.mxu0 0
  %93 = vmatprep.subr.bf16.mxu0 0
  %94 = vmatpush1.bf16.msra.mxu0 %v74
  %95 = vmatprep.subr.bf16.mxu0 0
  %96 = vmatpush1.bf16.msra.mxu0 %v73
  %97 = vmatprep.subr.bf16.mxu0 0
  %98 = vmatpush2.bf16.msra.mxu0 0
  %99 = vmatprep.subr.bf16.mxu0 0
  %100 = vmatpush2.bf16.msra.mxu0 0
  %101 = vmatprep.subr.bf16.mxu0 0
  %102 = vmatpush2.bf16.msra.mxu0 0
  %103 = vmatprep.subr.bf16.mxu0 0
  %104 = vmatpush2.bf16.msra.mxu0 0
  %105 = vmatprep.subr.bf16.mxu0 0
  %106 = vmatpush2.bf16.msra.mxu0 0
  %107 = vmatprep.subr.bf16.mxu0 0
  %108 = vmatpush2.bf16.msra.mxu0 0
  %109 = vmatprep.subr.bf16.mxu0 0
  %110 = vmatpush2.bf16.msra.mxu0 0
  %111 = vmatprep.subr.bf16.mxu0 0
  %112 = vmatpush2.bf16.msra.mxu0 0
  %113 = vmatprep.mubr.bf16.mxu0 0
  %114 = vmatmul.mubr.bf16.gmra.mxu0 %v79
  %v115 = vpop.f32.mrf.mxu0
  %v116 = vadd.f32 0.0, %v115
  %v117 = vpop.f32.mrf.mxu0
  %v118 = vpop.f32.mrf.mxu0
  %v119 = vadd.f32 0.0, %v118
  %v120 = vpop.f32.mrf.mxu0
  %121 = vdwg.mxu0
  %v122 = vld [vmem:[%s3] sm:$0xf]
  %v123 = vld [vmem:[%s3 + $0x4] sm:$0xf]
  %v124 = vld [vmem:[%s3 + $0x8] sm:$0xf]
  %v125 = vld [vmem:[%s3 + $0xc] sm:$0xf]
  %v130 = vunpack.c.l.b16 %v122
  %v131 = vunpack.c.l.b16 %v123
  %v132 = vunpack.c.l.b16 %v124
  %v133 = vunpack.c.l.b16 %v125
  %v134 = vpack.c.b16 %v131, %v130
  %v135 = vpack.c.b16 %v133, %v132
  %138 = vmatprep.subr.bf16.mxu0 0
  %139 = vmatpush1.bf16.msra.mxu0 0
  %140 = vmatprep.subr.bf16.mxu0 0
  %141 = vmatpush1.bf16.msra.mxu0 0
  %142 = vmatprep.subr.bf16.mxu0 0
  %143 = vmatpush1.bf16.msra.mxu0 0
  %144 = vmatprep.subr.bf16.mxu0 0
  %145 = vmatpush1.bf16.msra.mxu0 0
  %146 = vmatprep.subr.bf16.mxu0 0
  %147 = vmatpush1.bf16.msra.mxu0 0
  %148 = vmatprep.subr.bf16.mxu0 0
  %149 = vmatpush1.bf16.msra.mxu0 0
  %150 = vmatprep.subr.bf16.mxu0 0
  %151 = vmatpush1.bf16.msra.mxu0 %v135
  %152 = vmatprep.subr.bf16.mxu0 0
  %153 = vmatpush1.bf16.msra.mxu0 %v134
  %154 = vmatprep.subr.bf16.mxu0 0
  %155 = vmatpush2.bf16.msra.mxu0 0
  %156 = vmatprep.subr.bf16.mxu0 0
  %157 = vmatpush2.bf16.msra.mxu0 0
  %158 = vmatprep.subr.bf16.mxu0 0
  %159 = vmatpush2.bf16.msra.mxu0 0
  %160 = vmatprep.subr.bf16.mxu0 0
  %161 = vmatpush2.bf16.msra.mxu0 0
  %162 = vmatprep.subr.bf16.mxu0 0
  %163 = vmatpush2.bf16.msra.mxu0 0
  %164 = vmatprep.subr.bf16.mxu0 0
  %165 = vmatpush2.bf16.msra.mxu0 0
  %166 = vmatprep.subr.bf16.mxu0 0
  %167 = vmatpush2.bf16.msra.mxu0 0
  %168 = vmatprep.subr.bf16.mxu0 0
  %169 = vmatpush2.bf16.msra.mxu0 0
  %170 = vmatprep.mubr.bf16.mxu0 0
  %171 = vmatmul.mubr.bf16.gmra.mxu0 %v79
  %v172 = vpop.f32.mrf.mxu0
  %v173 = vadd.f32 0.0, %v172
  %v174 = vpop.f32.mrf.mxu0
  %v175 = vpop.f32.mrf.mxu0
  %v176 = vadd.f32 0.0, %v175
  %v177 = vpop.f32.mrf.mxu0
  %178 = vdwg.mxu0
  %v179 = vld [vmem:[%s4] sm:$0xf]
  %v180 = vld [vmem:[%s4 + $0x4] sm:$0xf]
  %v181 = vld [vmem:[%s4 + $0x8] sm:$0xf]
  %v182 = vld [vmem:[%s4 + $0xc] sm:$0xf]
  %v187 = vunpack.c.l.b16 %v179
  %v188 = vunpack.c.l.b16 %v180
  %v189 = vunpack.c.l.b16 %v181
  %v190 = vunpack.c.l.b16 %v182
  %v191 = vpack.c.b16 %v188, %v187
  %v192 = vpack.c.b16 %v190, %v189
  %195 = vmatprep.subr.bf16.mxu0 0
  %196 = vmatpush1.bf16.msra.mxu0 0
  %197 = vmatprep.subr.bf16.mxu0 0
  %198 = vmatpush1.bf16.msra.mxu0 0
  %199 = vmatprep.subr.bf16.mxu0 0
  %200 = vmatpush1.bf16.msra.mxu0 0
  %201 = vmatprep.subr.bf16.mxu0 0
  %202 = vmatpush1.bf16.msra.mxu0 0
  %203 = vmatprep.subr.bf16.mxu0 0
  %204 = vmatpush1.bf16.msra.mxu0 0
  %205 = vmatprep.subr.bf16.mxu0 0
  %206 = vmatpush1.bf16.msra.mxu0 0
  %207 = vmatprep.subr.bf16.mxu0 0
  %208 = vmatpush1.bf16.msra.mxu0 %v192
  %209 = vmatprep.subr.bf16.mxu0 0
  %210 = vmatpush1.bf16.msra.mxu0 %v191
  %211 = vmatprep.subr.bf16.mxu0 0
  %212 = vmatpush2.bf16.msra.mxu0 0
  %213 = vmatprep.subr.bf16.mxu0 0
  %214 = vmatpush2.bf16.msra.mxu0 0
  %215 = vmatprep.subr.bf16.mxu0 0
  %216 = vmatpush2.bf16.msra.mxu0 0
  %217 = vmatprep.subr.bf16.mxu0 0
  %218 = vmatpush2.bf16.msra.mxu0 0
  %219 = vmatprep.subr.bf16.mxu0 0
  %220 = vmatpush2.bf16.msra.mxu0 0
  %221 = vmatprep.subr.bf16.mxu0 0
  %222 = vmatpush2.bf16.msra.mxu0 0
  %223 = vmatprep.subr.bf16.mxu0 0
  %224 = vmatpush2.bf16.msra.mxu0 0
  %225 = vmatprep.subr.bf16.mxu0 0
  %226 = vmatpush2.bf16.msra.mxu0 0
  %227 = vmatprep.mubr.bf16.mxu0 0
  %228 = vmatmul.mubr.bf16.gmra.mxu0 %v79
  %v229 = vpop.f32.mrf.mxu0
  %v230 = vadd.f32 0.0, %v229
  %v231 = vpop.f32.mrf.mxu0
  %v232 = vpop.f32.mrf.mxu0
  %v233 = vadd.f32 0.0, %v232
  %v234 = vpop.f32.mrf.mxu0
  %235 = vdwg.mxu0
  %v236 = vpack.c.bf16 %v116, %v116
  %v237 = vpack.c.bf16 %v119, %v119
  %v238 = vpack.c.bf16 %v173, %v173
  %v239 = vpack.c.bf16 %v176, %v176
  %v240 = vpack.c.bf16 %v230, %v230
  %v241 = vpack.c.bf16 %v233, %v233
  %v242 = vld [vmem:[%s5] sm:$0xf]
  %v243 = vld [vmem:[%s5 + $0x4] sm:$0xf]
  %v244 = vld [vmem:[%s5 + $0x8] sm:$0xf]
  %v245 = vld [vmem:[%s5 + $0xc] sm:$0xf]
  %vm246 = vcmask 64512
  %v248 = vsel %vm246, %v236, 0
  %v251 = vsel %vm246, %v238, 0
  %253 = vmatprep.subr.bf16.mxu0 0
  %254 = vmatpush1.bf16.xpose.msra.mxu0 0
  %255 = vmatprep.subr.bf16.mxu0 0
  %256 = vmatpush1.bf16.xpose.msra.mxu0 0
  %257 = vmatprep.subr.bf16.mxu0 0
  %258 = vmatpush1.bf16.xpose.msra.mxu0 0
  %259 = vmatprep.subr.bf16.mxu0 0
  %260 = vmatpush1.bf16.xpose.msra.mxu0 0
  %261 = vmatprep.subr.bf16.mxu0 0
  %262 = vmatpush1.bf16.xpose.msra.mxu0 0
  %263 = vmatprep.subr.bf16.mxu0 0
  %264 = vmatpush1.bf16.xpose.msra.mxu0 0
  %265 = vmatprep.subr.bf16.mxu0 0
  %266 = vmatpush1.bf16.xpose.msra.mxu0 0
  %267 = vmatprep.subr.bf16.mxu0 0
  %268 = vmatpush1.bf16.xpose.msra.mxu0 %v251
  %269 = vmatprep.subr.bf16.mxu0 0
  %270 = vmatpush2.bf16.xpose.msra.mxu0 0
  %271 = vmatprep.subr.bf16.mxu0 0
  %272 = vmatpush2.bf16.xpose.msra.mxu0 0
  %273 = vmatprep.subr.bf16.mxu0 0
  %274 = vmatpush2.bf16.xpose.msra.mxu0 0
  %275 = vmatprep.subr.bf16.mxu0 0
  %276 = vmatpush2.bf16.xpose.msra.mxu0 0
  %277 = vmatprep.subr.bf16.mxu0 0
  %278 = vmatpush2.bf16.xpose.msra.mxu0 0
  %279 = vmatprep.subr.bf16.mxu0 0
  %280 = vmatpush2.bf16.xpose.msra.mxu0 0
  %281 = vmatprep.subr.bf16.mxu0 0
  %282 = vmatpush2.bf16.xpose.msra.mxu0 0
  %283 = vmatprep.subr.bf16.mxu0 0
  %284 = vmatpush2.bf16.xpose.msra.mxu0 0
  %285 = vmatprep.mubr.bf16.mxu0 0
  %286 = vmatmul.mubr.bf16.gmra.mxu0 %v248
  %v287 = vpop.f32.mrf.mxu0
  %v288 = vadd.f32 0.0, %v287
  %v289 = vpop.f32.mrf.mxu0
  %v290 = vpop.f32.mrf.mxu0
  %v291 = vpop.f32.mrf.mxu0
  %292 = vdwg.mxu0
  %v294 = vsel %vm246, %v237, 0
  %v297 = vsel %vm246, %v239, 0
  %299 = vmatprep.subr.bf16.mxu0 0
  %300 = vmatpush1.bf16.xpose.msra.mxu0 0
  %301 = vmatprep.subr.bf16.mxu0 0
  %302 = vmatpush1.bf16.xpose.msra.mxu0 0
  %303 = vmatprep.subr.bf16.mxu0 0
  %304 = vmatpush1.bf16.xpose.msra.mxu0 0
  %305 = vmatprep.subr.bf16.mxu0 0
  %306 = vmatpush1.bf16.xpose.msra.mxu0 0
  %307 = vmatprep.subr.bf16.mxu0 0
  %308 = vmatpush1.bf16.xpose.msra.mxu0 0
  %309 = vmatprep.subr.bf16.mxu0 0
  %310 = vmatpush1.bf16.xpose.msra.mxu0 0
  %311 = vmatprep.subr.bf16.mxu0 0
  %312 = vmatpush1.bf16.xpose.msra.mxu0 0
  %313 = vmatprep.subr.bf16.mxu0 0
  %314 = vmatpush1.bf16.xpose.msra.mxu0 %v297
  %315 = vmatprep.subr.bf16.mxu0 0
  %316 = vmatpush2.bf16.xpose.msra.mxu0 0
  %317 = vmatprep.subr.bf16.mxu0 0
  %318 = vmatpush2.bf16.xpose.msra.mxu0 0
  %319 = vmatprep.subr.bf16.mxu0 0
  %320 = vmatpush2.bf16.xpose.msra.mxu0 0
  %321 = vmatprep.subr.bf16.mxu0 0
  %322 = vmatpush2.bf16.xpose.msra.mxu0 0
  %323 = vmatprep.subr.bf16.mxu0 0
  %324 = vmatpush2.bf16.xpose.msra.mxu0 0
  %325 = vmatprep.subr.bf16.mxu0 0
  %326 = vmatpush2.bf16.xpose.msra.mxu0 0
  %327 = vmatprep.subr.bf16.mxu0 0
  %328 = vmatpush2.bf16.xpose.msra.mxu0 0
  %329 = vmatprep.subr.bf16.mxu0 0
  %330 = vmatpush2.bf16.xpose.msra.mxu0 0
  %331 = vmatprep.mubr.bf16.mxu0 0
  %332 = vmatmul.mubr.bf16.gmra.mxu0 %v294
  %v333 = vpop.f32.mrf.mxu0
  %v334 = vadd.f32 0.0, %v333
  %v335 = vpop.f32.mrf.mxu0
  %v336 = vpop.f32.mrf.mxu0
  %v337 = vpop.f32.mrf.mxu0
  %338 = vdwg.mxu0
  %v339 = vsel %vm246, %v288, -inf
  %340 = vmax.xlane.f32.xlu0 %v339
  %v341 = vpop.xlane.xlu0 %340
  %v342 = vsel %vm246, %v334, -inf
  %343 = vmax.xlane.f32.xlu0 %v342
  %v344 = vpop.xlane.xlu0 %343
  %v345 = vsub.f32 %v288, %v341
  %v346 = vsub.f32 %v334, %v344
  %v347 = vmul.f32 %v345, 1.442695
  %v348 = vpow.pop %v347
  %v349 = vmul.f32 %v346, 1.442695
  %v350 = vpow.pop %v349
  %v351 = vsel %vm246, %v348, 0.0
  %352 = vadd.xlane.f32.xlu0 %v351
  %v353 = vpop.xlane.xlu0 %352
  %v354 = vsel %vm246, %v350, 0.0
  %355 = vadd.xlane.f32.xlu0 %v354
  %v356 = vpop.xlane.xlu0 %355
  %v357 = vrcp.pop %v353
  %v358 = vrcp.pop %v356
  %v359 = vmul.f32 %v348, %v357
  %v360 = vmul.f32 %v350, %v358
  %v361 = vpack.c.bf16 %v359, %v359
  %v362 = vpack.c.bf16 %v360, %v360
  %v364 = vsel %vm246, %v361, 0
  %vm366 = vcmask 1043456
  %v368 = vsel %vm366, %v240, 0
  %370 = vmatprep.subr.bf16.mxu0 0
  %371 = vmatpush1.bf16.msra.mxu0 0
  %372 = vmatprep.subr.bf16.mxu0 0
  %373 = vmatpush1.bf16.msra.mxu0 0
  %374 = vmatprep.subr.bf16.mxu0 0
  %375 = vmatpush1.bf16.msra.mxu0 0
  %376 = vmatprep.subr.bf16.mxu0 0
  %377 = vmatpush1.bf16.msra.mxu0 0
  %378 = vmatprep.subr.bf16.mxu0 0
  %379 = vmatpush1.bf16.msra.mxu0 0
  %380 = vmatprep.subr.bf16.mxu0 0
  %381 = vmatpush1.bf16.msra.mxu0 0
  %382 = vmatprep.subr.bf16.mxu0 0
  %383 = vmatpush1.bf16.msra.mxu0 0
  %384 = vmatprep.subr.bf16.mxu0 0
  %385 = vmatpush1.bf16.msra.mxu0 %v368
  %386 = vmatprep.subr.bf16.mxu0 0
  %387 = vmatpush2.bf16.msra.mxu0 0
  %388 = vmatprep.subr.bf16.mxu0 0
  %389 = vmatpush2.bf16.msra.mxu0 0
  %390 = vmatprep.subr.bf16.mxu0 0
  %391 = vmatpush2.bf16.msra.mxu0 0
  %392 = vmatprep.subr.bf16.mxu0 0
  %393 = vmatpush2.bf16.msra.mxu0 0
  %394 = vmatprep.subr.bf16.mxu0 0
  %395 = vmatpush2.bf16.msra.mxu0 0
  %396 = vmatprep.subr.bf16.mxu0 0
  %397 = vmatpush2.bf16.msra.mxu0 0
  %398 = vmatprep.subr.bf16.mxu0 0
  %399 = vmatpush2.bf16.msra.mxu0 0
  %400 = vmatprep.subr.bf16.mxu0 0
  %401 = vmatpush2.bf16.msra.mxu0 0
  %402 = vmatprep.mubr.bf16.mxu0 0
  %403 = vmatmul.mubr.bf16.gmra.mxu0 %v364
  %v404 = vpop.f32.mrf.mxu0
  %v405 = vadd.f32 0.0, %v404
  %v406 = vpop.f32.mrf.mxu0
  %v407 = vpop.f32.mrf.mxu0
  %v408 = vpop.f32.mrf.mxu0
  %409 = vdwg.mxu0
  %v411 = vsel %vm246, %v362, 0
  %v414 = vsel %vm366, %v241, 0
  %416 = vmatprep.subr.bf16.mxu0 0
  %417 = vmatpush1.bf16.msra.mxu0 0
  %418 = vmatprep.subr.bf16.mxu0 0
  %419 = vmatpush1.bf16.msra.mxu0 0
  %420 = vmatprep.subr.bf16.mxu0 0
  %421 = vmatpush1.bf16.msra.mxu0 0
  %422 = vmatprep.subr.bf16.mxu0 0
  %423 = vmatpush1.bf16.msra.mxu0 0
  %424 = vmatprep.subr.bf16.mxu0 0
  %425 = vmatpush1.bf16.msra.mxu0 0
  %426 = vmatprep.subr.bf16.mxu0 0
  %427 = vmatpush1.bf16.msra.mxu0 0
  %428 = vmatprep.subr.bf16.mxu0 0
  %429 = vmatpush1.bf16.msra.mxu0 0
  %430 = vmatprep.subr.bf16.mxu0 0
  %431 = vmatpush1.bf16.msra.mxu0 %v414
  %432 = vmatprep.subr.bf16.mxu0 0
  %433 = vmatpush2.bf16.msra.mxu0 0
  %434 = vmatprep.subr.bf16.mxu0 0
  %435 = vmatpush2.bf16.msra.mxu0 0
  %436 = vmatprep.subr.bf16.mxu0 0
  %437 = vmatpush2.bf16.msra.mxu0 0
  %438 = vmatprep.subr.bf16.mxu0 0
  %439 = vmatpush2.bf16.msra.mxu0 0
  %440 = vmatprep.subr.bf16.mxu0 0
  %441 = vmatpush2.bf16.msra.mxu0 0
  %442 = vmatprep.subr.bf16.mxu0 0
  %443 = vmatpush2.bf16.msra.mxu0 0
  %444 = vmatprep.subr.bf16.mxu0 0
  %445 = vmatpush2.bf16.msra.mxu0 0
  %446 = vmatprep.subr.bf16.mxu0 0
  %447 = vmatpush2.bf16.msra.mxu0 0
  %448 = vmatprep.mubr.bf16.mxu0 0
  %449 = vmatmul.mubr.bf16.gmra.mxu0 %v411
  %v450 = vpop.f32.mrf.mxu0
  %v451 = vadd.f32 0.0, %v450
  %v452 = vpop.f32.mrf.mxu0
  %v453 = vpop.f32.mrf.mxu0
  %v454 = vpop.f32.mrf.mxu0
  %455 = vdwg.mxu0
  %v456 = vpack.c.bf16 %v451, %v405
  %458 = vrot.lane.b32.xlu0 %v236, 120
  %v459 = vpop.permute.xlu0 %458
  %461 = vrot.lane.b32.xlu0 %v238, 120
  %v462 = vpop.permute.xlu0 %461
  %v464 = vsel %vm246, %v459, 0
  %v467 = vsel %vm246, %v462, 0
  %469 = vmatprep.subr.bf16.mxu0 0
  %470 = vmatpush1.bf16.xpose.msra.mxu0 0
  %471 = vmatprep.subr.bf16.mxu0 0
  %472 = vmatpush1.bf16.xpose.msra.mxu0 0
  %473 = vmatprep.subr.bf16.mxu0 0
  %474 = vmatpush1.bf16.xpose.msra.mxu0 0
  %475 = vmatprep.subr.bf16.mxu0 0
  %476 = vmatpush1.bf16.xpose.msra.mxu0 0
  %477 = vmatprep.subr.bf16.mxu0 0
  %478 = vmatpush1.bf16.xpose.msra.mxu0 0
  %479 = vmatprep.subr.bf16.mxu0 0
  %480 = vmatpush1.bf16.xpose.msra.mxu0 0
  %481 = vmatprep.subr.bf16.mxu0 0
  %482 = vmatpush1.bf16.xpose.msra.mxu0 0
  %483 = vmatprep.subr.bf16.mxu0 0
  %484 = vmatpush1.bf16.xpose.msra.mxu0 %v467
  %485 = vmatprep.subr.bf16.mxu0 0
  %486 = vmatpush2.bf16.xpose.msra.mxu0 0
  %487 = vmatprep.subr.bf16.mxu0 0
  %488 = vmatpush2.bf16.xpose.msra.mxu0 0
  %489 = vmatprep.subr.bf16.mxu0 0
  %490 = vmatpush2.bf16.xpose.msra.mxu0 0
  %491 = vmatprep.subr.bf16.mxu0 0
  %492 = vmatpush2.bf16.xpose.msra.mxu0 0
  %493 = vmatprep.subr.bf16.mxu0 0
  %494 = vmatpush2.bf16.xpose.msra.mxu0 0
  %495 = vmatprep.subr.bf16.mxu0 0
  %496 = vmatpush2.bf16.xpose.msra.mxu0 0
  %497 = vmatprep.subr.bf16.mxu0 0
  %498 = vmatpush2.bf16.xpose.msra.mxu0 0
  %499 = vmatprep.subr.bf16.mxu0 0
  %500 = vmatpush2.bf16.xpose.msra.mxu0 0
  %501 = vmatprep.mubr.bf16.mxu0 0
  %502 = vmatmul.mubr.bf16.gmra.mxu0 %v464
  %v503 = vpop.f32.mrf.mxu0
  %v504 = vadd.f32 0.0, %v503
  %v505 = vpop.f32.mrf.mxu0
  %v506 = vpop.f32.mrf.mxu0
  %v507 = vpop.f32.mrf.mxu0
  %508 = vdwg.mxu0
  %510 = vrot.lane.b32.xlu0 %v237, 120
  %v511 = vpop.permute.xlu0 %510
  %513 = vrot.lane.b32.xlu0 %v239, 120
  %v514 = vpop.permute.xlu0 %513
  %v516 = vsel %vm246, %v511, 0
  %v519 = vsel %vm246, %v514, 0
  %521 = vmatprep.subr.bf16.mxu0 0
  %522 = vmatpush1.bf16.xpose.msra.mxu0 0
  %523 = vmatprep.subr.bf16.mxu0 0
  %524 = vmatpush1.bf16.xpose.msra.mxu0 0
  %525 = vmatprep.subr.bf16.mxu0 0
  %526 = vmatpush1.bf16.xpose.msra.mxu0 0
  %527 = vmatprep.subr.bf16.mxu0 0
  %528 = vmatpush1.bf16.xpose.msra.mxu0 0
  %529 = vmatprep.subr.bf16.mxu0 0
  %530 = vmatpush1.bf16.xpose.msra.mxu0 0
  %531 = vmatprep.subr.bf16.mxu0 0
  %532 = vmatpush1.bf16.xpose.msra.mxu0 0
  %533 = vmatprep.subr.bf16.mxu0 0
  %534 = vmatpush1.bf16.xpose.msra.mxu0 0
  %535 = vmatprep.subr.bf16.mxu0 0
  %536 = vmatpush1.bf16.xpose.msra.mxu0 %v519
  %537 = vmatprep.subr.bf16.mxu0 0
  %538 = vmatpush2.bf16.xpose.msra.mxu0 0
  %539 = vmatprep.subr.bf16.mxu0 0
  %540 = vmatpush2.bf16.xpose.msra.mxu0 0
  %541 = vmatprep.subr.bf16.mxu0 0
  %542 = vmatpush2.bf16.xpose.msra.mxu0 0
  %543 = vmatprep.subr.bf16.mxu0 0
  %544 = vmatpush2.bf16.xpose.msra.mxu0 0
  %545 = vmatprep.subr.bf16.mxu0 0
  %546 = vmatpush2.bf16.xpose.msra.mxu0 0
  %547 = vmatprep.subr.bf16.mxu0 0
  %548 = vmatpush2.bf16.xpose.msra.mxu0 0
  %549 = vmatprep.subr.bf16.mxu0 0
  %550 = vmatpush2.bf16.xpose.msra.mxu0 0
  %551 = vmatprep.subr.bf16.mxu0 0
  %552 = vmatpush2.bf16.xpose.msra.mxu0 0
  %553 = vmatprep.mubr.bf16.mxu0 0
  %554 = vmatmul.mubr.bf16.gmra.mxu0 %v516
  %v555 = vpop.f32.mrf.mxu0
  %v556 = vadd.f32 0.0, %v555
  %v557 = vpop.f32.mrf.mxu0
  %v558 = vpop.f32.mrf.mxu0
  %v559 = vpop.f32.mrf.mxu0
  %560 = vdwg.mxu0
  %v561 = vsel %vm246, %v504, -inf
  %562 = vmax.xlane.f32.xlu0 %v561
  %v563 = vpop.xlane.xlu0 %562
  %v564 = vsel %vm246, %v556, -inf
  %565 = vmax.xlane.f32.xlu0 %v564
  %v566 = vpop.xlane.xlu0 %565
  %v567 = vsub.f32 %v504, %v563
  %v568 = vsub.f32 %v556, %v566
  %v569 = vmul.f32 %v567, 1.442695
  %v570 = vpow.pop %v569
  %v571 = vmul.f32 %v568, 1.442695
  %v572 = vpow.pop %v571
  %v573 = vsel %vm246, %v570, 0.0
  %574 = vadd.xlane.f32.xlu0 %v573
  %v575 = vpop.xlane.xlu0 %574
  %v576 = vsel %vm246, %v572, 0.0
  %577 = vadd.xlane.f32.xlu0 %v576
  %v578 = vpop.xlane.xlu0 %577
  %v579 = vrcp.pop %v575
  %v580 = vrcp.pop %v578
  %v581 = vmul.f32 %v570, %v579
  %v582 = vmul.f32 %v572, %v580
  %v583 = vpack.c.bf16 %v581, %v581
  %v584 = vpack.c.bf16 %v582, %v582
  %586 = vrot.lane.b32.xlu0 %v240, 120
  %v587 = vpop.permute.xlu0 %586
  %v589 = vsel %vm246, %v583, 0
  %v592 = vsel %vm366, %v587, 0
  %594 = vmatprep.subr.bf16.mxu0 0
  %595 = vmatpush1.bf16.msra.mxu0 0
  %596 = vmatprep.subr.bf16.mxu0 0
  %597 = vmatpush1.bf16.msra.mxu0 0
  %598 = vmatprep.subr.bf16.mxu0 0
  %599 = vmatpush1.bf16.msra.mxu0 0
  %600 = vmatprep.subr.bf16.mxu0 0
  %601 = vmatpush1.bf16.msra.mxu0 0
  %602 = vmatprep.subr.bf16.mxu0 0
  %603 = vmatpush1.bf16.msra.mxu0 0
  %604 = vmatprep.subr.bf16.mxu0 0
  %605 = vmatpush1.bf16.msra.mxu0 0
  %606 = vmatprep.subr.bf16.mxu0 0
  %607 = vmatpush1.bf16.msra.mxu0 0
  %608 = vmatprep.subr.bf16.mxu0 0
  %609 = vmatpush1.bf16.msra.mxu0 %v592
  %610 = vmatprep.subr.bf16.mxu0 0
  %611 = vmatpush2.bf16.msra.mxu0 0
  %612 = vmatprep.subr.bf16.mxu0 0
  %613 = vmatpush2.bf16.msra.mxu0 0
  %614 = vmatprep.subr.bf16.mxu0 0
  %615 = vmatpush2.bf16.msra.mxu0 0
  %616 = vmatprep.subr.bf16.mxu0 0
  %617 = vmatpush2.bf16.msra.mxu0 0
  %618 = vmatprep.subr.bf16.mxu0 0
  %619 = vmatpush2.bf16.msra.mxu0 0
  %620 = vmatprep.subr.bf16.mxu0 0
  %621 = vmatpush2.bf16.msra.mxu0 0
  %622 = vmatprep.subr.bf16.mxu0 0
  %623 = vmatpush2.bf16.msra.mxu0 0
  %624 = vmatprep.subr.bf16.mxu0 0
  %625 = vmatpush2.bf16.msra.mxu0 0
  %626 = vmatprep.mubr.bf16.mxu0 0
  %627 = vmatmul.mubr.bf16.gmra.mxu0 %v589
  %v628 = vpop.f32.mrf.mxu0
  %v629 = vadd.f32 0.0, %v628
  %v630 = vpop.f32.mrf.mxu0
  %v631 = vpop.f32.mrf.mxu0
  %v632 = vpop.f32.mrf.mxu0
  %633 = vdwg.mxu0
  %635 = vrot.lane.b32.xlu0 %v241, 120
  %v636 = vpop.permute.xlu0 %635
  %v638 = vsel %vm246, %v584, 0
  %v641 = vsel %vm366, %v636, 0
  %643 = vmatprep.subr.bf16.mxu0 0
  %644 = vmatpush1.bf16.msra.mxu0 0
  %645 = vmatprep.subr.bf16.mxu0 0
  %646 = vmatpush1.bf16.msra.mxu0 0
  %647 = vmatprep.subr.bf16.mxu0 0
  %648 = vmatpush1.bf16.msra.mxu0 0
  %649 = vmatprep.subr.bf16.mxu0 0
  %650 = vmatpush1.bf16.msra.mxu0 0
  %651 = vmatprep.subr.bf16.mxu0 0
  %652 = vmatpush1.bf16.msra.mxu0 0
  %653 = vmatprep.subr.bf16.mxu0 0
  %654 = vmatpush1.bf16.msra.mxu0 0
  %655 = vmatprep.subr.bf16.mxu0 0
  %656 = vmatpush1.bf16.msra.mxu0 0
  %657 = vmatprep.subr.bf16.mxu0 0
  %658 = vmatpush1.bf16.msra.mxu0 %v641
  %659 = vmatprep.subr.bf16.mxu0 0
  %660 = vmatpush2.bf16.msra.mxu0 0
  %661 = vmatprep.subr.bf16.mxu0 0
  %662 = vmatpush2.bf16.msra.mxu0 0
  %663 = vmatprep.subr.bf16.mxu0 0
  %664 = vmatpush2.bf16.msra.mxu0 0
  %665 = vmatprep.subr.bf16.mxu0 0
  %666 = vmatpush2.bf16.msra.mxu0 0
  %667 = vmatprep.subr.bf16.mxu0 0
  %668 = vmatpush2.bf16.msra.mxu0 0
  %669 = vmatprep.subr.bf16.mxu0 0
  %670 = vmatpush2.bf16.msra.mxu0 0
  %671 = vmatprep.subr.bf16.mxu0 0
  %672 = vmatpush2.bf16.msra.mxu0 0
  %673 = vmatprep.subr.bf16.mxu0 0
  %674 = vmatpush2.bf16.msra.mxu0 0
  %675 = vmatprep.mubr.bf16.mxu0 0
  %676 = vmatmul.mubr.bf16.gmra.mxu0 %v638
  %v677 = vpop.f32.mrf.mxu0
  %v678 = vadd.f32 0.0, %v677
  %v679 = vpop.f32.mrf.mxu0
  %v680 = vpop.f32.mrf.mxu0
  %v681 = vpop.f32.mrf.mxu0
  %682 = vdwg.mxu0
  %v683 = vpack.c.bf16 %v678, %v629
  %v685 = vsel %vm246, %v683, 0
  %v688 = vsel %vm366, %v243, 0
  %690 = vmatprep.subr.bf16.mxu0 0
  %691 = vmatpush1.bf16.msra.mxu0 0
  %692 = vmatprep.subr.bf16.mxu0 0
  %693 = vmatpush1.bf16.msra.mxu0 0
  %694 = vmatprep.subr.bf16.mxu0 0
  %695 = vmatpush1.bf16.msra.mxu0 0
  %696 = vmatprep.subr.bf16.mxu0 0
  %697 = vmatpush1.bf16.msra.mxu0 0
  %698 = vmatprep.subr.bf16.mxu0 0
  %699 = vmatpush1.bf16.msra.mxu0 0
  %700 = vmatprep.subr.bf16.mxu0 0
  %701 = vmatpush1.bf16.msra.mxu0 0
  %702 = vmatprep.subr.bf16.mxu0 0
  %703 = vmatpush1.bf16.msra.mxu0 0
  %704 = vmatprep.subr.bf16.mxu0 0
  %705 = vmatpush1.bf16.msra.mxu0 %v688
  %706 = vmatprep.subr.bf16.mxu0 0
  %707 = vmatpush2.bf16.msra.mxu0 0
  %708 = vmatprep.subr.bf16.mxu0 0
  %709 = vmatpush2.bf16.msra.mxu0 0
  %710 = vmatprep.subr.bf16.mxu0 0
  %711 = vmatpush2.bf16.msra.mxu0 0
  %712 = vmatprep.subr.bf16.mxu0 0
  %713 = vmatpush2.bf16.msra.mxu0 0
  %714 = vmatprep.subr.bf16.mxu0 0
  %715 = vmatpush2.bf16.msra.mxu0 0
  %716 = vmatprep.subr.bf16.mxu0 0
  %717 = vmatpush2.bf16.msra.mxu0 0
  %718 = vmatprep.subr.bf16.mxu0 0
  %719 = vmatpush2.bf16.msra.mxu0 0
  %720 = vmatprep.subr.bf16.mxu0 0
  %721 = vmatpush2.bf16.msra.mxu0 0
  %722 = vmatprep.mubr.bf16.mxu0 0
  %723 = vmatmul.mubr.bf16.gmra.mxu0 %v685
  %v724 = vpop.f32.mrf.mxu0
  %v725 = vadd.f32 0.0, %v724
  %v726 = vpop.f32.mrf.mxu0
  %v727 = vpop.f32.mrf.mxu0
  %v728 = vadd.f32 0.0, %v727
  %v729 = vpop.f32.mrf.mxu0
  %730 = vdwg.mxu0
  %v732 = vsel %vm246, %v456, 0
  %v735 = vsel %vm366, %v242, 0
  %737 = vmatprep.subr.bf16.mxu0 0
  %738 = vmatpush1.bf16.msra.mxu0 0
  %739 = vmatprep.subr.bf16.mxu0 0
  %740 = vmatpush1.bf16.msra.mxu0 0
  %741 = vmatprep.subr.bf16.mxu0 0
  %742 = vmatpush1.bf16.msra.mxu0 0
  %743 = vmatprep.subr.bf16.mxu0 0
  %744 = vmatpush1.bf16.msra.mxu0 0
  %745 = vmatprep.subr.bf16.mxu0 0
  %746 = vmatpush1.bf16.msra.mxu0 0
  %747 = vmatprep.subr.bf16.mxu0 0
  %748 = vmatpush1.bf16.msra.mxu0 0
  %749 = vmatprep.subr.bf16.mxu0 0
  %750 = vmatpush1.bf16.msra.mxu0 0
  %751 = vmatprep.subr.bf16.mxu0 0
  %752 = vmatpush1.bf16.msra.mxu0 %v735
  %753 = vmatprep.subr.bf16.mxu0 0
  %754 = vmatpush2.bf16.msra.mxu0 0
  %755 = vmatprep.subr.bf16.mxu0 0
  %756 = vmatpush2.bf16.msra.mxu0 0
  %757 = vmatprep.subr.bf16.mxu0 0
  %758 = vmatpush2.bf16.msra.mxu0 0
  %759 = vmatprep.subr.bf16.mxu0 0
  %760 = vmatpush2.bf16.msra.mxu0 0
  %761 = vmatprep.subr.bf16.mxu0 0
  %762 = vmatpush2.bf16.msra.mxu0 0
  %763 = vmatprep.subr.bf16.mxu0 0
  %764 = vmatpush2.bf16.msra.mxu0 0
  %765 = vmatprep.subr.bf16.mxu0 0
  %766 = vmatpush2.bf16.msra.mxu0 0
  %767 = vmatprep.subr.bf16.mxu0 0
  %768 = vmatpush2.bf16.msra.mxu0 0
  %769 = vmatprep.mubr.bf16.mxu0 0
  %770 = vmatmul.mubr.bf16.gmra.mxu0 %v732
  %v771 = vpop.f32.mrf.mxu0
  %v772 = vadd.f32 %v725, %v771
  %v773 = vpop.f32.mrf.mxu0
  %v774 = vpop.f32.mrf.mxu0
  %v775 = vadd.f32 %v728, %v774
  %v776 = vpop.f32.mrf.mxu0
  %777 = vdwg.mxu0
  %778 = vrot.lane.b32.xlu0 %v236, 112
  %v779 = vpop.permute.xlu0 %778
  %780 = vrot.lane.b32.xlu0 %v238, 112
  %v781 = vpop.permute.xlu0 %780
  %v783 = vsel %vm246, %v779, 0
  %v786 = vsel %vm246, %v781, 0
  %788 = vmatprep.subr.bf16.mxu0 0
  %789 = vmatpush1.bf16.xpose.msra.mxu0 0
  %790 = vmatprep.subr.bf16.mxu0 0
  %791 = vmatpush1.bf16.xpose.msra.mxu0 0
  %792 = vmatprep.subr.bf16.mxu0 0
  %793 = vmatpush1.bf16.xpose.msra.mxu0 0
  %794 = vmatprep.subr.bf16.mxu0 0
  %795 = vmatpush1.bf16.xpose.msra.mxu0 0
  %796 = vmatprep.subr.bf16.mxu0 0
  %797 = vmatpush1.bf16.xpose.msra.mxu0 0
  %798 = vmatprep.subr.bf16.mxu0 0
  %799 = vmatpush1.bf16.xpose.msra.mxu0 0
  %800 = vmatprep.subr.bf16.mxu0 0
  %801 = vmatpush1.bf16.xpose.msra.mxu0 0
  %802 = vmatprep.subr.bf16.mxu0 0
  %803 = vmatpush1.bf16.xpose.msra.mxu0 %v786
  %804 = vmatprep.subr.bf16.mxu0 0
  %805 = vmatpush2.bf16.xpose.msra.mxu0 0
  %806 = vmatprep.subr.bf16.mxu0 0
  %807 = vmatpush2.bf16.xpose.msra.mxu0 0
  %808 = vmatprep.subr.bf16.mxu0 0
  %809 = vmatpush2.bf16.xpose.msra.mxu0 0
  %810 = vmatprep.subr.bf16.mxu0 0
  %811 = vmatpush2.bf16.xpose.msra.mxu0 0
  %812 = vmatprep.subr.bf16.mxu0 0
  %813 = vmatpush2.bf16.xpose.msra.mxu0 0
  %814 = vmatprep.subr.bf16.mxu0 0
  %815 = vmatpush2.bf16.xpose.msra.mxu0 0
  %816 = vmatprep.subr.bf16.mxu0 0
  %817 = vmatpush2.bf16.xpose.msra.mxu0 0
  %818 = vmatprep.subr.bf16.mxu0 0
  %819 = vmatpush2.bf16.xpose.msra.mxu0 0
  %820 = vmatprep.mubr.bf16.mxu0 0
  %821 = vmatmul.mubr.bf16.gmra.mxu0 %v783
  %v822 = vpop.f32.mrf.mxu0
  %v823 = vadd.f32 0.0, %v822
  %v824 = vpop.f32.mrf.mxu0
  %v825 = vpop.f32.mrf.mxu0
  %v826 = vpop.f32.mrf.mxu0
  %827 = vdwg.mxu0
  %828 = vrot.lane.b32.xlu0 %v237, 112
  %v829 = vpop.permute.xlu0 %828
  %830 = vrot.lane.b32.xlu0 %v239, 112
  %v831 = vpop.permute.xlu0 %830
  %v833 = vsel %vm246, %v829, 0
  %v836 = vsel %vm246, %v831, 0
  %838 = vmatprep.subr.bf16.mxu0 0
  %839 = vmatpush1.bf16.xpose.msra.mxu0 0
  %840 = vmatprep.subr.bf16.mxu0 0
  %841 = vmatpush1.bf16.xpose.msra.mxu0 0
  %842 = vmatprep.subr.bf16.mxu0 0
  %843 = vmatpush1.bf16.xpose.msra.mxu0 0
  %844 = vmatprep.subr.bf16.mxu0 0
  %845 = vmatpush1.bf16.xpose.msra.mxu0 0
  %846 = vmatprep.subr.bf16.mxu0 0
  %847 = vmatpush1.bf16.xpose.msra.mxu0 0
  %848 = vmatprep.subr.bf16.mxu0 0
  %849 = vmatpush1.bf16.xpose.msra.mxu0 0
  %850 = vmatprep.subr.bf16.mxu0 0
  %851 = vmatpush1.bf16.xpose.msra.mxu0 0
  %852 = vmatprep.subr.bf16.mxu0 0
  %853 = vmatpush1.bf16.xpose.msra.mxu0 %v836
  %854 = vmatprep.subr.bf16.mxu0 0
  %855 = vmatpush2.bf16.xpose.msra.mxu0 0
  %856 = vmatprep.subr.bf16.mxu0 0
  %857 = vmatpush2.bf16.xpose.msra.mxu0 0
  %858 = vmatprep.subr.bf16.mxu0 0
  %859 = vmatpush2.bf16.xpose.msra.mxu0 0
  %860 = vmatprep.subr.bf16.mxu0 0
  %861 = vmatpush2.bf16.xpose.msra.mxu0 0
  %862 = vmatprep.subr.bf16.mxu0 0
  %863 = vmatpush2.bf16.xpose.msra.mxu0 0
  %864 = vmatprep.subr.bf16.mxu0 0
  %865 = vmatpush2.bf16.xpose.msra.mxu0 0
  %866 = vmatprep.subr.bf16.mxu0 0
  %867 = vmatpush2.bf16.xpose.msra.mxu0 0
  %868 = vmatprep.subr.bf16.mxu0 0
  %869 = vmatpush2.bf16.xpose.msra.mxu0 0
  %870 = vmatprep.mubr.bf16.mxu0 0
  %871 = vmatmul.mubr.bf16.gmra.mxu0 %v833
  %v872 = vpop.f32.mrf.mxu0
  %v873 = vadd.f32 0.0, %v872
  %v874 = vpop.f32.mrf.mxu0
  %v875 = vpop.f32.mrf.mxu0
  %v876 = vpop.f32.mrf.mxu0
  %877 = vdwg.mxu0
  %v878 = vsel %vm246, %v823, -inf
  %879 = vmax.xlane.f32.xlu0 %v878
  %v880 = vpop.xlane.xlu0 %879
  %v881 = vsel %vm246, %v873, -inf
  %882 = vmax.xlane.f32.xlu0 %v881
  %v883 = vpop.xlane.xlu0 %882
  %v884 = vsub.f32 %v823, %v880
  %v885 = vsub.f32 %v873, %v883
  %v886 = vmul.f32 %v884, 1.442695
  %v887 = vpow.pop %v886
  %v888 = vmul.f32 %v885, 1.442695
  %v889 = vpow.pop %v888
  %v890 = vsel %vm246, %v887, 0.0
  %891 = vadd.xlane.f32.xlu0 %v890
  %v892 = vpop.xlane.xlu0 %891
  %v893 = vsel %vm246, %v889, 0.0
  %894 = vadd.xlane.f32.xlu0 %v893
  %v895 = vpop.xlane.xlu0 %894
  %v896 = vrcp.pop %v892
  %v897 = vrcp.pop %v895
  %v898 = vmul.f32 %v887, %v896
  %v899 = vmul.f32 %v889, %v897
  %v900 = vpack.c.bf16 %v898, %v898
  %v901 = vpack.c.bf16 %v899, %v899
  %902 = vrot.lane.b32.xlu0 %v240, 112
  %v903 = vpop.permute.xlu0 %902
  %v905 = vsel %vm246, %v900, 0
  %v908 = vsel %vm366, %v903, 0
  %910 = vmatprep.subr.bf16.mxu0 0
  %911 = vmatpush1.bf16.msra.mxu0 0
  %912 = vmatprep.subr.bf16.mxu0 0
  %913 = vmatpush1.bf16.msra.mxu0 0
  %914 = vmatprep.subr.bf16.mxu0 0
  %915 = vmatpush1.bf16.msra.mxu0 0
  %916 = vmatprep.subr.bf16.mxu0 0
  %917 = vmatpush1.bf16.msra.mxu0 0
  %918 = vmatprep.subr.bf16.mxu0 0
  %919 = vmatpush1.bf16.msra.mxu0 0
  %920 = vmatprep.subr.bf16.mxu0 0
  %921 = vmatpush1.bf16.msra.mxu0 0
  %922 = vmatprep.subr.bf16.mxu0 0
  %923 = vmatpush1.bf16.msra.mxu0 0
  %924 = vmatprep.subr.bf16.mxu0 0
  %925 = vmatpush1.bf16.msra.mxu0 %v908
  %926 = vmatprep.subr.bf16.mxu0 0
  %927 = vmatpush2.bf16.msra.mxu0 0
  %928 = vmatprep.subr.bf16.mxu0 0
  %929 = vmatpush2.bf16.msra.mxu0 0
  %930 = vmatprep.subr.bf16.mxu0 0
  %931 = vmatpush2.bf16.msra.mxu0 0
  %932 = vmatprep.subr.bf16.mxu0 0
  %933 = vmatpush2.bf16.msra.mxu0 0
  %934 = vmatprep.subr.bf16.mxu0 0
  %935 = vmatpush2.bf16.msra.mxu0 0
  %936 = vmatprep.subr.bf16.mxu0 0
  %937 = vmatpush2.bf16.msra.mxu0 0
  %938 = vmatprep.subr.bf16.mxu0 0
  %939 = vmatpush2.bf16.msra.mxu0 0
  %940 = vmatprep.subr.bf16.mxu0 0
  %941 = vmatpush2.bf16.msra.mxu0 0
  %942 = vmatprep.mubr.bf16.mxu0 0
  %943 = vmatmul.mubr.bf16.gmra.mxu0 %v905
  %v944 = vpop.f32.mrf.mxu0
  %v945 = vadd.f32 0.0, %v944
  %v946 = vpop.f32.mrf.mxu0
  %v947 = vpop.f32.mrf.mxu0
  %v948 = vpop.f32.mrf.mxu0
  %949 = vdwg.mxu0
  %950 = vrot.lane.b32.xlu0 %v241, 112
  %v951 = vpop.permute.xlu0 %950
  %v953 = vsel %vm246, %v901, 0
  %v956 = vsel %vm366, %v951, 0
  %958 = vmatprep.subr.bf16.mxu0 0
  %959 = vmatpush1.bf16.msra.mxu0 0
  %960 = vmatprep.subr.bf16.mxu0 0
  %961 = vmatpush1.bf16.msra.mxu0 0
  %962 = vmatprep.subr.bf16.mxu0 0
  %963 = vmatpush1.bf16.msra.mxu0 0
  %964 = vmatprep.subr.bf16.mxu0 0
  %965 = vmatpush1.bf16.msra.mxu0 0
  %966 = vmatprep.subr.bf16.mxu0 0
  %967 = vmatpush1.bf16.msra.mxu0 0
  %968 = vmatprep.subr.bf16.mxu0 0
  %969 = vmatpush1.bf16.msra.mxu0 0
  %970 = vmatprep.subr.bf16.mxu0 0
  %971 = vmatpush1.bf16.msra.mxu0 0
  %972 = vmatprep.subr.bf16.mxu0 0
  %973 = vmatpush1.bf16.msra.mxu0 %v956
  %974 = vmatprep.subr.bf16.mxu0 0
  %975 = vmatpush2.bf16.msra.mxu0 0
  %976 = vmatprep.subr.bf16.mxu0 0
  %977 = vmatpush2.bf16.msra.mxu0 0
  %978 = vmatprep.subr.bf16.mxu0 0
  %979 = vmatpush2.bf16.msra.mxu0 0
  %980 = vmatprep.subr.bf16.mxu0 0
  %981 = vmatpush2.bf16.msra.mxu0 0
  %982 = vmatprep.subr.bf16.mxu0 0
  %983 = vmatpush2.bf16.msra.mxu0 0
  %984 = vmatprep.subr.bf16.mxu0 0
  %985 = vmatpush2.bf16.msra.mxu0 0
  %986 = vmatprep.subr.bf16.mxu0 0
  %987 = vmatpush2.bf16.msra.mxu0 0
  %988 = vmatprep.subr.bf16.mxu0 0
  %989 = vmatpush2.bf16.msra.mxu0 0
  %990 = vmatprep.mubr.bf16.mxu0 0
  %991 = vmatmul.mubr.bf16.gmra.mxu0 %v953
  %v992 = vpop.f32.mrf.mxu0
  %v993 = vadd.f32 0.0, %v992
  %v994 = vpop.f32.mrf.mxu0
  %v995 = vpop.f32.mrf.mxu0
  %v996 = vpop.f32.mrf.mxu0
  %997 = vdwg.mxu0
  %v998 = vpack.c.bf16 %v993, %v945
  %v1000 = vsel %vm246, %v998, 0
  %v1003 = vsel %vm366, %v244, 0
  %1005 = vmatprep.subr.bf16.mxu0 0
  %1006 = vmatpush1.bf16.msra.mxu0 0
  %1007 = vmatprep.subr.bf16.mxu0 0
  %1008 = vmatpush1.bf16.msra.mxu0 0
  %1009 = vmatprep.subr.bf16.mxu0 0
  %1010 = vmatpush1.bf16.msra.mxu0 0
  %1011 = vmatprep.subr.bf16.mxu0 0
  %1012 = vmatpush1.bf16.msra.mxu0 0
  %1013 = vmatprep.subr.bf16.mxu0 0
  %1014 = vmatpush1.bf16.msra.mxu0 0
  %1015 = vmatprep.subr.bf16.mxu0 0
  %1016 = vmatpush1.bf16.msra.mxu0 0
  %1017 = vmatprep.subr.bf16.mxu0 0
  %1018 = vmatpush1.bf16.msra.mxu0 0
  %1019 = vmatprep.subr.bf16.mxu0 0
  %1020 = vmatpush1.bf16.msra.mxu0 %v1003
  %1021 = vmatprep.subr.bf16.mxu0 0
  %1022 = vmatpush2.bf16.msra.mxu0 0
  %1023 = vmatprep.subr.bf16.mxu0 0
  %1024 = vmatpush2.bf16.msra.mxu0 0
  %1025 = vmatprep.subr.bf16.mxu0 0
  %1026 = vmatpush2.bf16.msra.mxu0 0
  %1027 = vmatprep.subr.bf16.mxu0 0
  %1028 = vmatpush2.bf16.msra.mxu0 0
  %1029 = vmatprep.subr.bf16.mxu0 0
  %1030 = vmatpush2.bf16.msra.mxu0 0
  %1031 = vmatprep.subr.bf16.mxu0 0
  %1032 = vmatpush2.bf16.msra.mxu0 0
  %1033 = vmatprep.subr.bf16.mxu0 0
  %1034 = vmatpush2.bf16.msra.mxu0 0
  %1035 = vmatprep.subr.bf16.mxu0 0
  %1036 = vmatpush2.bf16.msra.mxu0 0
  %1037 = vmatprep.mubr.bf16.mxu0 0
  %1038 = vmatmul.mubr.bf16.gmra.mxu0 %v1000
  %v1039 = vpop.f32.mrf.mxu0
  %v1040 = vadd.f32 0.0, %v1039
  %v1041 = vpop.f32.mrf.mxu0
  %v1042 = vpop.f32.mrf.mxu0
  %v1043 = vadd.f32 0.0, %v1042
  %v1044 = vpop.f32.mrf.mxu0
  %1045 = vdwg.mxu0
  %v1046 = vadd.f32 %v772, %v1040
  %v1047 = vadd.f32 %v775, %v1043
  %1048 = vrot.lane.b32.xlu0 %v236, 104
  %v1049 = vpop.permute.xlu0 %1048
  %1050 = vrot.lane.b32.xlu0 %v238, 104
  %v1051 = vpop.permute.xlu0 %1050
  %v1053 = vsel %vm246, %v1049, 0
  %v1056 = vsel %vm246, %v1051, 0
  %1058 = vmatprep.subr.bf16.mxu0 0
  %1059 = vmatpush1.bf16.xpose.msra.mxu0 0
  %1060 = vmatprep.subr.bf16.mxu0 0
  %1061 = vmatpush1.bf16.xpose.msra.mxu0 0
  %1062 = vmatprep.subr.bf16.mxu0 0
  %1063 = vmatpush1.bf16.xpose.msra.mxu0 0
  %1064 = vmatprep.subr.bf16.mxu0 0
  %1065 = vmatpush1.bf16.xpose.msra.mxu0 0
  %1066 = vmatprep.subr.bf16.mxu0 0
  %1067 = vmatpush1.bf16.xpose.msra.mxu0 0
  %1068 = vmatprep.subr.bf16.mxu0 0
  %1069 = vmatpush1.bf16.xpose.msra.mxu0 0
  %1070 = vmatprep.subr.bf16.mxu0 0
  %1071 = vmatpush1.bf16.xpose.msra.mxu0 0
  %1072 = vmatprep.subr.bf16.mxu0 0
  %1073 = vmatpush1.bf16.xpose.msra.mxu0 %v1056
  %1074 = vmatprep.subr.bf16.mxu0 0
  %1075 = vmatpush2.bf16.xpose.msra.mxu0 0
  %1076 = vmatprep.subr.bf16.mxu0 0
  %1077 = vmatpush2.bf16.xpose.msra.mxu0 0
  %1078 = vmatprep.subr.bf16.mxu0 0
  %1079 = vmatpush2.bf16.xpose.msra.mxu0 0
  %1080 = vmatprep.subr.bf16.mxu0 0
  %1081 = vmatpush2.bf16.xpose.msra.mxu0 0
  %1082 = vmatprep.subr.bf16.mxu0 0
  %1083 = vmatpush2.bf16.xpose.msra.mxu0 0
  %1084 = vmatprep.subr.bf16.mxu0 0
  %1085 = vmatpush2.bf16.xpose.msra.mxu0 0
  %1086 = vmatprep.subr.bf16.mxu0 0
  %1087 = vmatpush2.bf16.xpose.msra.mxu0 0
  %1088 = vmatprep.subr.bf16.mxu0 0
  %1089 = vmatpush2.bf16.xpose.msra.mxu0 0
  %1090 = vmatprep.mubr.bf16.mxu0 0
  %1091 = vmatmul.mubr.bf16.gmra.mxu0 %v1053
  %v1092 = vpop.f32.mrf.mxu0
  %v1093 = vadd.f32 0.0, %v1092
  %v1094 = vpop.f32.mrf.mxu0
  %v1095 = vpop.f32.mrf.mxu0
  %v1096 = vpop.f32.mrf.mxu0
  %1097 = vdwg.mxu0
  %1098 = vrot.lane.b32.xlu0 %v237, 104
  %v1099 = vpop.permute.xlu0 %1098
  %1100 = vrot.lane.b32.xlu0 %v239, 104
  %v1101 = vpop.permute.xlu0 %1100
  %v1103 = vsel %vm246, %v1099, 0
  %v1106 = vsel %vm246, %v1101, 0
  %1108 = vmatprep.subr.bf16.mxu0 0
  %1109 = vmatpush1.bf16.xpose.msra.mxu0 0
  %1110 = vmatprep.subr.bf16.mxu0 0
  %1111 = vmatpush1.bf16.xpose.msra.mxu0 0
  %1112 = vmatprep.subr.bf16.mxu0 0
  %1113 = vmatpush1.bf16.xpose.msra.mxu0 0
  %1114 = vmatprep.subr.bf16.mxu0 0
  %1115 = vmatpush1.bf16.xpose.msra.mxu0 0
  %1116 = vmatprep.subr.bf16.mxu0 0
  %1117 = vmatpush1.bf16.xpose.msra.mxu0 0
  %1118 = vmatprep.subr.bf16.mxu0 0
  %1119 = vmatpush1.bf16.xpose.msra.mxu0 0
  %1120 = vmatprep.subr.bf16.mxu0 0
  %1121 = vmatpush1.bf16.xpose.msra.mxu0 0
  %1122 = vmatprep.subr.bf16.mxu0 0
  %1123 = vmatpush1.bf16.xpose.msra.mxu0 %v1106
  %1124 = vmatprep.subr.bf16.mxu0 0
  %1125 = vmatpush2.bf16.xpose.msra.mxu0 0
  %1126 = vmatprep.subr.bf16.mxu0 0
  %1127 = vmatpush2.bf16.xpose.msra.mxu0 0
  %1128 = vmatprep.subr.bf16.mxu0 0
  %1129 = vmatpush2.bf16.xpose.msra.mxu0 0
  %1130 = vmatprep.subr.bf16.mxu0 0
  %1131 = vmatpush2.bf16.xpose.msra.mxu0 0
  %1132 = vmatprep.subr.bf16.mxu0 0
  %1133 = vmatpush2.bf16.xpose.msra.mxu0 0
  %1134 = vmatprep.subr.bf16.mxu0 0
  %1135 = vmatpush2.bf16.xpose.msra.mxu0 0
  %1136 = vmatprep.subr.bf16.mxu0 0
  %1137 = vmatpush2.bf16.xpose.msra.mxu0 0
  %1138 = vmatprep.subr.bf16.mxu0 0
  %1139 = vmatpush2.bf16.xpose.msra.mxu0 0
  %1140 = vmatprep.mubr.bf16.mxu0 0
  %1141 = vmatmul.mubr.bf16.gmra.mxu0 %v1103
  %v1142 = vpop.f32.mrf.mxu0
  %v1143 = vadd.f32 0.0, %v1142
  %v1144 = vpop.f32.mrf.mxu0
  %v1145 = vpop.f32.mrf.mxu0
  %v1146 = vpop.f32.mrf.mxu0
  %1147 = vdwg.mxu0
  %v1148 = vsel %vm246, %v1093, -inf
  %1149 = vmax.xlane.f32.xlu0 %v1148
  %v1150 = vpop.xlane.xlu0 %1149
  %v1151 = vsel %vm246, %v1143, -inf
  %1152 = vmax.xlane.f32.xlu0 %v1151
  %v1153 = vpop.xlane.xlu0 %1152
  %v1154 = vsub.f32 %v1093, %v1150
  %v1155 = vsub.f32 %v1143, %v1153
  %v1156 = vmul.f32 %v1154, 1.442695
  %v1157 = vpow.pop %v1156
  %v1158 = vmul.f32 %v1155, 1.442695
  %v1159 = vpow.pop %v1158
  %v1160 = vsel %vm246, %v1157, 0.0
  %1161 = vadd.xlane.f32.xlu0 %v1160
  %v1162 = vpop.xlane.xlu0 %1161
  %v1163 = vsel %vm246, %v1159, 0.0
  %1164 = vadd.xlane.f32.xlu0 %v1163
  %v1165 = vpop.xlane.xlu0 %1164
  %v1166 = vrcp.pop %v1162
  %v1167 = vrcp.pop %v1165
  %v1168 = vmul.f32 %v1157, %v1166
  %v1169 = vmul.f32 %v1159, %v1167
  %v1170 = vpack.c.bf16 %v1168, %v1168
  %v1171 = vpack.c.bf16 %v1169, %v1169
  %1172 = vrot.lane.b32.xlu0 %v240, 104
  %v1173 = vpop.permute.xlu0 %1172
  %v1175 = vsel %vm246, %v1170, 0
  %v1178 = vsel %vm366, %v1173, 0
  %1180 = vmatprep.subr.bf16.mxu0 0
  %1181 = vmatpush1.bf16.msra.mxu0 0
  %1182 = vmatprep.subr.bf16.mxu0 0
  %1183 = vmatpush1.bf16.msra.mxu0 0
  %1184 = vmatprep.subr.bf16.mxu0 0
  %1185 = vmatpush1.bf16.msra.mxu0 0
  %1186 = vmatprep.subr.bf16.mxu0 0
  %1187 = vmatpush1.bf16.msra.mxu0 0
  %1188 = vmatprep.subr.bf16.mxu0 0
  %1189 = vmatpush1.bf16.msra.mxu0 0
  %1190 = vmatprep.subr.bf16.mxu0 0
  %1191 = vmatpush1.bf16.msra.mxu0 0
  %1192 = vmatprep.subr.bf16.mxu0 0
  %1193 = vmatpush1.bf16.msra.mxu0 0
  %1194 = vmatprep.subr.bf16.mxu0 0
  %1195 = vmatpush1.bf16.msra.mxu0 %v1178
  %1196 = vmatprep.subr.bf16.mxu0 0
  %1197 = vmatpush2.bf16.msra.mxu0 0
  %1198 = vmatprep.subr.bf16.mxu0 0
  %1199 = vmatpush2.bf16.msra.mxu0 0
  %1200 = vmatprep.subr.bf16.mxu0 0
  %1201 = vmatpush2.bf16.msra.mxu0 0
  %1202 = vmatprep.subr.bf16.mxu0 0
  %1203 = vmatpush2.bf16.msra.mxu0 0
  %1204 = vmatprep.subr.bf16.mxu0 0
  %1205 = vmatpush2.bf16.msra.mxu0 0
  %1206 = vmatprep.subr.bf16.mxu0 0
  %1207 = vmatpush2.bf16.msra.mxu0 0
  %1208 = vmatprep.subr.bf16.mxu0 0
  %1209 = vmatpush2.bf16.msra.mxu0 0
  %1210 = vmatprep.subr.bf16.mxu0 0
  %1211 = vmatpush2.bf16.msra.mxu0 0
  %1212 = vmatprep.mubr.bf16.mxu0 0
  %1213 = vmatmul.mubr.bf16.gmra.mxu0 %v1175
  %v1214 = vpop.f32.mrf.mxu0
  %v1215 = vadd.f32 0.0, %v1214
  %v1216 = vpop.f32.mrf.mxu0
  %v1217 = vpop.f32.mrf.mxu0
  %v1218 = vpop.f32.mrf.mxu0
  %1219 = vdwg.mxu0
  %1220 = vrot.lane.b32.xlu0 %v241, 104
  %v1221 = vpop.permute.xlu0 %1220
  %v1223 = vsel %vm246, %v1171, 0
  %v1226 = vsel %vm366, %v1221, 0
  %1228 = vmatprep.subr.bf16.mxu0 0
  %1229 = vmatpush1.bf16.msra.mxu0 0
  %1230 = vmatprep.subr.bf16.mxu0 0
  %1231 = vmatpush1.bf16.msra.mxu0 0
  %1232 = vmatprep.subr.bf16.mxu0 0
  %1233 = vmatpush1.bf16.msra.mxu0 0
  %1234 = vmatprep.subr.bf16.mxu0 0
  %1235 = vmatpush1.bf16.msra.mxu0 0
  %1236 = vmatprep.subr.bf16.mxu0 0
  %1237 = vmatpush1.bf16.msra.mxu0 0
  %1238 = vmatprep.subr.bf16.mxu0 0
  %1239 = vmatpush1.bf16.msra.mxu0 0
  %1240 = vmatprep.subr.bf16.mxu0 0
  %1241 = vmatpush1.bf16.msra.mxu0 0
  %1242 = vmatprep.subr.bf16.mxu0 0
  %1243 = vmatpush1.bf16.msra.mxu0 %v1226
  %1244 = vmatprep.subr.bf16.mxu0 0
  %1245 = vmatpush2.bf16.msra.mxu0 0
  %1246 = vmatprep.subr.bf16.mxu0 0
  %1247 = vmatpush2.bf16.msra.mxu0 0
  %1248 = vmatprep.subr.bf16.mxu0 0
  %1249 = vmatpush2.bf16.msra.mxu0 0
  %1250 = vmatprep.subr.bf16.mxu0 0
  %1251 = vmatpush2.bf16.msra.mxu0 0
  %1252 = vmatprep.subr.bf16.mxu0 0
  %1253 = vmatpush2.bf16.msra.mxu0 0
  %1254 = vmatprep.subr.bf16.mxu0 0
  %1255 = vmatpush2.bf16.msra.mxu0 0
  %1256 = vmatprep.subr.bf16.mxu0 0
  %1257 = vmatpush2.bf16.msra.mxu0 0
  %1258 = vmatprep.subr.bf16.mxu0 0
  %1259 = vmatpush2.bf16.msra.mxu0 0
  %1260 = vmatprep.mubr.bf16.mxu0 0
  %1261 = vmatmul.mubr.bf16.gmra.mxu0 %v1223
  %v1262 = vpop.f32.mrf.mxu0
  %v1263 = vadd.f32 0.0, %v1262
  %v1264 = vpop.f32.mrf.mxu0
  %v1265 = vpop.f32.mrf.mxu0
  %v1266 = vpop.f32.mrf.mxu0
  %1267 = vdwg.mxu0
  %v1268 = vpack.c.bf16 %v1263, %v1215
  %v1270 = vsel %vm246, %v1268, 0
  %v1273 = vsel %vm366, %v245, 0
  %1275 = vmatprep.subr.bf16.mxu0 0
  %1276 = vmatpush1.bf16.msra.mxu0 0
  %1277 = vmatprep.subr.bf16.mxu0 0
  %1278 = vmatpush1.bf16.msra.mxu0 0
  %1279 = vmatprep.subr.bf16.mxu0 0
  %1280 = vmatpush1.bf16.msra.mxu0 0
  %1281 = vmatprep.subr.bf16.mxu0 0
  %1282 = vmatpush1.bf16.msra.mxu0 0
  %1283 = vmatprep.subr.bf16.mxu0 0
  %1284 = vmatpush1.bf16.msra.mxu0 0
  %1285 = vmatprep.subr.bf16.mxu0 0
  %1286 = vmatpush1.bf16.msra.mxu0 0
  %1287 = vmatprep.subr.bf16.mxu0 0
  %1288 = vmatpush1.bf16.msra.mxu0 0
  %1289 = vmatprep.subr.bf16.mxu0 0
  %1290 = vmatpush1.bf16.msra.mxu0 %v1273
  %1291 = vmatprep.subr.bf16.mxu0 0
  %1292 = vmatpush2.bf16.msra.mxu0 0
  %1293 = vmatprep.subr.bf16.mxu0 0
  %1294 = vmatpush2.bf16.msra.mxu0 0
  %1295 = vmatprep.subr.bf16.mxu0 0
  %1296 = vmatpush2.bf16.msra.mxu0 0
  %1297 = vmatprep.subr.bf16.mxu0 0
  %1298 = vmatpush2.bf16.msra.mxu0 0
  %1299 = vmatprep.subr.bf16.mxu0 0
  %1300 = vmatpush2.bf16.msra.mxu0 0
  %1301 = vmatprep.subr.bf16.mxu0 0
  %1302 = vmatpush2.bf16.msra.mxu0 0
  %1303 = vmatprep.subr.bf16.mxu0 0
  %1304 = vmatpush2.bf16.msra.mxu0 0
  %1305 = vmatprep.subr.bf16.mxu0 0
  %1306 = vmatpush2.bf16.msra.mxu0 0
  %1307 = vmatprep.mubr.bf16.mxu0 0
  %1308 = vmatmul.mubr.bf16.gmra.mxu0 %v1270
  %v1309 = vpop.f32.mrf.mxu0
  %v1310 = vadd.f32 0.0, %v1309
  %v1311 = vpop.f32.mrf.mxu0
  %v1312 = vpop.f32.mrf.mxu0
  %v1313 = vadd.f32 0.0, %v1312
  %v1314 = vpop.f32.mrf.mxu0
  %1315 = vdwg.mxu0
  %v1316 = vadd.f32 %v1046, %v1310
  %v1317 = vadd.f32 %v1047, %v1313
  %v1318 = vunpack.c.l.bf16 %v54
  %v1319 = vunpack.c.l.bf16 %v55
  %v1320 = vld [vmem:[%s6] sm:$0x1]
  %v1322 = vlaneseq
  %v1323 = vshrl.u32 %v1322, 7
  %v1324 = vsub.s32 0, %v1323
  %v1325 = vrot.slane %v1320, %v1324
  %v1327 = vadd.f32 %v1316, %v1325
  %v1328 = vadd.f32 %v1317, %v1325
  %v1329 = vadd.f32 %v1327, %v1318
  %v1330 = vadd.f32 %v1328, %v1319
  %v1331 = vld [vmem:[%s7] sm:$0x1]
  %v1332 = vld [vmem:[%s8] sm:$0x1]
  %v1333 = vsel %vm77, %v1329, 0.0
  %1334 = vadd.xlane.f32.xlu0 %v1333
  %v1335 = vpop.xlane.xlu0 %1334
  %v1336 = vsel %vm77, %v1330, 0.0
  %1337 = vadd.xlane.f32.xlu0 %v1336
  %v1338 = vpop.xlane.xlu0 %1337
  %v1339 = vrcp.pop 32.0
  %v1340 = vmul.f32 %v1335, %v1339
  %v1341 = vmul.f32 %v1338, %v1339
  %v1342 = vsub.f32 %v1329, %v1340
  %v1343 = vsub.f32 %v1330, %v1341
  %v1344 = vmul.f32 %v1342, %v1342
  %v1345 = vmul.f32 %v1343, %v1343
  %v1346 = vsel %vm77, %v1344, 0.0
  %1347 = vadd.xlane.f32.xlu0 %v1346
  %v1348 = vpop.xlane.xlu0 %1347
  %v1349 = vsel %vm77, %v1345, 0.0
  %1350 = vadd.xlane.f32.xlu0 %v1349
  %v1351 = vpop.xlane.xlu0 %1350
  %v1352 = vmul.f32 %v1348, %v1339
  %v1353 = vmul.f32 %v1351, %v1339
  %v1354 = vadd.f32 %v1352, 1e-05
  %v1355 = vadd.f32 %v1353, 1e-05
  %v1356 = vrsqrt.pop %v1354
  %v1357 = vrsqrt.pop %v1355
  %v1358 = vmul.f32 %v1342, %v1356
  %v1359 = vmul.f32 %v1343, %v1357
  %v1361 = vlaneseq
  %v1362 = vshrl.u32 %v1361, 7
  %v1363 = vsub.s32 0, %v1362
  %v1364 = vrot.slane %v1331, %v1363
  %v1366 = vmul.f32 %v1358, %v1364
  %v1367 = vmul.f32 %v1359, %v1364
  %v1369 = vlaneseq
  %v1370 = vshrl.u32 %v1369, 7
  %v1371 = vsub.s32 0, %v1370
  %v1372 = vrot.slane %v1332, %v1371
  %v1374 = vadd.f32 %v1366, %v1372
  %v1375 = vadd.f32 %v1367, %v1372
  %v1376 = vpack.c.bf16 %v1375, %v1374
  %v1377 = vld [vmem:[%s9] sm:$0xf]
  %v1378 = vld [vmem:[%s9 + $0x4] sm:$0xf]
  %v1379 = vld [vmem:[%s9 + $0x8] sm:$0xf]
  %v1380 = vld [vmem:[%s9 + $0xc] sm:$0xf]
  %v1381 = vld [vmem:[%s10] sm:$0x1]
  %v1383 = vlaneseq
  %v1384 = vshrl.u32 %v1383, 7
  %v1385 = vsub.s32 0, %v1384
  %v1386 = vrot.slane %v1381, %v1385
  %v1392 = vunpack.c.l.b16 %v1377
  %v1393 = vunpack.c.l.b16 %v1378
  %v1394 = vunpack.c.l.b16 %v1379
  %v1395 = vunpack.c.l.b16 %v1380
  %v1396 = vpack.c.b16 %v1393, %v1392
  %v1397 = vpack.c.b16 %v1395, %v1394
  %v1401 = vsel %vm77, %v1376, 0
  %1403 = vmatprep.subr.bf16.mxu0 0
  %1404 = vmatpush1.bf16.msra.mxu0 0
  %1405 = vmatprep.subr.bf16.mxu0 0
  %1406 = vmatpush1.bf16.msra.mxu0 0
  %1407 = vmatprep.subr.bf16.mxu0 0
  %1408 = vmatpush1.bf16.msra.mxu0 0
  %1409 = vmatprep.subr.bf16.mxu0 0
  %1410 = vmatpush1.bf16.msra.mxu0 0
  %1411 = vmatprep.subr.bf16.mxu0 0
  %1412 = vmatpush1.bf16.msra.mxu0 0
  %1413 = vmatprep.subr.bf16.mxu0 0
  %1414 = vmatpush1.bf16.msra.mxu0 0
  %1415 = vmatprep.subr.bf16.mxu0 0
  %1416 = vmatpush1.bf16.msra.mxu0 %v1397
  %1417 = vmatprep.subr.bf16.mxu0 0
  %1418 = vmatpush1.bf16.msra.mxu0 %v1396
  %1419 = vmatprep.subr.bf16.mxu0 0
  %1420 = vmatpush2.bf16.msra.mxu0 0
  %1421 = vmatprep.subr.bf16.mxu0 0
  %1422 = vmatpush2.bf16.msra.mxu0 0
  %1423 = vmatprep.subr.bf16.mxu0 0
  %1424 = vmatpush2.bf16.msra.mxu0 0
  %1425 = vmatprep.subr.bf16.mxu0 0
  %1426 = vmatpush2.bf16.msra.mxu0 0
  %1427 = vmatprep.subr.bf16.mxu0 0
  %1428 = vmatpush2.bf16.msra.mxu0 0
  %1429 = vmatprep.subr.bf16.mxu0 0
  %1430 = vmatpush2.bf16.msra.mxu0 0
  %1431 = vmatprep.subr.bf16.mxu0 0
  %1432 = vmatpush2.bf16.msra.mxu0 0
  %1433 = vmatprep.subr.bf16.mxu0 0
  %1434 = vmatpush2.bf16.msra.mxu0 0
  %1435 = vmatprep.mubr.bf16.mxu0 0
  %1436 = vmatmul.mubr.bf16.gmra.mxu0 %v1401
  %v1437 = vpop.f32.mrf.mxu0
  %v1438 = vadd.f32 %v1386, %v1437
  %v1439 = vpop.f32.mrf.mxu0
  %v1440 = vpop.f32.mrf.mxu0
  %v1441 = vadd.f32 %v1386, %v1440
  %v1442 = vpop.f32.mrf.mxu0
  %1443 = vdwg.mxu0
  %v1444 = vmax.f32 %v1438, 0.0
  %v1445 = vmax.f32 %v1441, 0.0
  %v1446 = vpack.c.bf16 %v1445, %v1444
  %v1447 = vld [vmem:[%s11] sm:$0xf]
  %v1448 = vld [vmem:[%s11 + $0x4] sm:$0xf]
  %v1449 = vld [vmem:[%s11 + $0x8] sm:$0xf]
  %v1450 = vld [vmem:[%s11 + $0xc] sm:$0xf]
  %v1451 = vld [vmem:[%s11 + $0x10] sm:$0xf]
  %v1452 = vld [vmem:[%s11 + $0x14] sm:$0xf]
  %v1453 = vld [vmem:[%s11 + $0x18] sm:$0xf]
  %v1454 = vld [vmem:[%s11 + $0x1c] sm:$0xf]
  %v1455 = vld [vmem:[%s11 + $0x20] sm:$0xf]
  %v1456 = vld [vmem:[%s11 + $0x24] sm:$0xf]
  %v1457 = vld [vmem:[%s11 + $0x28] sm:$0xf]
  %v1458 = vld [vmem:[%s11 + $0x2c] sm:$0xf]
  %v1459 = vld [vmem:[%s11 + $0x30] sm:$0xf]
  %v1460 = vld [vmem:[%s11 + $0x34] sm:$0xf]
  %v1461 = vld [vmem:[%s11 + $0x38] sm:$0xf]
  %v1462 = vld [vmem:[%s11 + $0x3c] sm:$0xf]
  %v1463 = vld [vmem:[%s12] sm:$0x1]
  %v1465 = vlaneseq
  %v1466 = vshrl.u32 %v1465, 7
  %v1467 = vsub.s32 0, %v1466
  %v1468 = vrot.slane %v1463, %v1467
  %v1486 = vunpack.c.l.b16 %v1447
  %v1487 = vunpack.c.l.b16 %v1448
  %v1488 = vunpack.c.l.b16 %v1449
  %v1489 = vunpack.c.l.b16 %v1450
  %v1490 = vunpack.c.l.b16 %v1451
  %v1491 = vunpack.c.l.b16 %v1452
  %v1492 = vunpack.c.l.b16 %v1453
  %v1493 = vunpack.c.l.b16 %v1454
  %v1494 = vunpack.c.l.b16 %v1455
  %v1495 = vunpack.c.l.b16 %v1456
  %v1496 = vunpack.c.l.b16 %v1457
  %v1497 = vunpack.c.l.b16 %v1458
  %v1498 = vunpack.c.l.b16 %v1459
  %v1499 = vunpack.c.l.b16 %v1460
  %v1500 = vunpack.c.l.b16 %v1461
  %v1501 = vunpack.c.l.b16 %v1462
  %v1502 = vpack.c.b16 %v1487, %v1486
  %v1503 = vpack.c.b16 %v1489, %v1488
  %v1504 = vpack.c.b16 %v1491, %v1490
  %v1505 = vpack.c.b16 %v1493, %v1492
  %v1506 = vpack.c.b16 %v1495, %v1494
  %v1507 = vpack.c.b16 %v1497, %v1496
  %v1508 = vpack.c.b16 %v1499, %v1498
  %v1509 = vpack.c.b16 %v1501, %v1500
  %1518 = vmatprep.subr.bf16.mxu0 0
  %1519 = vmatpush1.bf16.msra.mxu0 %v1509
  %1520 = vmatprep.subr.bf16.mxu0 0
  %1521 = vmatpush1.bf16.msra.mxu0 %v1508
  %1522 = vmatprep.subr.bf16.mxu0 0
  %1523 = vmatpush1.bf16.msra.mxu0 %v1507
  %1524 = vmatprep.subr.bf16.mxu0 0
  %1525 = vmatpush1.bf16.msra.mxu0 %v1506
  %1526 = vmatprep.subr.bf16.mxu0 0
  %1527 = vmatpush1.bf16.msra.mxu0 %v1505
  %1528 = vmatprep.subr.bf16.mxu0 0
  %1529 = vmatpush1.bf16.msra.mxu0 %v1504
  %1530 = vmatprep.subr.bf16.mxu0 0
  %1531 = vmatpush1.bf16.msra.mxu0 %v1503
  %1532 = vmatprep.subr.bf16.mxu0 0
  %1533 = vmatpush1.bf16.msra.mxu0 %v1502
  %1534 = vmatprep.subr.bf16.mxu0 0
  %1535 = vmatpush2.bf16.msra.mxu0 0
  %1536 = vmatprep.subr.bf16.mxu0 0
  %1537 = vmatpush2.bf16.msra.mxu0 0
  %1538 = vmatprep.subr.bf16.mxu0 0
  %1539 = vmatpush2.bf16.msra.mxu0 0
  %1540 = vmatprep.subr.bf16.mxu0 0
  %1541 = vmatpush2.bf16.msra.mxu0 0
  %1542 = vmatprep.subr.bf16.mxu0 0
  %1543 = vmatpush2.bf16.msra.mxu0 0
  %1544 = vmatprep.subr.bf16.mxu0 0
  %1545 = vmatpush2.bf16.msra.mxu0 0
  %1546 = vmatprep.subr.bf16.mxu0 0
  %1547 = vmatpush2.bf16.msra.mxu0 0
  %1548 = vmatprep.subr.bf16.mxu0 0
  %1549 = vmatpush2.bf16.msra.mxu0 0
  %1550 = vmatprep.mubr.bf16.mxu0 0
  %1551 = vmatmul.mubr.bf16.gmra.mxu0 %v1446
  %v1552 = vpop.f32.mrf.mxu0
  %v1553 = vadd.f32 %v1468, %v1552
  %v1554 = vpop.f32.mrf.mxu0
  %v1555 = vpop.f32.mrf.mxu0
  %v1556 = vadd.f32 %v1468, %v1555
  %v1557 = vpop.f32.mrf.mxu0
  %1558 = vdwg.mxu0
  %v1559 = vadd.f32 %v1553, %v1374
  %v1560 = vadd.f32 %v1556, %v1375
  %v1561 = vld [vmem:[%s13] sm:$0x1]
  %v1562 = vld [vmem:[%s14] sm:$0x1]
  %v1563 = vsel %vm77, %v1559, 0.0
  %1564 = vadd.xlane.f32.xlu0 %v1563
  %v1565 = vpop.xlane.xlu0 %1564
  %v1566 = vsel %vm77, %v1560, 0.0
  %1567 = vadd.xlane.f32.xlu0 %v1566
  %v1568 = vpop.xlane.xlu0 %1567
  %v1569 = vmul.f32 %v1565, %v1339
  %v1570 = vmul.f32 %v1568, %v1339
  %v1571 = vsub.f32 %v1559, %v1569
  %v1572 = vsub.f32 %v1560, %v1570
  %v1573 = vmul.f32 %v1571, %v1571
  %v1574 = vmul.f32 %v1572, %v1572
  %v1575 = vsel %vm77, %v1573, 0.0
  %1576 = vadd.xlane.f32.xlu0 %v1575
  %v1577 = vpop.xlane.xlu0 %1576
  %v1578 = vsel %vm77, %v1574, 0.0
  %1579 = vadd.xlane.f32.xlu0 %v1578
  %v1580 = vpop.xlane.xlu0 %1579
  %v1581 = vmul.f32 %v1577, %v1339
  %v1582 = vmul.f32 %v1580, %v1339
  %v1583 = vadd.f32 %v1581, 1e-05
  %v1584 = vadd.f32 %v1582, 1e-05
  %v1585 = vrsqrt.pop %v1583
  %v1586 = vrsqrt.pop %v1584
  %v1587 = vmul.f32 %v1571, %v1585
  %v1588 = vmul.f32 %v1572, %v1586
  %v1590 = vlaneseq
  %v1591 = vshrl.u32 %v1590, 7
  %v1592 = vsub.s32 0, %v1591
  %v1593 = vrot.slane %v1561, %v1592
  %v1595 = vmul.f32 %v1587, %v1593
  %v1596 = vmul.f32 %v1588, %v1593
  %v1598 = vlaneseq
  %v1599 = vshrl.u32 %v1598, 7
  %v1600 = vsub.s32 0, %v1599
  %v1601 = vrot.slane %v1562, %v1600
  %v1603 = vadd.f32 %v1595, %v1601
  %v1604 = vadd.f32 %v1596, %v1601
  %v1605 = vpack.c.bf16 %v1603, %v1603
  %v1606 = vpack.c.bf16 %v1604, %v1604
  %vm1607 = vcmask 257024
  %1608 = vst.msk [vmem:[%s15] sm:$0xf] %vm1607, %v1605
  %1609 = vst.msk [vmem:[%s15 + $0x4] sm:$0xf] %vm1607, %v1606
  // Predicated region
  $region62: #{ctransformer_forward.3} parent=0 // pred_check
    _
  $region63: #{ctransformer_forward.3} parent=0 // pred_check_branch
    %1611 = sbr.rel (0) target = $region65
  $region64: #{ctransformer_forward.3} parent=0 // pred_region
    _
  $region65: #{ctransformer_forward.3} parent=0 // pred_fallthru
    _
  // Predicated region
  $region66: #{ctransformer_forward.3} parent=0 // pred_check
    _
  $region67: #{ctransformer_forward.3} parent=0 // pred_check_branch
    %1613 = sbr.rel (0) target = $region69
  $region68: #{ctransformer_forward.3} parent=0 // pred_region
    _
  $region69: #{ctransformer_forward.3} parent=0 // pred_fallthru
    _

</llo_original>
